<compile_context>
chip_gen: v5e
topology: v5e:2x2
jax: 0.10.0
libtpu: 0.0.40
codegen_flags: <defaults>
</compile_context>

<pallas_src>
import functools

import jax
import jax.numpy as jnp
from jax import lax
from jax.experimental import pallas as pl
from jax.experimental.pallas import tpu as pltpu


def _round_up(x, m):
    return (x + m - 1) // m * m


# ---------------------------------------------------------------------------
# Fully fused forward kernel: all layers, all node types, all edge types.
# ---------------------------------------------------------------------------
def _fused_forward_kernel(h0_ref, adj_ref, invdeg_ref, wl_ref, wr_ref, b_ref,
                          out_ref, *, node_types, node_counts, edge_types,
                          n_layers, n_pad, f_pad):
    type_index = {nt: i for i, nt in enumerate(node_types)}
    n_types = len(node_types)
    n_edge_types = len(edge_types)

    # Graph structure is reused by every layer -> load once, keep as values.
    adjs = [adj_ref[e] for e in range(n_edge_types)]       # bf16 edge counts
    invs = [invdeg_ref[e] for e in range(n_edge_types)]    # f32 1/in_degree
    # Row masks: zero padded dst rows (the broadcast bias would otherwise put
    # relu(b) into them and carry it through the layer stack).
    masks = [
        (lax.broadcasted_iota(jnp.int32, (n_pad, f_pad), 0)
         < node_counts[nt]).astype(jnp.float32)
        for nt in node_types
    ]

    h = [h0_ref[t] for t in range(n_types)]                 # layer-0 bf16 input
    for li in range(n_layers):
        is_last = li == n_layers - 1
        new_h = []
        for ti, nt in enumerate(node_types):
            # Root/self term + bias: HeteroConv aggr='sum' lets W_r and bias be
            # pre-summed (host side) over edge types sharing this dst type.
            acc = jnp.dot(h[ti].astype(jnp.bfloat16), wr_ref[li, ti],
                          preferred_element_type=jnp.float32)
            acc = acc + b_ref[li, ti]
            for ei, (src_t, _, dst_t) in enumerate(edge_types):
                if dst_t != nt:
                    continue
                si = type_index[src_t]
                # Reassociated: project once, then a single adjacency matmul.
                h_proj = jnp.dot(h[si].astype(jnp.bfloat16), wl_ref[li, ei],
                                 preferred_element_type=jnp.float32)
                contrib = jnp.dot(adjs[ei], h_proj.astype(jnp.bfloat16),
                                  preferred_element_type=jnp.float32)
                # mean aggregation: integer counts on the MXU (exact in bf16),
                # 1/deg applied afterwards as an f32 row scale.
                acc = acc + contrib * invs[ei]
            acc = acc * masks[ti]          # zero padded dst rows
            # TODO(synk): dropout treated as identity (eval mode).
            new_h.append(acc if is_last else jnp.maximum(acc, 0.0))
        h = new_h

    for ti in range(n_types):
        out_ref[ti] = h[ti]


def _full_spec(shape):
    return pl.BlockSpec(shape, lambda i: (0,) * len(shape))


def hetero_module_forward(h0, adj_counts, invdeg, wl_all, wr_all, b_all, *,
                          node_types, node_counts, edge_types, n_layers):
    """Single pallas_call for the whole HeteroModule forward.

    h0         : (T, n_pad, f_pad)     bf16 padded node features (all types)
    adj_counts : (E, n_pad, n_pad)     bf16 integer edge counts (dst rows)
    invdeg     : (E, n_pad, 1)         f32  1 / max(in_degree, 1)
    wl_all     : (L, E, f_pad, f_pad)  bf16 lin_l weights, (in, out) layout
    wr_all     : (L, T, f_pad, f_pad)  bf16 lin_r summed per dst type
    b_all      : (L, T, 1, f_pad)      f32  bias summed per dst type
    """
    n_types, n_pad, f_pad = h0.shape
    kernel = functools.partial(
        _fused_forward_kernel, node_types=node_types, node_counts=node_counts,
        edge_types=edge_types, n_layers=n_layers, n_pad=n_pad, f_pad=f_pad)
    return pl.pallas_call(
        kernel,
        out_shape=jax.ShapeDtypeStruct((n_types, n_pad, f_pad), jnp.float32),
        grid=(1,),
        in_specs=[
            _full_spec(h0.shape),
            _full_spec(adj_counts.shape),
            _full_spec(invdeg.shape),
            _full_spec(wl_all.shape),
            _full_spec(wr_all.shape),
            _full_spec(b_all.shape),
        ],
        out_specs=_full_spec((n_types, n_pad, f_pad)),
        compiler_params=pltpu.CompilerParams(
            dimension_semantics=("arbitrary",),
            vmem_limit_bytes=32 * 1024 * 1024),
    )(h0, adj_counts, invdeg, wl_all, wr_all, b_all)


# ---------------------------------------------------------------------------
# Parameter init (PyTorch layout) + one-time host-side packing.
# ---------------------------------------------------------------------------
def init_raw_params(key, edge_types, layer_dims):
    """PyTorch-style SAGEConv params: w_l / w_r are (out_feat, in_feat)."""
    params = []
    for li, (fin, fout) in enumerate(layer_dims):
        layer = {}
        for ei, et in enumerate(edge_types):
            k = jax.random.fold_in(key, li * 1000 + ei)
            k1, k2, k3 = jax.random.split(k, 3)
            scale = 1.0 / float(fin) ** 0.5
            layer[et] = dict(
                w_l=jax.random.uniform(k1, (fout, fin), jnp.float32, -scale, scale),
                w_r=jax.random.uniform(k2, (fout, fin), jnp.float32, -scale, scale),
                b_l=jax.random.uniform(k3, (fout,), jnp.float32, -scale, scale),
            )
        params.append(layer)
    return params


def pack_params(raw_params, edge_types, node_types, type_index, f_pad):
    """Transpose to (in, out), zero-pad to the lane-dense width, stack over
    (layer, edge type), and pre-sum the root weight / bias across edge types
    sharing a dst type (HeteroConv aggr='sum')."""
    def pad_io(w):  # (out, in) torch layout -> padded (in, out)
        wt = w.T
        return jnp.pad(wt, ((0, f_pad - wt.shape[0]), (0, f_pad - wt.shape[1])))

    wl_layers, wr_layers, b_layers = [], [], []
    for layer in raw_params:
        wl_layers.append(jnp.stack([pad_io(layer[et]["w_l"]) for et in edge_types]))
        wr = [jnp.zeros((f_pad, f_pad), jnp.float32) for _ in node_types]
        b = [jnp.zeros((1, f_pad), jnp.float32) for _ in node_types]
        for et in edge_types:
            d = type_index[et[2]]
            wr[d] = wr[d] + pad_io(layer[et]["w_r"])
            b[d] = b[d] + jnp.pad(layer[et]["b_l"],
                                  (0, f_pad - layer[et]["b_l"].shape[0]))[None, :]
        wr_layers.append(jnp.stack(wr))
        b_layers.append(jnp.stack(b))
    wl_all = jnp.stack(wl_layers).astype(jnp.bfloat16)   # (L, E, f_pad, f_pad)
    wr_all = jnp.stack(wr_layers).astype(jnp.bfloat16)   # (L, T, f_pad, f_pad)
    b_all = jnp.stack(b_layers).astype(jnp.float32)      # (L, T, 1, f_pad)
    return wl_all, wr_all, b_all


if __name__ == "__main__":
    key = jax.random.PRNGKey(0)

    # Synthetic hetero graph: two node types, three edge types.
    node_counts = {"user": 8, "item": 16}
    node_types = list(node_counts)
    type_index = {nt: i for i, nt in enumerate(node_types)}
    edge_types = [
        ("user", "rates", "item"),
        ("item", "rev_rates", "user"),
        ("user", "follows", "user"),
    ]
    dim_in, dim_hidden, dim_out, n_layers = 16, 32, 8, 3
    num_edges = 24

    # Lane-dense padding: features AND node counts to 128 (unmasked vregs).
    f_pad = _round_up(max(dim_in, dim_hidden, dim_out), 128)   # 128
    n_pad = _round_up(max(node_counts.values()), 128)          # 128

    # Every node type must be the dst of at least one edge type (matches the
    # node types present in the reference HeteroConv output dict).
    assert {et[2] for et in edge_types} == set(node_types)

    # --- node features -------------------------------------------------------
    x_dict, slab = {}, []
    for i, nt in enumerate(node_types):
        n = node_counts[nt]
        x = jax.random.normal(jax.random.fold_in(key, 10 + i), (n, dim_in),
                              jnp.float32)
        x_dict[nt] = x
        slab.append(jnp.pad(x, ((0, n_pad - n), (0, f_pad - dim_in))))
    h0 = jnp.stack(slab).astype(jnp.bfloat16)                  # (T, n_pad, f_pad)

    # --- edges -> integer count adjacency (bf16-exact) + f32 1/in_degree -----
    # NOTE: dense adjacency is fine at toy sizes; at scale replace with a
    # scalar-prefetch / DMA-gather segment-mean.
    adj_norm = {}                     # f32 row-normalized, for the reference
    counts_list, invdeg_list = [], []
    for i, et in enumerate(edge_types):
        s_t, _, d_t = et
        ke = jax.random.fold_in(key, 100 + i)
        k1, k2 = jax.random.split(ke)
        src = jax.random.randint(k1, (num_edges,), 0, node_counts[s_t])
        dst = jax.random.randint(k2, (num_edges,), 0, node_counts[d_t])
        counts = jnp.zeros((node_counts[d_t], node_counts[s_t]),
                           jnp.float32).at[dst, src].add(1.0)
        deg = counts.sum(axis=1, keepdims=True)
        adj_norm[et] = counts / jnp.maximum(deg, 1.0)
        counts_list.append(jnp.pad(counts, ((0, n_pad - counts.shape[0]),
                                            (0, n_pad - counts.shape[1]))))
        invdeg_list.append(jnp.pad(1.0 / jnp.maximum(deg, 1.0),
                                   ((0, n_pad - deg.shape[0]), (0, 0))))
    adj_counts = jnp.stack(counts_list).astype(jnp.bfloat16)   # (E, n_pad, n_pad)
    invdeg = jnp.stack(invdeg_list).astype(jnp.float32)        # (E, n_pad, 1)

    # --- params: in->hidden, hidden->hidden, hidden->out ----------------------
    layer_dims = [(dim_in, dim_hidden)]
    layer_dims += [(dim_hidden, dim_hidden)] * (n_layers - 2)
    layer_dims += [(dim_hidden, dim_out)]
    raw_params = init_raw_params(key, edge_types, layer_dims)
    wl_all, wr_all, b_all = pack_params(raw_params, edge_types, node_types,
                                        type_index, f_pad)

    # --- Pallas forward (one fused call) --------------------------------------
    out_full = hetero_module_forward(
        h0, adj_counts, invdeg, wl_all, wr_all, b_all,
        node_types=node_types, node_counts=node_counts,
        edge_types=edge_types, n_layers=n_layers)
    out_full = jax.block_until_ready(out_full)
    out = {nt: out_full[type_index[nt], :node_counts[nt], :dim_out]
           for nt in node_types}

    # --- pure-JAX f32 reference (same math, no padding / bf16) ----------------
    def reference_forward(x0):
        h = dict(x0)
        for li in range(n_layers):
            is_last = li == n_layers - 1
            per_dst = {}
            for et in edge_types:
                s_t, _, d_t = et
                p = raw_params[li][et]
                agg = adj_norm[et] @ h[s_t]
                o = agg @ p["w_l"].T + h[d_t] @ p["w_r"].T + p["b_l"]
                per_dst[d_t] = per_dst.get(d_t, 0.0) + o
            h = {d: (v if is_last else jnp.maximum(v, 0.0))
                 for d, v in per_dst.items()}
        return h

    ref = reference_forward(x_dict)
    for nt in node_types:
        assert out[nt].shape == (node_counts[nt], dim_out)
        assert jnp.isfinite(out[nt]).all()
        # bf16 MXU inputs with f32 accumulation; exact bf16 counts + f32 1/deg
        # scaling keep the error well inside this tolerance vs the f32 ref.
        assert jnp.allclose(out[nt], ref[nt], rtol=1e-1, atol=1e-1), (
            nt, float(jnp.max(jnp.abs(out[nt] - ref[nt]))))
    print("KERNEL_OK")
</pallas_src>

<mosaic_0001>
module attributes {stable_mosaic.version = 11 : i64} {
  func.func @_fused_forward_kernel(%arg0: i32, %arg1: memref<2x128x128xbf16, #tpu.memory_space<vmem>>, %arg2: memref<3x128x128xbf16, #tpu.memory_space<vmem>>, %arg3: memref<3x128x1xf32, #tpu.memory_space<vmem>>, %arg4: memref<3x3x128x128xbf16, #tpu.memory_space<vmem>>, %arg5: memref<3x2x128x128xbf16, #tpu.memory_space<vmem>>, %arg6: memref<3x2x1x128xf32, #tpu.memory_space<vmem>>, %arg7: memref<2x128x128xf32, #tpu.memory_space<vmem>>) attributes {dimension_semantics = [#tpu.dimension_semantics<arbitrary>], iteration_bounds = array<i64: 1>, scalar_prefetch = 0 : i64, scratch_operands = 0 : i64, tpu.core_type = #tpu.core_type<tc>, window_params = [{pipeline_mode = #tpu.pipeline_mode<synchronous>, transform_indices = @transform_0, window_bounds = array<i64: 2, 128, 128>}, {pipeline_mode = #tpu.pipeline_mode<synchronous>, transform_indices = @transform_1, window_bounds = array<i64: 3, 128, 128>}, {pipeline_mode = #tpu.pipeline_mode<synchronous>, transform_indices = @transform_2, window_bounds = array<i64: 3, 128, 1>}, {pipeline_mode = #tpu.pipeline_mode<synchronous>, transform_indices = @transform_3, window_bounds = array<i64: 3, 3, 128, 128>}, {pipeline_mode = #tpu.pipeline_mode<synchronous>, transform_indices = @transform_4, window_bounds = array<i64: 3, 2, 128, 128>}, {pipeline_mode = #tpu.pipeline_mode<synchronous>, transform_indices = @transform_5, window_bounds = array<i64: 3, 2, 1, 128>}, {pipeline_mode = #tpu.pipeline_mode<synchronous>, transform_indices = @transform_6, window_bounds = array<i64: 2, 128, 128>}]} {
    %c0 = arith.constant 0 : index
    %c0_0 = arith.constant 0 : index
    %c0_1 = arith.constant 0 : index
    %0 = vector.load %arg2[%c0, %c0_0, %c0_1] : memref<3x128x128xbf16, #tpu.memory_space<vmem>>, vector<1x128x128xbf16>
    %1 = vector.shape_cast %0 : vector<1x128x128xbf16> to vector<128x128xbf16>
    %c1 = arith.constant 1 : index
    %c0_2 = arith.constant 0 : index
    %c0_3 = arith.constant 0 : index
    %2 = vector.load %arg2[%c1, %c0_2, %c0_3] : memref<3x128x128xbf16, #tpu.memory_space<vmem>>, vector<1x128x128xbf16>
    %3 = vector.shape_cast %2 : vector<1x128x128xbf16> to vector<128x128xbf16>
    %c2 = arith.constant 2 : index
    %c0_4 = arith.constant 0 : index
    %c0_5 = arith.constant 0 : index
    %4 = vector.load %arg2[%c2, %c0_4, %c0_5] : memref<3x128x128xbf16, #tpu.memory_space<vmem>>, vector<1x128x128xbf16>
    %5 = vector.shape_cast %4 : vector<1x128x128xbf16> to vector<128x128xbf16>
    %c0_6 = arith.constant 0 : index
    %c0_7 = arith.constant 0 : index
    %c0_8 = arith.constant 0 : index
    %6 = vector.load %arg3[%c0_6, %c0_7, %c0_8] : memref<3x128x1xf32, #tpu.memory_space<vmem>>, vector<1x128x1xf32>
    %7 = vector.shape_cast %6 : vector<1x128x1xf32> to vector<128x1xf32>
    %c1_9 = arith.constant 1 : index
    %c0_10 = arith.constant 0 : index
    %c0_11 = arith.constant 0 : index
    %8 = vector.load %arg3[%c1_9, %c0_10, %c0_11] : memref<3x128x1xf32, #tpu.memory_space<vmem>>, vector<1x128x1xf32>
    %9 = vector.shape_cast %8 : vector<1x128x1xf32> to vector<128x1xf32>
    %c2_12 = arith.constant 2 : index
    %c0_13 = arith.constant 0 : index
    %c0_14 = arith.constant 0 : index
    %10 = vector.load %arg3[%c2_12, %c0_13, %c0_14] : memref<3x128x1xf32, #tpu.memory_space<vmem>>, vector<1x128x1xf32>
    %11 = vector.shape_cast %10 : vector<1x128x1xf32> to vector<128x1xf32>
    %12 = tpu.iota {dimensions = array<i32: 0>} : vector<128x128xi32>
    %c8_i32 = arith.constant 8 : i32
    %13 = vector.broadcast %c8_i32 : i32 to vector<128x128xi32>
    %14 = arith.cmpi slt, %12, %13 : vector<128x128xi32>
    %15 = arith.extui %14 : vector<128x128xi1> to vector<128x128xi32>
    %16 = arith.sitofp %15 : vector<128x128xi32> to vector<128x128xf32>
    %17 = tpu.iota {dimensions = array<i32: 0>} : vector<128x128xi32>
    %c16_i32 = arith.constant 16 : i32
    %18 = vector.broadcast %c16_i32 : i32 to vector<128x128xi32>
    %19 = arith.cmpi slt, %17, %18 : vector<128x128xi32>
    %20 = arith.extui %19 : vector<128x128xi1> to vector<128x128xi32>
    %21 = arith.sitofp %20 : vector<128x128xi32> to vector<128x128xf32>
    %c0_15 = arith.constant 0 : index
    %c0_16 = arith.constant 0 : index
    %c0_17 = arith.constant 0 : index
    %22 = vector.load %arg1[%c0_15, %c0_16, %c0_17] : memref<2x128x128xbf16, #tpu.memory_space<vmem>>, vector<1x128x128xbf16>
    %23 = vector.shape_cast %22 : vector<1x128x128xbf16> to vector<128x128xbf16>
    %c1_18 = arith.constant 1 : index
    %c0_19 = arith.constant 0 : index
    %c0_20 = arith.constant 0 : index
    %24 = vector.load %arg1[%c1_18, %c0_19, %c0_20] : memref<2x128x128xbf16, #tpu.memory_space<vmem>>, vector<1x128x128xbf16>
    %25 = vector.shape_cast %24 : vector<1x128x128xbf16> to vector<128x128xbf16>
    %c0_21 = arith.constant 0 : index
    %c0_22 = arith.constant 0 : index
    %c0_23 = arith.constant 0 : index
    %c0_24 = arith.constant 0 : index
    %26 = vector.load %arg5[%c0_21, %c0_22, %c0_23, %c0_24] : memref<3x2x128x128xbf16, #tpu.memory_space<vmem>>, vector<1x1x128x128xbf16>
    %27 = vector.shape_cast %26 : vector<1x1x128x128xbf16> to vector<128x128xbf16>
    %cst = arith.constant dense<0.000000e+00> : vector<128x128xf32>
    %28 = tpu.matmul %23, %27, %cst {dimension_numbers = #tpu.dot_dimension_numbers<[1], [0], [0], [1], [0, 0, 1, 1], [], []>} : vector<128x128xbf16>, vector<128x128xbf16>, vector<128x128xf32> -> vector<128x128xf32>
    %c0_25 = arith.constant 0 : index
    %c0_26 = arith.constant 0 : index
    %c0_27 = arith.constant 0 : index
    %c0_28 = arith.constant 0 : index
    %29 = vector.load %arg6[%c0_25, %c0_26, %c0_27, %c0_28] : memref<3x2x1x128xf32, #tpu.memory_space<vmem>>, vector<1x1x1x128xf32>
    %30 = vector.shape_cast %29 : vector<1x1x1x128xf32> to vector<1x128xf32>
    %31 = vector.broadcast %30 : vector<1x128xf32> to vector<128x128xf32>
    %32 = arith.addf %28, %31 : vector<128x128xf32>
    %c0_29 = arith.constant 0 : index
    %c1_30 = arith.constant 1 : index
    %c0_31 = arith.constant 0 : index
    %c0_32 = arith.constant 0 : index
    %33 = vector.load %arg4[%c0_29, %c1_30, %c0_31, %c0_32] : memref<3x3x128x128xbf16, #tpu.memory_space<vmem>>, vector<1x1x128x128xbf16>
    %34 = vector.shape_cast %33 : vector<1x1x128x128xbf16> to vector<128x128xbf16>
    %cst_33 = arith.constant dense<0.000000e+00> : vector<128x128xf32>
    %35 = tpu.matmul %25, %34, %cst_33 {dimension_numbers = #tpu.dot_dimension_numbers<[1], [0], [0], [1], [0, 0, 1, 1], [], []>} : vector<128x128xbf16>, vector<128x128xbf16>, vector<128x128xf32> -> vector<128x128xf32>
    %36 = arith.truncf %35 : vector<128x128xf32> to vector<128x128xbf16>
    %cst_34 = arith.constant dense<0.000000e+00> : vector<128x128xf32>
    %37 = tpu.matmul %3, %36, %cst_34 {dimension_numbers = #tpu.dot_dimension_numbers<[1], [0], [0], [1], [0, 0, 1, 1], [], []>} : vector<128x128xbf16>, vector<128x128xbf16>, vector<128x128xf32> -> vector<128x128xf32>
    %38 = vector.broadcast %9 : vector<128x1xf32> to vector<128x128xf32>
    %39 = arith.mulf %37, %38 : vector<128x128xf32>
    %40 = arith.addf %32, %39 : vector<128x128xf32>
    %c0_35 = arith.constant 0 : index
    %c2_36 = arith.constant 2 : index
    %c0_37 = arith.constant 0 : index
    %c0_38 = arith.constant 0 : index
    %41 = vector.load %arg4[%c0_35, %c2_36, %c0_37, %c0_38] : memref<3x3x128x128xbf16, #tpu.memory_space<vmem>>, vector<1x1x128x128xbf16>
    %42 = vector.shape_cast %41 : vector<1x1x128x128xbf16> to vector<128x128xbf16>
    %cst_39 = arith.constant dense<0.000000e+00> : vector<128x128xf32>
    %43 = tpu.matmul %23, %42, %cst_39 {dimension_numbers = #tpu.dot_dimension_numbers<[1], [0], [0], [1], [0, 0, 1, 1], [], []>} : vector<128x128xbf16>, vector<128x128xbf16>, vector<128x128xf32> -> vector<128x128xf32>
    %44 = arith.truncf %43 : vector<128x128xf32> to vector<128x128xbf16>
    %cst_40 = arith.constant dense<0.000000e+00> : vector<128x128xf32>
    %45 = tpu.matmul %5, %44, %cst_40 {dimension_numbers = #tpu.dot_dimension_numbers<[1], [0], [0], [1], [0, 0, 1, 1], [], []>} : vector<128x128xbf16>, vector<128x128xbf16>, vector<128x128xf32> -> vector<128x128xf32>
    %46 = vector.broadcast %11 : vector<128x1xf32> to vector<128x128xf32>
    %47 = arith.mulf %45, %46 : vector<128x128xf32>
    %48 = arith.addf %40, %47 : vector<128x128xf32>
    %49 = arith.mulf %48, %16 : vector<128x128xf32>
    %cst_41 = arith.constant 0.000000e+00 : f32
    %50 = vector.broadcast %cst_41 : f32 to vector<128x128xf32>
    %51 = arith.maximumf %49, %50 : vector<128x128xf32>
    %c0_42 = arith.constant 0 : index
    %c1_43 = arith.constant 1 : index
    %c0_44 = arith.constant 0 : index
    %c0_45 = arith.constant 0 : index
    %52 = vector.load %arg5[%c0_42, %c1_43, %c0_44, %c0_45] : memref<3x2x128x128xbf16, #tpu.memory_space<vmem>>, vector<1x1x128x128xbf16>
    %53 = vector.shape_cast %52 : vector<1x1x128x128xbf16> to vector<128x128xbf16>
    %cst_46 = arith.constant dense<0.000000e+00> : vector<128x128xf32>
    %54 = tpu.matmul %25, %53, %cst_46 {dimension_numbers = #tpu.dot_dimension_numbers<[1], [0], [0], [1], [0, 0, 1, 1], [], []>} : vector<128x128xbf16>, vector<128x128xbf16>, vector<128x128xf32> -> vector<128x128xf32>
    %c0_47 = arith.constant 0 : index
    %c1_48 = arith.constant 1 : index
    %c0_49 = arith.constant 0 : index
    %c0_50 = arith.constant 0 : index
    %55 = vector.load %arg6[%c0_47, %c1_48, %c0_49, %c0_50] : memref<3x2x1x128xf32, #tpu.memory_space<vmem>>, vector<1x1x1x128xf32>
    %56 = vector.shape_cast %55 : vector<1x1x1x128xf32> to vector<1x128xf32>
    %57 = vector.broadcast %56 : vector<1x128xf32> to vector<128x128xf32>
    %58 = arith.addf %54, %57 : vector<128x128xf32>
    %c0_51 = arith.constant 0 : index
    %c0_52 = arith.constant 0 : index
    %c0_53 = arith.constant 0 : index
    %c0_54 = arith.constant 0 : index
    %59 = vector.load %arg4[%c0_51, %c0_52, %c0_53, %c0_54] : memref<3x3x128x128xbf16, #tpu.memory_space<vmem>>, vector<1x1x128x128xbf16>
    %60 = vector.shape_cast %59 : vector<1x1x128x128xbf16> to vector<128x128xbf16>
    %cst_55 = arith.constant dense<0.000000e+00> : vector<128x128xf32>
    %61 = tpu.matmul %23, %60, %cst_55 {dimension_numbers = #tpu.dot_dimension_numbers<[1], [0], [0], [1], [0, 0, 1, 1], [], []>} : vector<128x128xbf16>, vector<128x128xbf16>, vector<128x128xf32> -> vector<128x128xf32>
    %62 = arith.truncf %61 : vector<128x128xf32> to vector<128x128xbf16>
    %cst_56 = arith.constant dense<0.000000e+00> : vector<128x128xf32>
    %63 = tpu.matmul %1, %62, %cst_56 {dimension_numbers = #tpu.dot_dimension_numbers<[1], [0], [0], [1], [0, 0, 1, 1], [], []>} : vector<128x128xbf16>, vector<128x128xbf16>, vector<128x128xf32> -> vector<128x128xf32>
    %64 = vector.broadcast %7 : vector<128x1xf32> to vector<128x128xf32>
    %65 = arith.mulf %63, %64 : vector<128x128xf32>
    %66 = arith.addf %58, %65 : vector<128x128xf32>
    %67 = arith.mulf %66, %21 : vector<128x128xf32>
    %cst_57 = arith.constant 0.000000e+00 : f32
    %68 = vector.broadcast %cst_57 : f32 to vector<128x128xf32>
    %69 = arith.maximumf %67, %68 : vector<128x128xf32>
    %70 = arith.truncf %51 : vector<128x128xf32> to vector<128x128xbf16>
    %c1_58 = arith.constant 1 : index
    %c0_59 = arith.constant 0 : index
    %c0_60 = arith.constant 0 : index
    %c0_61 = arith.constant 0 : index
    %71 = vector.load %arg5[%c1_58, %c0_59, %c0_60, %c0_61] : memref<3x2x128x128xbf16, #tpu.memory_space<vmem>>, vector<1x1x128x128xbf16>
    %72 = vector.shape_cast %71 : vector<1x1x128x128xbf16> to vector<128x128xbf16>
    %cst_62 = arith.constant dense<0.000000e+00> : vector<128x128xf32>
    %73 = tpu.matmul %70, %72, %cst_62 {dimension_numbers = #tpu.dot_dimension_numbers<[1], [0], [0], [1], [0, 0, 1, 1], [], []>} : vector<128x128xbf16>, vector<128x128xbf16>, vector<128x128xf32> -> vector<128x128xf32>
    %c1_63 = arith.constant 1 : index
    %c0_64 = arith.constant 0 : index
    %c0_65 = arith.constant 0 : index
    %c0_66 = arith.constant 0 : index
    %74 = vector.load %arg6[%c1_63, %c0_64, %c0_65, %c0_66] : memref<3x2x1x128xf32, #tpu.memory_space<vmem>>, vector<1x1x1x128xf32>
    %75 = vector.shape_cast %74 : vector<1x1x1x128xf32> to vector<1x128xf32>
    %76 = vector.broadcast %75 : vector<1x128xf32> to vector<128x128xf32>
    %77 = arith.addf %73, %76 : vector<128x128xf32>
    %78 = arith.truncf %69 : vector<128x128xf32> to vector<128x128xbf16>
    %c1_67 = arith.constant 1 : index
    %c1_68 = arith.constant 1 : index
    %c0_69 = arith.constant 0 : index
    %c0_70 = arith.constant 0 : index
    %79 = vector.load %arg4[%c1_67, %c1_68, %c0_69, %c0_70] : memref<3x3x128x128xbf16, #tpu.memory_space<vmem>>, vector<1x1x128x128xbf16>
    %80 = vector.shape_cast %79 : vector<1x1x128x128xbf16> to vector<128x128xbf16>
    %cst_71 = arith.constant dense<0.000000e+00> : vector<128x128xf32>
    %81 = tpu.matmul %78, %80, %cst_71 {dimension_numbers = #tpu.dot_dimension_numbers<[1], [0], [0], [1], [0, 0, 1, 1], [], []>} : vector<128x128xbf16>, vector<128x128xbf16>, vector<128x128xf32> -> vector<128x128xf32>
    %82 = arith.truncf %81 : vector<128x128xf32> to vector<128x128xbf16>
    %cst_72 = arith.constant dense<0.000000e+00> : vector<128x128xf32>
    %83 = tpu.matmul %3, %82, %cst_72 {dimension_numbers = #tpu.dot_dimension_numbers<[1], [0], [0], [1], [0, 0, 1, 1], [], []>} : vector<128x128xbf16>, vector<128x128xbf16>, vector<128x128xf32> -> vector<128x128xf32>
    %84 = vector.broadcast %9 : vector<128x1xf32> to vector<128x128xf32>
    %85 = arith.mulf %83, %84 : vector<128x128xf32>
    %86 = arith.addf %77, %85 : vector<128x128xf32>
    %87 = arith.truncf %51 : vector<128x128xf32> to vector<128x128xbf16>
    %c1_73 = arith.constant 1 : index
    %c2_74 = arith.constant 2 : index
    %c0_75 = arith.constant 0 : index
    %c0_76 = arith.constant 0 : index
    %88 = vector.load %arg4[%c1_73, %c2_74, %c0_75, %c0_76] : memref<3x3x128x128xbf16, #tpu.memory_space<vmem>>, vector<1x1x128x128xbf16>
    %89 = vector.shape_cast %88 : vector<1x1x128x128xbf16> to vector<128x128xbf16>
    %cst_77 = arith.constant dense<0.000000e+00> : vector<128x128xf32>
    %90 = tpu.matmul %87, %89, %cst_77 {dimension_numbers = #tpu.dot_dimension_numbers<[1], [0], [0], [1], [0, 0, 1, 1], [], []>} : vector<128x128xbf16>, vector<128x128xbf16>, vector<128x128xf32> -> vector<128x128xf32>
    %91 = arith.truncf %90 : vector<128x128xf32> to vector<128x128xbf16>
    %cst_78 = arith.constant dense<0.000000e+00> : vector<128x128xf32>
    %92 = tpu.matmul %5, %91, %cst_78 {dimension_numbers = #tpu.dot_dimension_numbers<[1], [0], [0], [1], [0, 0, 1, 1], [], []>} : vector<128x128xbf16>, vector<128x128xbf16>, vector<128x128xf32> -> vector<128x128xf32>
    %93 = vector.broadcast %11 : vector<128x1xf32> to vector<128x128xf32>
    %94 = arith.mulf %92, %93 : vector<128x128xf32>
    %95 = arith.addf %86, %94 : vector<128x128xf32>
    %96 = arith.mulf %95, %16 : vector<128x128xf32>
    %cst_79 = arith.constant 0.000000e+00 : f32
    %97 = vector.broadcast %cst_79 : f32 to vector<128x128xf32>
    %98 = arith.maximumf %96, %97 : vector<128x128xf32>
    %99 = arith.truncf %69 : vector<128x128xf32> to vector<128x128xbf16>
    %c1_80 = arith.constant 1 : index
    %c1_81 = arith.constant 1 : index
    %c0_82 = arith.constant 0 : index
    %c0_83 = arith.constant 0 : index
    %100 = vector.load %arg5[%c1_80, %c1_81, %c0_82, %c0_83] : memref<3x2x128x128xbf16, #tpu.memory_space<vmem>>, vector<1x1x128x128xbf16>
    %101 = vector.shape_cast %100 : vector<1x1x128x128xbf16> to vector<128x128xbf16>
    %cst_84 = arith.constant dense<0.000000e+00> : vector<128x128xf32>
    %102 = tpu.matmul %99, %101, %cst_84 {dimension_numbers = #tpu.dot_dimension_numbers<[1], [0], [0], [1], [0, 0, 1, 1], [], []>} : vector<128x128xbf16>, vector<128x128xbf16>, vector<128x128xf32> -> vector<128x128xf32>
    %c1_85 = arith.constant 1 : index
    %c1_86 = arith.constant 1 : index
    %c0_87 = arith.constant 0 : index
    %c0_88 = arith.constant 0 : index
    %103 = vector.load %arg6[%c1_85, %c1_86, %c0_87, %c0_88] : memref<3x2x1x128xf32, #tpu.memory_space<vmem>>, vector<1x1x1x128xf32>
    %104 = vector.shape_cast %103 : vector<1x1x1x128xf32> to vector<1x128xf32>
    %105 = vector.broadcast %104 : vector<1x128xf32> to vector<128x128xf32>
    %106 = arith.addf %102, %105 : vector<128x128xf32>
    %107 = arith.truncf %51 : vector<128x128xf32> to vector<128x128xbf16>
    %c1_89 = arith.constant 1 : index
    %c0_90 = arith.constant 0 : index
    %c0_91 = arith.constant 0 : index
    %c0_92 = arith.constant 0 : index
    %108 = vector.load %arg4[%c1_89, %c0_90, %c0_91, %c0_92] : memref<3x3x128x128xbf16, #tpu.memory_space<vmem>>, vector<1x1x128x128xbf16>
    %109 = vector.shape_cast %108 : vector<1x1x128x128xbf16> to vector<128x128xbf16>
    %cst_93 = arith.constant dense<0.000000e+00> : vector<128x128xf32>
    %110 = tpu.matmul %107, %109, %cst_93 {dimension_numbers = #tpu.dot_dimension_numbers<[1], [0], [0], [1], [0, 0, 1, 1], [], []>} : vector<128x128xbf16>, vector<128x128xbf16>, vector<128x128xf32> -> vector<128x128xf32>
    %111 = arith.truncf %110 : vector<128x128xf32> to vector<128x128xbf16>
    %cst_94 = arith.constant dense<0.000000e+00> : vector<128x128xf32>
    %112 = tpu.matmul %1, %111, %cst_94 {dimension_numbers = #tpu.dot_dimension_numbers<[1], [0], [0], [1], [0, 0, 1, 1], [], []>} : vector<128x128xbf16>, vector<128x128xbf16>, vector<128x128xf32> -> vector<128x128xf32>
    %113 = vector.broadcast %7 : vector<128x1xf32> to vector<128x128xf32>
    %114 = arith.mulf %112, %113 : vector<128x128xf32>
    %115 = arith.addf %106, %114 : vector<128x128xf32>
    %116 = arith.mulf %115, %21 : vector<128x128xf32>
    %cst_95 = arith.constant 0.000000e+00 : f32
    %117 = vector.broadcast %cst_95 : f32 to vector<128x128xf32>
    %118 = arith.maximumf %116, %117 : vector<128x128xf32>
    %119 = arith.truncf %98 : vector<128x128xf32> to vector<128x128xbf16>
    %c2_96 = arith.constant 2 : index
    %c0_97 = arith.constant 0 : index
    %c0_98 = arith.constant 0 : index
    %c0_99 = arith.constant 0 : index
    %120 = vector.load %arg5[%c2_96, %c0_97, %c0_98, %c0_99] : memref<3x2x128x128xbf16, #tpu.memory_space<vmem>>, vector<1x1x128x128xbf16>
    %121 = vector.shape_cast %120 : vector<1x1x128x128xbf16> to vector<128x128xbf16>
    %cst_100 = arith.constant dense<0.000000e+00> : vector<128x128xf32>
    %122 = tpu.matmul %119, %121, %cst_100 {dimension_numbers = #tpu.dot_dimension_numbers<[1], [0], [0], [1], [0, 0, 1, 1], [], []>} : vector<128x128xbf16>, vector<128x128xbf16>, vector<128x128xf32> -> vector<128x128xf32>
    %c2_101 = arith.constant 2 : index
    %c0_102 = arith.constant 0 : index
    %c0_103 = arith.constant 0 : index
    %c0_104 = arith.constant 0 : index
    %123 = vector.load %arg6[%c2_101, %c0_102, %c0_103, %c0_104] : memref<3x2x1x128xf32, #tpu.memory_space<vmem>>, vector<1x1x1x128xf32>
    %124 = vector.shape_cast %123 : vector<1x1x1x128xf32> to vector<1x128xf32>
    %125 = vector.broadcast %124 : vector<1x128xf32> to vector<128x128xf32>
    %126 = arith.addf %122, %125 : vector<128x128xf32>
    %127 = arith.truncf %118 : vector<128x128xf32> to vector<128x128xbf16>
    %c2_105 = arith.constant 2 : index
    %c1_106 = arith.constant 1 : index
    %c0_107 = arith.constant 0 : index
    %c0_108 = arith.constant 0 : index
    %128 = vector.load %arg4[%c2_105, %c1_106, %c0_107, %c0_108] : memref<3x3x128x128xbf16, #tpu.memory_space<vmem>>, vector<1x1x128x128xbf16>
    %129 = vector.shape_cast %128 : vector<1x1x128x128xbf16> to vector<128x128xbf16>
    %cst_109 = arith.constant dense<0.000000e+00> : vector<128x128xf32>
    %130 = tpu.matmul %127, %129, %cst_109 {dimension_numbers = #tpu.dot_dimension_numbers<[1], [0], [0], [1], [0, 0, 1, 1], [], []>} : vector<128x128xbf16>, vector<128x128xbf16>, vector<128x128xf32> -> vector<128x128xf32>
    %131 = arith.truncf %130 : vector<128x128xf32> to vector<128x128xbf16>
    %cst_110 = arith.constant dense<0.000000e+00> : vector<128x128xf32>
    %132 = tpu.matmul %3, %131, %cst_110 {dimension_numbers = #tpu.dot_dimension_numbers<[1], [0], [0], [1], [0, 0, 1, 1], [], []>} : vector<128x128xbf16>, vector<128x128xbf16>, vector<128x128xf32> -> vector<128x128xf32>
    %133 = vector.broadcast %9 : vector<128x1xf32> to vector<128x128xf32>
    %134 = arith.mulf %132, %133 : vector<128x128xf32>
    %135 = arith.addf %126, %134 : vector<128x128xf32>
    %136 = arith.truncf %98 : vector<128x128xf32> to vector<128x128xbf16>
    %c2_111 = arith.constant 2 : index
    %c2_112 = arith.constant 2 : index
    %c0_113 = arith.constant 0 : index
    %c0_114 = arith.constant 0 : index
    %137 = vector.load %arg4[%c2_111, %c2_112, %c0_113, %c0_114] : memref<3x3x128x128xbf16, #tpu.memory_space<vmem>>, vector<1x1x128x128xbf16>
    %138 = vector.shape_cast %137 : vector<1x1x128x128xbf16> to vector<128x128xbf16>
    %cst_115 = arith.constant dense<0.000000e+00> : vector<128x128xf32>
    %139 = tpu.matmul %136, %138, %cst_115 {dimension_numbers = #tpu.dot_dimension_numbers<[1], [0], [0], [1], [0, 0, 1, 1], [], []>} : vector<128x128xbf16>, vector<128x128xbf16>, vector<128x128xf32> -> vector<128x128xf32>
    %140 = arith.truncf %139 : vector<128x128xf32> to vector<128x128xbf16>
    %cst_116 = arith.constant dense<0.000000e+00> : vector<128x128xf32>
    %141 = tpu.matmul %5, %140, %cst_116 {dimension_numbers = #tpu.dot_dimension_numbers<[1], [0], [0], [1], [0, 0, 1, 1], [], []>} : vector<128x128xbf16>, vector<128x128xbf16>, vector<128x128xf32> -> vector<128x128xf32>
    %142 = vector.broadcast %11 : vector<128x1xf32> to vector<128x128xf32>
    %143 = arith.mulf %141, %142 : vector<128x128xf32>
    %144 = arith.addf %135, %143 : vector<128x128xf32>
    %145 = arith.mulf %144, %16 : vector<128x128xf32>
    %146 = arith.truncf %118 : vector<128x128xf32> to vector<128x128xbf16>
    %c2_117 = arith.constant 2 : index
    %c1_118 = arith.constant 1 : index
    %c0_119 = arith.constant 0 : index
    %c0_120 = arith.constant 0 : index
    %147 = vector.load %arg5[%c2_117, %c1_118, %c0_119, %c0_120] : memref<3x2x128x128xbf16, #tpu.memory_space<vmem>>, vector<1x1x128x128xbf16>
    %148 = vector.shape_cast %147 : vector<1x1x128x128xbf16> to vector<128x128xbf16>
    %cst_121 = arith.constant dense<0.000000e+00> : vector<128x128xf32>
    %149 = tpu.matmul %146, %148, %cst_121 {dimension_numbers = #tpu.dot_dimension_numbers<[1], [0], [0], [1], [0, 0, 1, 1], [], []>} : vector<128x128xbf16>, vector<128x128xbf16>, vector<128x128xf32> -> vector<128x128xf32>
    %c2_122 = arith.constant 2 : index
    %c1_123 = arith.constant 1 : index
    %c0_124 = arith.constant 0 : index
    %c0_125 = arith.constant 0 : index
    %150 = vector.load %arg6[%c2_122, %c1_123, %c0_124, %c0_125] : memref<3x2x1x128xf32, #tpu.memory_space<vmem>>, vector<1x1x1x128xf32>
    %151 = vector.shape_cast %150 : vector<1x1x1x128xf32> to vector<1x128xf32>
    %152 = vector.broadcast %151 : vector<1x128xf32> to vector<128x128xf32>
    %153 = arith.addf %149, %152 : vector<128x128xf32>
    %154 = arith.truncf %98 : vector<128x128xf32> to vector<128x128xbf16>
    %c2_126 = arith.constant 2 : index
    %c0_127 = arith.constant 0 : index
    %c0_128 = arith.constant 0 : index
    %c0_129 = arith.constant 0 : index
    %155 = vector.load %arg4[%c2_126, %c0_127, %c0_128, %c0_129] : memref<3x3x128x128xbf16, #tpu.memory_space<vmem>>, vector<1x1x128x128xbf16>
    %156 = vector.shape_cast %155 : vector<1x1x128x128xbf16> to vector<128x128xbf16>
    %cst_130 = arith.constant dense<0.000000e+00> : vector<128x128xf32>
    %157 = tpu.matmul %154, %156, %cst_130 {dimension_numbers = #tpu.dot_dimension_numbers<[1], [0], [0], [1], [0, 0, 1, 1], [], []>} : vector<128x128xbf16>, vector<128x128xbf16>, vector<128x128xf32> -> vector<128x128xf32>
    %158 = arith.truncf %157 : vector<128x128xf32> to vector<128x128xbf16>
    %cst_131 = arith.constant dense<0.000000e+00> : vector<128x128xf32>
    %159 = tpu.matmul %1, %158, %cst_131 {dimension_numbers = #tpu.dot_dimension_numbers<[1], [0], [0], [1], [0, 0, 1, 1], [], []>} : vector<128x128xbf16>, vector<128x128xbf16>, vector<128x128xf32> -> vector<128x128xf32>
    %160 = vector.broadcast %7 : vector<128x1xf32> to vector<128x128xf32>
    %161 = arith.mulf %159, %160 : vector<128x128xf32>
    %162 = arith.addf %153, %161 : vector<128x128xf32>
    %163 = arith.mulf %162, %21 : vector<128x128xf32>
    %c0_132 = arith.constant 0 : index
    %c0_133 = arith.constant 0 : index
    %c0_134 = arith.constant 0 : index
    %164 = vector.load %arg7[%c0_132, %c0_133, %c0_134] : memref<2x128x128xf32, #tpu.memory_space<vmem>>, vector<1x128x128xf32>
    %165 = vector.shape_cast %164 : vector<1x128x128xf32> to vector<128x128xf32>
    %166 = vector.shape_cast %145 : vector<128x128xf32> to vector<1x128x128xf32>
    tpu.vector_store %arg7[%c0_132, %c0_133, %c0_134], %166 {strides = array<i32>} : memref<2x128x128xf32, #tpu.memory_space<vmem>>, vector<1x128x128xf32>,
    %c1_135 = arith.constant 1 : index
    %c0_136 = arith.constant 0 : index
    %c0_137 = arith.constant 0 : index
    %167 = vector.load %arg7[%c1_135, %c0_136, %c0_137] : memref<2x128x128xf32, #tpu.memory_space<vmem>>, vector<1x128x128xf32>
    %168 = vector.shape_cast %167 : vector<1x128x128xf32> to vector<128x128xf32>
    %169 = vector.shape_cast %163 : vector<128x128xf32> to vector<1x128x128xf32>
    tpu.vector_store %arg7[%c1_135, %c0_136, %c0_137], %169 {strides = array<i32>} : memref<2x128x128xf32, #tpu.memory_space<vmem>>, vector<1x128x128xf32>,
    return
  }
  func.func @transform_0(%arg0: i32) -> (i32, i32, i32) {
    %c0_i32 = arith.constant 0 : i32
    %c0_i32_0 = arith.constant 0 : i32
    %c0_i32_1 = arith.constant 0 : i32
    %c0_i32_2 = arith.constant 0 : i32
    return %c0_i32, %c0_i32_0, %c0_i32_1 : i32, i32, i32
  }
  func.func @transform_1(%arg0: i32) -> (i32, i32, i32) {
    %c0_i32 = arith.constant 0 : i32
    %c0_i32_0 = arith.constant 0 : i32
    %c0_i32_1 = arith.constant 0 : i32
    %c0_i32_2 = arith.constant 0 : i32
    return %c0_i32, %c0_i32_0, %c0_i32_1 : i32, i32, i32
  }
  func.func @transform_2(%arg0: i32) -> (i32, i32, i32) {
    %c0_i32 = arith.constant 0 : i32
    %c0_i32_0 = arith.constant 0 : i32
    %c0_i32_1 = arith.constant 0 : i32
    %c0_i32_2 = arith.constant 0 : i32
    return %c0_i32, %c0_i32_0, %c0_i32_1 : i32, i32, i32
  }
  func.func @transform_3(%arg0: i32) -> (i32, i32, i32, i32) {
    %c0_i32 = arith.constant 0 : i32
    %c0_i32_0 = arith.constant 0 : i32
    %c0_i32_1 = arith.constant 0 : i32
    %c0_i32_2 = arith.constant 0 : i32
    %c0_i32_3 = arith.constant 0 : i32
    return %c0_i32, %c0_i32_0, %c0_i32_1, %c0_i32_2 : i32, i32, i32, i32
  }
  func.func @transform_4(%arg0: i32) -> (i32, i32, i32, i32) {
    %c0_i32 = arith.constant 0 : i32
    %c0_i32_0 = arith.constant 0 : i32
    %c0_i32_1 = arith.constant 0 : i32
    %c0_i32_2 = arith.constant 0 : i32
    %c0_i32_3 = arith.constant 0 : i32
    return %c0_i32, %c0_i32_0, %c0_i32_1, %c0_i32_2 : i32, i32, i32, i32
  }
  func.func @transform_5(%arg0: i32) -> (i32, i32, i32, i32) {
    %c0_i32 = arith.constant 0 : i32
    %c0_i32_0 = arith.constant 0 : i32
    %c0_i32_1 = arith.constant 0 : i32
    %c0_i32_2 = arith.constant 0 : i32
    %c0_i32_3 = arith.constant 0 : i32
    return %c0_i32, %c0_i32_0, %c0_i32_1, %c0_i32_2 : i32, i32, i32, i32
  }
  func.func @transform_6(%arg0: i32) -> (i32, i32, i32) {
    %c0_i32 = arith.constant 0 : i32
    %c0_i32_0 = arith.constant 0 : i32
    %c0_i32_1 = arith.constant 0 : i32
    %c0_i32_2 = arith.constant 0 : i32
    return %c0_i32, %c0_i32_0, %c0_i32_1 : i32, i32, i32
  }
}

</mosaic_0001>

<llo_original>
// kernel: tpu_custom_call.1
$region0: #{tpu_custom_call.1}
  #allocation0 [shape = 'u32[]', space=smem, size = 0x4, offset = 0x4, fixed_abs, tag = 'smem constant byte address 0x4 - core index']
  #allocation1 [shape = 'u32[72,128]{1,0:T(1,128)}', space=vmem, size = 0x9000, scoped, tag = 'internal scratch']
  %s0 = inlined_call_operand.hbm [shape: bf16[2,128,128], index: 0, kind: input, shape index: {}]
  %s1 = inlined_call_operand.hbm [shape: bf16[3,128,128], index: 1, kind: input, shape index: {}]
  %s2 = inlined_call_operand.vmem [shape: f32[3,128,1], index: 2, kind: input, shape index: {}]
  %s3 = inlined_call_operand.hbm [shape: bf16[3,3,128,128], index: 3, kind: input, shape index: {}]
  %s4 = inlined_call_operand.vmem [shape: bf16[3,2,128,128], index: 4, kind: input, shape index: {}]
  %s5 = inlined_call_operand.vmem [shape: f32[3,2,1,128], index: 5, kind: input, shape index: {}]
  %s6 = inlined_call_operand.hbm [shape: f32[2,128,128], index: 6, kind: output, shape index: {}]
  %s7 = sld [smem:[#allocation0]]
  $region46: #{tpu_custom_call.1} parent=0
    _
  %s9 = ssub.s32 1, %s7
  %s10 = scalar_select 0, %s9, %s7
  $region1: #{tpu_custom_call.1} parent=0
    #allocation2 [shape = 'u8[65536]{0}', space=vmem, size = 0x10000, scoped, tag = 'input window, operand 0, single buffered']
    #allocation3 [shape = 's32[1]{0}', space=sflag, size = 0x4, scoped, tag = 'scoped memory for tpu_custom_call.1']
    #allocation4 [shape = 's32[1]{0}', space=sflag, size = 0x4, scoped, tag = 'scoped memory for tpu_custom_call.1']
    #allocation5 [shape = 'u8[98304]{0}', space=vmem, size = 0x18000, scoped, tag = 'input window, operand 1, single buffered']
    #allocation6 [shape = 's32[1]{0}', space=sflag, size = 0x4, scoped, tag = 'scoped memory for tpu_custom_call.1']
    #allocation7 [shape = 'u8[294912]{0}', space=vmem, size = 0x48000, scoped, tag = 'input window, operand 3, single buffered']
    #allocation8 [shape = 'u8[131072]{0}', space=vmem, size = 0x20000, scoped, tag = 'output window, operand 0, single buffered']
    %11 = vsyncpa [#allocation3], 0
    %12 = vsyncpa [#allocation6], 0
    %13 = vsyncpa [#allocation4], 0
    // Predicated region
    $region2: #{tpu_custom_call.1} parent=1 // pred_check
      _
    $region3: #{tpu_custom_call.1} parent=1 // pred_check_branch
      %15 = sbr.rel (0) target = $region5
    $region4: #{tpu_custom_call.1} parent=1 // pred_region
      %17 = vsyncadd [#allocation3], 0
      %s18 = sshll.u32 %s0, 4
      %s19 = int_to_ptr.hbm [resolvable:$true] %s18
      %s20 = sshll.u32 [#allocation2], 4
      %s21 = int_to_ptr.vmem [resolvable:$true] %s20
      %26 = dma.hbm_to_vmem [thread:$0]  %s19, 2048, %s21, [#allocation3], 64, 64, 4
    $region5: #{tpu_custom_call.1} parent=1 // pred_fallthru
      _
    // Predicated region
    $region6: #{tpu_custom_call.1} parent=1 // pred_check
      _
    $region7: #{tpu_custom_call.1} parent=1 // pred_check_branch
      %28 = sbr.rel (0) target = $region9
    $region8: #{tpu_custom_call.1} parent=1 // pred_region
      %30 = vsyncadd [#allocation6], 0
      %s31 = sshll.u32 %s1, 4
      %s32 = int_to_ptr.hbm [resolvable:$true] %s31
      %s33 = sshll.u32 [#allocation5], 4
      %s34 = int_to_ptr.vmem [resolvable:$true] %s33
      %39 = dma.hbm_to_vmem [thread:$0]  %s32, 3072, %s34, [#allocation6], 64, 64, 4
    $region9: #{tpu_custom_call.1} parent=1 // pred_fallthru
      _
    // Predicated region
    $region10: #{tpu_custom_call.1} parent=1 // pred_check
      _
    $region11: #{tpu_custom_call.1} parent=1 // pred_check_branch
      %41 = sbr.rel (0) target = $region13
    $region12: #{tpu_custom_call.1} parent=1 // pred_region
      _
    $region13: #{tpu_custom_call.1} parent=1 // pred_fallthru
      _
    // Predicated region
    $region14: #{tpu_custom_call.1} parent=1 // pred_check
      _
    $region15: #{tpu_custom_call.1} parent=1 // pred_check_branch
      %43 = sbr.rel (0) target = $region17
    $region16: #{tpu_custom_call.1} parent=1 // pred_region
      %45 = vsyncadd [#allocation6], 0
      %s46 = sshll.u32 %s3, 4
      %s47 = int_to_ptr.hbm [resolvable:$true] %s46
      %s48 = sshll.u32 [#allocation7], 4
      %s49 = int_to_ptr.vmem [resolvable:$true] %s48
      %54 = dma.hbm_to_vmem [thread:$0]  %s47, 9216, %s49, [#allocation6], 64, 64, 4
    $region17: #{tpu_custom_call.1} parent=1 // pred_fallthru
      _
    // Predicated region
    $region18: #{tpu_custom_call.1} parent=1 // pred_check
      _
    $region19: #{tpu_custom_call.1} parent=1 // pred_check_branch
      %56 = sbr.rel (0) target = $region21
    $region20: #{tpu_custom_call.1} parent=1 // pred_region
      _
    $region21: #{tpu_custom_call.1} parent=1 // pred_fallthru
      _
    // Predicated region
    $region22: #{tpu_custom_call.1} parent=1 // pred_check
      _
    $region23: #{tpu_custom_call.1} parent=1 // pred_check_branch
      %58 = sbr.rel (0) target = $region25
    $region24: #{tpu_custom_call.1} parent=1 // pred_region
      _
    $region25: #{tpu_custom_call.1} parent=1 // pred_fallthru
      _
    // Predicated region
    $region26: #{tpu_custom_call.1} parent=1 // pred_check
      _
    $region27: #{tpu_custom_call.1} parent=1 // pred_check_branch
      %60 = sbr.rel (0) target = $region29
    $region28: #{tpu_custom_call.1} parent=1 // pred_region
      %62 = dma.done [#allocation3], 2048
    $region29: #{tpu_custom_call.1} parent=1 // pred_fallthru
      _
    // Predicated region
    $region30: #{tpu_custom_call.1} parent=1 // pred_check
      _
    $region31: #{tpu_custom_call.1} parent=1 // pred_check_branch
      %64 = sbr.rel (0) target = $region33
    $region32: #{tpu_custom_call.1} parent=1 // pred_region
      %66 = dma.done [#allocation6], 3072
    $region33: #{tpu_custom_call.1} parent=1 // pred_fallthru
      _
    // Predicated region
    $region34: #{tpu_custom_call.1} parent=1 // pred_check
      _
    $region35: #{tpu_custom_call.1} parent=1 // pred_check_branch
      %68 = sbr.rel (0) target = $region37
    $region36: #{tpu_custom_call.1} parent=1 // pred_region
      %70 = dma.done [#allocation6], 9216
    $region37: #{tpu_custom_call.1} parent=1 // pred_fallthru
      _
    %v71 = vld [vmem:[#allocation5] sm:$0xf]
    %v72 = vld [vmem:[#allocation5 + $0x4] sm:$0xf]
    %v73 = vld [vmem:[#allocation5 + $0x8] sm:$0xf]
    %v74 = vld [vmem:[#allocation5 + $0xc] sm:$0xf]
    %v75 = vld [vmem:[#allocation5 + $0x10] sm:$0xf]
    %v76 = vld [vmem:[#allocation5 + $0x14] sm:$0xf]
    %v77 = vld [vmem:[#allocation5 + $0x18] sm:$0xf]
    %v78 = vld [vmem:[#allocation5 + $0x1c] sm:$0xf]
    %v79 = vld [vmem:[#allocation5 + $0x20] sm:$0xf]
    %v80 = vld [vmem:[#allocation5 + $0x24] sm:$0xf]
    %v81 = vld [vmem:[#allocation5 + $0x28] sm:$0xf]
    %v82 = vld [vmem:[#allocation5 + $0x2c] sm:$0xf]
    %v83 = vld [vmem:[#allocation5 + $0x30] sm:$0xf]
    %v84 = vld [vmem:[#allocation5 + $0x34] sm:$0xf]
    %v85 = vld [vmem:[#allocation5 + $0x38] sm:$0xf]
    %v86 = vld [vmem:[#allocation5 + $0x3c] sm:$0xf]
    %s87 = scalar_lea.vmem [#allocation5], 64
    %v88 = vld [vmem:[%s87] sm:$0xf]
    %v89 = vld [vmem:[%s87 + $0x4] sm:$0xf]
    %v90 = vld [vmem:[%s87 + $0x8] sm:$0xf]
    %v91 = vld [vmem:[%s87 + $0xc] sm:$0xf]
    %v92 = vld [vmem:[%s87 + $0x10] sm:$0xf]
    %v93 = vld [vmem:[%s87 + $0x14] sm:$0xf]
    %v94 = vld [vmem:[%s87 + $0x18] sm:$0xf]
    %v95 = vld [vmem:[%s87 + $0x1c] sm:$0xf]
    %v96 = vld [vmem:[%s87 + $0x20] sm:$0xf]
    %v97 = vld [vmem:[%s87 + $0x24] sm:$0xf]
    %v98 = vld [vmem:[%s87 + $0x28] sm:$0xf]
    %v99 = vld [vmem:[%s87 + $0x2c] sm:$0xf]
    %v100 = vld [vmem:[%s87 + $0x30] sm:$0xf]
    %v101 = vld [vmem:[%s87 + $0x34] sm:$0xf]
    %v102 = vld [vmem:[%s87 + $0x38] sm:$0xf]
    %v103 = vld [vmem:[%s87 + $0x3c] sm:$0xf]
    %s104 = scalar_lea.vmem [#allocation5], 128
    %v105 = vld [vmem:[%s104] sm:$0xf]
    %v106 = vld [vmem:[%s104 + $0x4] sm:$0xf]
    %v107 = vld [vmem:[%s104 + $0x8] sm:$0xf]
    %v108 = vld [vmem:[%s104 + $0xc] sm:$0xf]
    %v109 = vld [vmem:[%s104 + $0x10] sm:$0xf]
    %v110 = vld [vmem:[%s104 + $0x14] sm:$0xf]
    %v111 = vld [vmem:[%s104 + $0x18] sm:$0xf]
    %v112 = vld [vmem:[%s104 + $0x1c] sm:$0xf]
    %v113 = vld [vmem:[%s104 + $0x20] sm:$0xf]
    %v114 = vld [vmem:[%s104 + $0x24] sm:$0xf]
    %v115 = vld [vmem:[%s104 + $0x28] sm:$0xf]
    %v116 = vld [vmem:[%s104 + $0x2c] sm:$0xf]
    %v117 = vld [vmem:[%s104 + $0x30] sm:$0xf]
    %v118 = vld [vmem:[%s104 + $0x34] sm:$0xf]
    %v119 = vld [vmem:[%s104 + $0x38] sm:$0xf]
    %v120 = vld [vmem:[%s104 + $0x3c] sm:$0xf]
    %v121 = vld [vmem:[%s2] sm:$0xff]
    %v122 = vld [vmem:[%s2 + $0x8] sm:$0xff]
    %v123 = vld [vmem:[%s2 + $0x10] sm:$0xff]
    %v124 = vld [vmem:[%s2 + $0x18] sm:$0xff]
    %v125 = vld [vmem:[%s2 + $0x20] sm:$0xff]
    %v126 = vld [vmem:[%s2 + $0x28] sm:$0xff]
    %v127 = vld [vmem:[%s2 + $0x30] sm:$0xff]
    %v128 = vld [vmem:[%s2 + $0x38] sm:$0xff]
    %v129 = vld [vmem:[%s2 + $0x40] sm:$0xff]
    %v130 = vld [vmem:[%s2 + $0x48] sm:$0xff]
    %v131 = vld [vmem:[%s2 + $0x50] sm:$0xff]
    %v132 = vld [vmem:[%s2 + $0x58] sm:$0xff]
    %v133 = vld [vmem:[%s2 + $0x60] sm:$0xff]
    %v134 = vld [vmem:[%s2 + $0x68] sm:$0xff]
    %v135 = vld [vmem:[%s2 + $0x70] sm:$0xff]
    %v136 = vld [vmem:[%s2 + $0x78] sm:$0xff]
    %s137 = scalar_lea.vmem %s2, 128
    %v138 = vld [vmem:[%s137] sm:$0xff]
    %v139 = vld [vmem:[%s137 + $0x8] sm:$0xff]
    %v140 = vld [vmem:[%s137 + $0x10] sm:$0xff]
    %v141 = vld [vmem:[%s137 + $0x18] sm:$0xff]
    %v142 = vld [vmem:[%s137 + $0x20] sm:$0xff]
    %v143 = vld [vmem:[%s137 + $0x28] sm:$0xff]
    %v144 = vld [vmem:[%s137 + $0x30] sm:$0xff]
    %v145 = vld [vmem:[%s137 + $0x38] sm:$0xff]
    %v146 = vld [vmem:[%s137 + $0x40] sm:$0xff]
    %v147 = vld [vmem:[%s137 + $0x48] sm:$0xff]
    %v148 = vld [vmem:[%s137 + $0x50] sm:$0xff]
    %v149 = vld [vmem:[%s137 + $0x58] sm:$0xff]
    %v150 = vld [vmem:[%s137 + $0x60] sm:$0xff]
    %v151 = vld [vmem:[%s137 + $0x68] sm:$0xff]
    %v152 = vld [vmem:[%s137 + $0x70] sm:$0xff]
    %v153 = vld [vmem:[%s137 + $0x78] sm:$0xff]
    %s154 = scalar_lea.vmem %s2, 256
    %v155 = vld [vmem:[%s154] sm:$0xff]
    %v156 = vld [vmem:[%s154 + $0x8] sm:$0xff]
    %v157 = vld [vmem:[%s154 + $0x10] sm:$0xff]
    %v158 = vld [vmem:[%s154 + $0x18] sm:$0xff]
    %v159 = vld [vmem:[%s154 + $0x20] sm:$0xff]
    %v160 = vld [vmem:[%s154 + $0x28] sm:$0xff]
    %v161 = vld [vmem:[%s154 + $0x30] sm:$0xff]
    %v162 = vld [vmem:[%s154 + $0x38] sm:$0xff]
    %v163 = vld [vmem:[%s154 + $0x40] sm:$0xff]
    %v164 = vld [vmem:[%s154 + $0x48] sm:$0xff]
    %v165 = vld [vmem:[%s154 + $0x50] sm:$0xff]
    %v166 = vld [vmem:[%s154 + $0x58] sm:$0xff]
    %v167 = vld [vmem:[%s154 + $0x60] sm:$0xff]
    %v168 = vld [vmem:[%s154 + $0x68] sm:$0xff]
    %v169 = vld [vmem:[%s154 + $0x70] sm:$0xff]
    %v170 = vld [vmem:[%s154 + $0x78] sm:$0xff]
    %v171 = vlaneseq
    %v172 = vshrl.u32 %v171, 7
    %v173 = vadd.s32 %v172, 8
    %v174 = vadd.s32 %v172, 16
    %v175 = vadd.s32 %v172, 24
    %v176 = vadd.s32 %v172, 32
    %v177 = vadd.s32 %v172, 40
    %v178 = vadd.s32 %v172, 48
    %v179 = vadd.s32 %v172, 56
    %v180 = vadd.s32 %v172, 64
    %v181 = vadd.s32 %v172, 72
    %v182 = vadd.s32 %v172, 80
    %v183 = vadd.s32 %v172, 88
    %v184 = vadd.s32 %v172, 96
    %v185 = vadd.s32 %v172, 104
    %v186 = vadd.s32 %v172, 112
    %v187 = vadd.s32 %v172, 120
    %vm188 = vcmp.lt.s32.totalorder %v172, 8
    %vm189 = vcmp.lt.s32.totalorder %v173, 8
    %vm190 = vcmp.lt.s32.totalorder %v174, 8
    %vm191 = vcmp.lt.s32.totalorder %v175, 8
    %vm192 = vcmp.lt.s32.totalorder %v176, 8
    %vm193 = vcmp.lt.s32.totalorder %v177, 8
    %vm194 = vcmp.lt.s32.totalorder %v178, 8
    %vm195 = vcmp.lt.s32.totalorder %v179, 8
    %vm196 = vcmp.lt.s32.totalorder %v180, 8
    %vm197 = vcmp.lt.s32.totalorder %v181, 8
    %vm198 = vcmp.lt.s32.totalorder %v182, 8
    %vm199 = vcmp.lt.s32.totalorder %v183, 8
    %vm200 = vcmp.lt.s32.totalorder %v184, 8
    %vm201 = vcmp.lt.s32.totalorder %v185, 8
    %vm202 = vcmp.lt.s32.totalorder %v186, 8
    %vm203 = vcmp.lt.s32.totalorder %v187, 8
    %v204 = vsel %vm188, 1, 0
    %v205 = vsel %vm189, 1, 0
    %v206 = vsel %vm190, 1, 0
    %v207 = vsel %vm191, 1, 0
    %v208 = vsel %vm192, 1, 0
    %v209 = vsel %vm193, 1, 0
    %v210 = vsel %vm194, 1, 0
    %v211 = vsel %vm195, 1, 0
    %v212 = vsel %vm196, 1, 0
    %v213 = vsel %vm197, 1, 0
    %v214 = vsel %vm198, 1, 0
    %v215 = vsel %vm199, 1, 0
    %v216 = vsel %vm200, 1, 0
    %v217 = vsel %vm201, 1, 0
    %v218 = vsel %vm202, 1, 0
    %v219 = vsel %vm203, 1, 0
    %v220 = vcvt.s32.f32 %v204
    %v221 = vcvt.s32.f32 %v205
    %v222 = vcvt.s32.f32 %v206
    %v223 = vcvt.s32.f32 %v207
    %v224 = vcvt.s32.f32 %v208
    %v225 = vcvt.s32.f32 %v209
    %v226 = vcvt.s32.f32 %v210
    %v227 = vcvt.s32.f32 %v211
    %v228 = vcvt.s32.f32 %v212
    %v229 = vcvt.s32.f32 %v213
    %v230 = vcvt.s32.f32 %v214
    %v231 = vcvt.s32.f32 %v215
    %v232 = vcvt.s32.f32 %v216
    %v233 = vcvt.s32.f32 %v217
    %v234 = vcvt.s32.f32 %v218
    %v235 = vcvt.s32.f32 %v219
    %vm236 = vcmp.lt.s32.totalorder %v172, 16
    %vm237 = vcmp.lt.s32.totalorder %v173, 16
    %vm238 = vcmp.lt.s32.totalorder %v174, 16
    %vm239 = vcmp.lt.s32.totalorder %v175, 16
    %vm240 = vcmp.lt.s32.totalorder %v176, 16
    %vm241 = vcmp.lt.s32.totalorder %v177, 16
    %vm242 = vcmp.lt.s32.totalorder %v178, 16
    %vm243 = vcmp.lt.s32.totalorder %v179, 16
    %vm244 = vcmp.lt.s32.totalorder %v180, 16
    %vm245 = vcmp.lt.s32.totalorder %v181, 16
    %vm246 = vcmp.lt.s32.totalorder %v182, 16
    %vm247 = vcmp.lt.s32.totalorder %v183, 16
    %vm248 = vcmp.lt.s32.totalorder %v184, 16
    %vm249 = vcmp.lt.s32.totalorder %v185, 16
    %vm250 = vcmp.lt.s32.totalorder %v186, 16
    %vm251 = vcmp.lt.s32.totalorder %v187, 16
    %v252 = vsel %vm236, 1, 0
    %v253 = vsel %vm237, 1, 0
    %v254 = vsel %vm238, 1, 0
    %v255 = vsel %vm239, 1, 0
    %v256 = vsel %vm240, 1, 0
    %v257 = vsel %vm241, 1, 0
    %v258 = vsel %vm242, 1, 0
    %v259 = vsel %vm243, 1, 0
    %v260 = vsel %vm244, 1, 0
    %v261 = vsel %vm245, 1, 0
    %v262 = vsel %vm246, 1, 0
    %v263 = vsel %vm247, 1, 0
    %v264 = vsel %vm248, 1, 0
    %v265 = vsel %vm249, 1, 0
    %v266 = vsel %vm250, 1, 0
    %v267 = vsel %vm251, 1, 0
    %v268 = vcvt.s32.f32 %v252
    %v269 = vcvt.s32.f32 %v253
    %v270 = vcvt.s32.f32 %v254
    %v271 = vcvt.s32.f32 %v255
    %v272 = vcvt.s32.f32 %v256
    %v273 = vcvt.s32.f32 %v257
    %v274 = vcvt.s32.f32 %v258
    %v275 = vcvt.s32.f32 %v259
    %v276 = vcvt.s32.f32 %v260
    %v277 = vcvt.s32.f32 %v261
    %v278 = vcvt.s32.f32 %v262
    %v279 = vcvt.s32.f32 %v263
    %v280 = vcvt.s32.f32 %v264
    %v281 = vcvt.s32.f32 %v265
    %v282 = vcvt.s32.f32 %v266
    %v283 = vcvt.s32.f32 %v267
    %v284 = vld [vmem:[#allocation2] sm:$0xf]
    %v285 = vld [vmem:[#allocation2 + $0x4] sm:$0xf]
    %v286 = vld [vmem:[#allocation2 + $0x8] sm:$0xf]
    %v287 = vld [vmem:[#allocation2 + $0xc] sm:$0xf]
    %v288 = vld [vmem:[#allocation2 + $0x10] sm:$0xf]
    %v289 = vld [vmem:[#allocation2 + $0x14] sm:$0xf]
    %v290 = vld [vmem:[#allocation2 + $0x18] sm:$0xf]
    %v291 = vld [vmem:[#allocation2 + $0x1c] sm:$0xf]
    %v292 = vld [vmem:[#allocation2 + $0x20] sm:$0xf]
    %v293 = vld [vmem:[#allocation2 + $0x24] sm:$0xf]
    %v294 = vld [vmem:[#allocation2 + $0x28] sm:$0xf]
    %v295 = vld [vmem:[#allocation2 + $0x2c] sm:$0xf]
    %v296 = vld [vmem:[#allocation2 + $0x30] sm:$0xf]
    %v297 = vld [vmem:[#allocation2 + $0x34] sm:$0xf]
    %v298 = vld [vmem:[#allocation2 + $0x38] sm:$0xf]
    %v299 = vld [vmem:[#allocation2 + $0x3c] sm:$0xf]
    %s300 = scalar_lea.vmem [#allocation2], 64
    %v301 = vld [vmem:[%s300] sm:$0xf]
    %v302 = vld [vmem:[%s300 + $0x4] sm:$0xf]
    %v303 = vld [vmem:[%s300 + $0x8] sm:$0xf]
    %v304 = vld [vmem:[%s300 + $0xc] sm:$0xf]
    %v305 = vld [vmem:[%s300 + $0x10] sm:$0xf]
    %v306 = vld [vmem:[%s300 + $0x14] sm:$0xf]
    %v307 = vld [vmem:[%s300 + $0x18] sm:$0xf]
    %v308 = vld [vmem:[%s300 + $0x1c] sm:$0xf]
    %v309 = vld [vmem:[%s300 + $0x20] sm:$0xf]
    %v310 = vld [vmem:[%s300 + $0x24] sm:$0xf]
    %v311 = vld [vmem:[%s300 + $0x28] sm:$0xf]
    %v312 = vld [vmem:[%s300 + $0x2c] sm:$0xf]
    %v313 = vld [vmem:[%s300 + $0x30] sm:$0xf]
    %v314 = vld [vmem:[%s300 + $0x34] sm:$0xf]
    %v315 = vld [vmem:[%s300 + $0x38] sm:$0xf]
    %v316 = vld [vmem:[%s300 + $0x3c] sm:$0xf]
    %v317 = vld [vmem:[%s4] sm:$0xf]
    %v318 = vld [vmem:[%s4 + $0x4] sm:$0xf]
    %v319 = vld [vmem:[%s4 + $0x8] sm:$0xf]
    %v320 = vld [vmem:[%s4 + $0xc] sm:$0xf]
    %v321 = vld [vmem:[%s4 + $0x10] sm:$0xf]
    %v322 = vld [vmem:[%s4 + $0x14] sm:$0xf]
    %v323 = vld [vmem:[%s4 + $0x18] sm:$0xf]
    %v324 = vld [vmem:[%s4 + $0x1c] sm:$0xf]
    %v325 = vld [vmem:[%s4 + $0x20] sm:$0xf]
    %v326 = vld [vmem:[%s4 + $0x24] sm:$0xf]
    %v327 = vld [vmem:[%s4 + $0x28] sm:$0xf]
    %v328 = vld [vmem:[%s4 + $0x2c] sm:$0xf]
    %v329 = vld [vmem:[%s4 + $0x30] sm:$0xf]
    %v330 = vld [vmem:[%s4 + $0x34] sm:$0xf]
    %v331 = vld [vmem:[%s4 + $0x38] sm:$0xf]
    %v332 = vld [vmem:[%s4 + $0x3c] sm:$0xf]
    %v333 = vld [vmem:[%s5] sm:$0x1]
    %v335 = vperm.slane %v333, 0
    %v353 = vunpack.c.l.b16 %v284
    %v354 = vunpack.c.l.b16 %v285
    %v355 = vunpack.c.l.b16 %v286
    %v356 = vunpack.c.l.b16 %v287
    %v357 = vunpack.c.l.b16 %v288
    %v358 = vunpack.c.l.b16 %v289
    %v359 = vunpack.c.l.b16 %v290
    %v360 = vunpack.c.l.b16 %v291
    %v361 = vunpack.c.l.b16 %v292
    %v362 = vunpack.c.l.b16 %v293
    %v363 = vunpack.c.l.b16 %v294
    %v364 = vunpack.c.l.b16 %v295
    %v365 = vunpack.c.l.b16 %v296
    %v366 = vunpack.c.l.b16 %v297
    %v367 = vunpack.c.l.b16 %v298
    %v368 = vunpack.c.l.b16 %v299
    %v369 = vpack.c.b16 %v354, %v353
    %v370 = vpack.c.b16 %v356, %v355
    %v371 = vpack.c.b16 %v358, %v357
    %v372 = vpack.c.b16 %v360, %v359
    %v373 = vpack.c.b16 %v362, %v361
    %v374 = vpack.c.b16 %v364, %v363
    %v375 = vpack.c.b16 %v366, %v365
    %v376 = vpack.c.b16 %v368, %v367
    %v401 = vunpack.c.l.b16 %v317
    %v402 = vunpack.c.l.b16 %v318
    %v403 = vunpack.c.l.b16 %v319
    %v404 = vunpack.c.l.b16 %v320
    %v405 = vunpack.c.l.b16 %v321
    %v406 = vunpack.c.l.b16 %v322
    %v407 = vunpack.c.l.b16 %v323
    %v408 = vunpack.c.l.b16 %v324
    %v409 = vunpack.c.l.b16 %v325
    %v410 = vunpack.c.l.b16 %v326
    %v411 = vunpack.c.l.b16 %v327
    %v412 = vunpack.c.l.b16 %v328
    %v413 = vunpack.c.l.b16 %v329
    %v414 = vunpack.c.l.b16 %v330
    %v415 = vunpack.c.l.b16 %v331
    %v416 = vunpack.c.l.b16 %v332
    %v417 = vpack.c.b16 %v402, %v401
    %v418 = vpack.c.b16 %v404, %v403
    %v419 = vpack.c.b16 %v406, %v405
    %v420 = vpack.c.b16 %v408, %v407
    %v421 = vpack.c.b16 %v410, %v409
    %v422 = vpack.c.b16 %v412, %v411
    %v423 = vpack.c.b16 %v414, %v413
    %v424 = vpack.c.b16 %v416, %v415
    %433 = vmatpush.bf16.msra.mxu0 %v424
    %434 = vmatpush.bf16.msra.mxu0 %v423
    %435 = vmatpush.bf16.msra.mxu0 %v422
    %436 = vmatpush.bf16.msra.mxu0 %v421
    %437 = vmatpush.bf16.msra.mxu0 %v420
    %438 = vmatpush.bf16.msra.mxu0 %v419
    %439 = vmatpush.bf16.msra.mxu0 %v418
    %440 = vmatpush.bf16.msra.mxu0 %v417
    %441 = vmatmul.bf16.gmra.mxu0 %v369
    %v442 = vpop.f32.mrf.mxu0
    %v443 = vadd.f32 %v335, %v442
    %v444 = vpop.f32.mrf.mxu0
    %v445 = vadd.f32 %v335, %v444
    %446 = vmatmul.bf16.gmra.mxu0 %v370
    %v447 = vpop.f32.mrf.mxu0
    %v448 = vadd.f32 %v335, %v447
    %v449 = vpop.f32.mrf.mxu0
    %v450 = vadd.f32 %v335, %v449
    %451 = vmatmul.bf16.gmra.mxu0 %v371
    %v452 = vpop.f32.mrf.mxu0
    %v453 = vadd.f32 %v335, %v452
    %v454 = vpop.f32.mrf.mxu0
    %v455 = vadd.f32 %v335, %v454
    %456 = vmatmul.bf16.gmra.mxu0 %v372
    %v457 = vpop.f32.mrf.mxu0
    %v458 = vadd.f32 %v335, %v457
    %v459 = vpop.f32.mrf.mxu0
    %v460 = vadd.f32 %v335, %v459
    %461 = vmatmul.bf16.gmra.mxu0 %v373
    %v462 = vpop.f32.mrf.mxu0
    %v463 = vadd.f32 %v335, %v462
    %v464 = vpop.f32.mrf.mxu0
    %v465 = vadd.f32 %v335, %v464
    %466 = vmatmul.bf16.gmra.mxu0 %v374
    %v467 = vpop.f32.mrf.mxu0
    %v468 = vadd.f32 %v335, %v467
    %v469 = vpop.f32.mrf.mxu0
    %v470 = vadd.f32 %v335, %v469
    %471 = vmatmul.bf16.gmra.mxu0 %v375
    %v472 = vpop.f32.mrf.mxu0
    %v473 = vadd.f32 %v335, %v472
    %v474 = vpop.f32.mrf.mxu0
    %v475 = vadd.f32 %v335, %v474
    %476 = vmatmul.bf16.gmra.mxu0 %v376
    %v477 = vpop.f32.mrf.mxu0
    %v478 = vadd.f32 %v335, %v477
    %v479 = vpop.f32.mrf.mxu0
    %v480 = vadd.f32 %v335, %v479
    %481 = vdwg.mxu0
    %s482 = scalar_lea.vmem [#allocation7], 64
    %v483 = vld [vmem:[%s482] sm:$0xf]
    %v484 = vld [vmem:[%s482 + $0x4] sm:$0xf]
    %v485 = vld [vmem:[%s482 + $0x8] sm:$0xf]
    %v486 = vld [vmem:[%s482 + $0xc] sm:$0xf]
    %v487 = vld [vmem:[%s482 + $0x10] sm:$0xf]
    %v488 = vld [vmem:[%s482 + $0x14] sm:$0xf]
    %v489 = vld [vmem:[%s482 + $0x18] sm:$0xf]
    %v490 = vld [vmem:[%s482 + $0x1c] sm:$0xf]
    %v491 = vld [vmem:[%s482 + $0x20] sm:$0xf]
    %v492 = vld [vmem:[%s482 + $0x24] sm:$0xf]
    %v493 = vld [vmem:[%s482 + $0x28] sm:$0xf]
    %v494 = vld [vmem:[%s482 + $0x2c] sm:$0xf]
    %v495 = vld [vmem:[%s482 + $0x30] sm:$0xf]
    %v496 = vld [vmem:[%s482 + $0x34] sm:$0xf]
    %v497 = vld [vmem:[%s482 + $0x38] sm:$0xf]
    %v498 = vld [vmem:[%s482 + $0x3c] sm:$0xf]
    %v515 = vunpack.c.l.b16 %v301
    %v516 = vunpack.c.l.b16 %v302
    %v517 = vunpack.c.l.b16 %v303
    %v518 = vunpack.c.l.b16 %v304
    %v519 = vunpack.c.l.b16 %v305
    %v520 = vunpack.c.l.b16 %v306
    %v521 = vunpack.c.l.b16 %v307
    %v522 = vunpack.c.l.b16 %v308
    %v523 = vunpack.c.l.b16 %v309
    %v524 = vunpack.c.l.b16 %v310
    %v525 = vunpack.c.l.b16 %v311
    %v526 = vunpack.c.l.b16 %v312
    %v527 = vunpack.c.l.b16 %v313
    %v528 = vunpack.c.l.b16 %v314
    %v529 = vunpack.c.l.b16 %v315
    %v530 = vunpack.c.l.b16 %v316
    %v531 = vpack.c.b16 %v516, %v515
    %v532 = vpack.c.b16 %v518, %v517
    %v533 = vpack.c.b16 %v520, %v519
    %v534 = vpack.c.b16 %v522, %v521
    %v535 = vpack.c.b16 %v524, %v523
    %v536 = vpack.c.b16 %v526, %v525
    %v537 = vpack.c.b16 %v528, %v527
    %v538 = vpack.c.b16 %v530, %v529
    %v563 = vunpack.c.l.b16 %v483
    %v564 = vunpack.c.l.b16 %v484
    %v565 = vunpack.c.l.b16 %v485
    %v566 = vunpack.c.l.b16 %v486
    %v567 = vunpack.c.l.b16 %v487
    %v568 = vunpack.c.l.b16 %v488
    %v569 = vunpack.c.l.b16 %v489
    %v570 = vunpack.c.l.b16 %v490
    %v571 = vunpack.c.l.b16 %v491
    %v572 = vunpack.c.l.b16 %v492
    %v573 = vunpack.c.l.b16 %v493
    %v574 = vunpack.c.l.b16 %v494
    %v575 = vunpack.c.l.b16 %v495
    %v576 = vunpack.c.l.b16 %v496
    %v577 = vunpack.c.l.b16 %v497
    %v578 = vunpack.c.l.b16 %v498
    %v579 = vpack.c.b16 %v564, %v563
    %v580 = vpack.c.b16 %v566, %v565
    %v581 = vpack.c.b16 %v568, %v567
    %v582 = vpack.c.b16 %v570, %v569
    %v583 = vpack.c.b16 %v572, %v571
    %v584 = vpack.c.b16 %v574, %v573
    %v585 = vpack.c.b16 %v576, %v575
    %v586 = vpack.c.b16 %v578, %v577
    %595 = vmatpush.bf16.msra.mxu0 %v586
    %596 = vmatpush.bf16.msra.mxu0 %v585
    %597 = vmatpush.bf16.msra.mxu0 %v584
    %598 = vmatpush.bf16.msra.mxu0 %v583
    %599 = vmatpush.bf16.msra.mxu0 %v582
    %600 = vmatpush.bf16.msra.mxu0 %v581
    %601 = vmatpush.bf16.msra.mxu0 %v580
    %602 = vmatpush.bf16.msra.mxu0 %v579
    %603 = vmatmul.bf16.gmra.mxu0 %v531
    %v604 = vpop.f32.mrf.mxu0
    %v605 = vadd.f32 0.0, %v604
    %v606 = vpop.f32.mrf.mxu0
    %v607 = vadd.f32 0.0, %v606
    %608 = vmatmul.bf16.gmra.mxu0 %v532
    %v609 = vpop.f32.mrf.mxu0
    %v610 = vadd.f32 0.0, %v609
    %v611 = vpop.f32.mrf.mxu0
    %v612 = vadd.f32 0.0, %v611
    %613 = vmatmul.bf16.gmra.mxu0 %v533
    %v614 = vpop.f32.mrf.mxu0
    %v615 = vadd.f32 0.0, %v614
    %v616 = vpop.f32.mrf.mxu0
    %v617 = vadd.f32 0.0, %v616
    %618 = vmatmul.bf16.gmra.mxu0 %v534
    %v619 = vpop.f32.mrf.mxu0
    %v620 = vadd.f32 0.0, %v619
    %v621 = vpop.f32.mrf.mxu0
    %v622 = vadd.f32 0.0, %v621
    %623 = vmatmul.bf16.gmra.mxu0 %v535
    %v624 = vpop.f32.mrf.mxu0
    %v625 = vadd.f32 0.0, %v624
    %v626 = vpop.f32.mrf.mxu0
    %v627 = vadd.f32 0.0, %v626
    %628 = vmatmul.bf16.gmra.mxu0 %v536
    %v629 = vpop.f32.mrf.mxu0
    %v630 = vadd.f32 0.0, %v629
    %v631 = vpop.f32.mrf.mxu0
    %v632 = vadd.f32 0.0, %v631
    %633 = vmatmul.bf16.gmra.mxu0 %v537
    %v634 = vpop.f32.mrf.mxu0
    %v635 = vadd.f32 0.0, %v634
    %v636 = vpop.f32.mrf.mxu0
    %v637 = vadd.f32 0.0, %v636
    %638 = vmatmul.bf16.gmra.mxu0 %v538
    %v639 = vpop.f32.mrf.mxu0
    %v640 = vadd.f32 0.0, %v639
    %v641 = vpop.f32.mrf.mxu0
    %v642 = vadd.f32 0.0, %v641
    %643 = vdwg.mxu0
    %v644 = vpack.c.bf16 %v607, %v605
    %v645 = vpack.c.bf16 %v612, %v610
    %v646 = vpack.c.bf16 %v617, %v615
    %v647 = vpack.c.bf16 %v622, %v620
    %v648 = vpack.c.bf16 %v627, %v625
    %v649 = vpack.c.bf16 %v632, %v630
    %v650 = vpack.c.bf16 %v637, %v635
    %v651 = vpack.c.bf16 %v642, %v640
    %v668 = vunpack.c.l.b16 %v88
    %v669 = vunpack.c.l.b16 %v89
    %v670 = vunpack.c.l.b16 %v90
    %v671 = vunpack.c.l.b16 %v91
    %v672 = vunpack.c.l.b16 %v92
    %v673 = vunpack.c.l.b16 %v93
    %v674 = vunpack.c.l.b16 %v94
    %v675 = vunpack.c.l.b16 %v95
    %v676 = vunpack.c.l.b16 %v96
    %v677 = vunpack.c.l.b16 %v97
    %v678 = vunpack.c.l.b16 %v98
    %v679 = vunpack.c.l.b16 %v99
    %v680 = vunpack.c.l.b16 %v100
    %v681 = vunpack.c.l.b16 %v101
    %v682 = vunpack.c.l.b16 %v102
    %v683 = vunpack.c.l.b16 %v103
    %v684 = vpack.c.b16 %v669, %v668
    %v685 = vpack.c.b16 %v671, %v670
    %v686 = vpack.c.b16 %v673, %v672
    %v687 = vpack.c.b16 %v675, %v674
    %v688 = vpack.c.b16 %v677, %v676
    %v689 = vpack.c.b16 %v679, %v678
    %v690 = vpack.c.b16 %v681, %v680
    %v691 = vpack.c.b16 %v683, %v682
    %700 = vmatpush.bf16.msra.mxu0 %v651
    %701 = vmatpush.bf16.msra.mxu0 %v650
    %702 = vmatpush.bf16.msra.mxu0 %v649
    %703 = vmatpush.bf16.msra.mxu0 %v648
    %704 = vmatpush.bf16.msra.mxu0 %v647
    %705 = vmatpush.bf16.msra.mxu0 %v646
    %706 = vmatpush.bf16.msra.mxu0 %v645
    %707 = vmatpush.bf16.msra.mxu0 %v644
    %708 = vmatmul.bf16.gmra.mxu0 %v684
    %v709 = vpop.f32.mrf.mxu0
    %v710 = vadd.f32 0.0, %v709
    %v711 = vpop.f32.mrf.mxu0
    %v712 = vadd.f32 0.0, %v711
    %713 = vmatmul.bf16.gmra.mxu0 %v685
    %v714 = vpop.f32.mrf.mxu0
    %v715 = vadd.f32 0.0, %v714
    %v716 = vpop.f32.mrf.mxu0
    %v717 = vadd.f32 0.0, %v716
    %718 = vmatmul.bf16.gmra.mxu0 %v686
    %v719 = vpop.f32.mrf.mxu0
    %v720 = vadd.f32 0.0, %v719
    %v721 = vpop.f32.mrf.mxu0
    %v722 = vadd.f32 0.0, %v721
    %723 = vmatmul.bf16.gmra.mxu0 %v687
    %v724 = vpop.f32.mrf.mxu0
    %v725 = vadd.f32 0.0, %v724
    %v726 = vpop.f32.mrf.mxu0
    %v727 = vadd.f32 0.0, %v726
    %728 = vmatmul.bf16.gmra.mxu0 %v688
    %v729 = vpop.f32.mrf.mxu0
    %v730 = vadd.f32 0.0, %v729
    %v731 = vpop.f32.mrf.mxu0
    %v732 = vadd.f32 0.0, %v731
    %733 = vmatmul.bf16.gmra.mxu0 %v689
    %v734 = vpop.f32.mrf.mxu0
    %v735 = vadd.f32 0.0, %v734
    %v736 = vpop.f32.mrf.mxu0
    %v737 = vadd.f32 0.0, %v736
    %738 = vmatmul.bf16.gmra.mxu0 %v690
    %v739 = vpop.f32.mrf.mxu0
    %v740 = vadd.f32 0.0, %v739
    %v741 = vpop.f32.mrf.mxu0
    %v742 = vadd.f32 0.0, %v741
    %743 = vmatmul.bf16.gmra.mxu0 %v691
    %v744 = vpop.f32.mrf.mxu0
    %v745 = vadd.f32 0.0, %v744
    %v746 = vpop.f32.mrf.mxu0
    %v747 = vadd.f32 0.0, %v746
    %748 = vdwg.mxu0
    %750 = vset.pattern.permute.xlu0 0
    %751 = vperm.xlu0 %750, %v138
    %v752 = vpop.permute.xlu0 %751
    %755 = vset.pattern.permute.xlu0 0
    %756 = vperm.xlu0 %755, %v139
    %v757 = vpop.permute.xlu0 %756
    %760 = vset.pattern.permute.xlu0 0
    %761 = vperm.xlu0 %760, %v140
    %v762 = vpop.permute.xlu0 %761
    %765 = vset.pattern.permute.xlu0 0
    %766 = vperm.xlu0 %765, %v141
    %v767 = vpop.permute.xlu0 %766
    %770 = vset.pattern.permute.xlu0 0
    %771 = vperm.xlu0 %770, %v142
    %v772 = vpop.permute.xlu0 %771
    %775 = vset.pattern.permute.xlu0 0
    %776 = vperm.xlu0 %775, %v143
    %v777 = vpop.permute.xlu0 %776
    %780 = vset.pattern.permute.xlu0 0
    %781 = vperm.xlu0 %780, %v144
    %v782 = vpop.permute.xlu0 %781
    %785 = vset.pattern.permute.xlu0 0
    %786 = vperm.xlu0 %785, %v145
    %v787 = vpop.permute.xlu0 %786
    %790 = vset.pattern.permute.xlu0 0
    %791 = vperm.xlu0 %790, %v146
    %v792 = vpop.permute.xlu0 %791
    %795 = vset.pattern.permute.xlu0 0
    %796 = vperm.xlu0 %795, %v147
    %v797 = vpop.permute.xlu0 %796
    %800 = vset.pattern.permute.xlu0 0
    %801 = vperm.xlu0 %800, %v148
    %v802 = vpop.permute.xlu0 %801
    %805 = vset.pattern.permute.xlu0 0
    %806 = vperm.xlu0 %805, %v149
    %v807 = vpop.permute.xlu0 %806
    %810 = vset.pattern.permute.xlu0 0
    %811 = vperm.xlu0 %810, %v150
    %v812 = vpop.permute.xlu0 %811
    %815 = vset.pattern.permute.xlu0 0
    %816 = vperm.xlu0 %815, %v151
    %v817 = vpop.permute.xlu0 %816
    %820 = vset.pattern.permute.xlu0 0
    %821 = vperm.xlu0 %820, %v152
    %v822 = vpop.permute.xlu0 %821
    %825 = vset.pattern.permute.xlu0 0
    %826 = vperm.xlu0 %825, %v153
    %v827 = vpop.permute.xlu0 %826
    %v829 = vmul.f32 %v710, %v752
    %v830 = vmul.f32 %v712, %v757
    %v831 = vmul.f32 %v715, %v762
    %v832 = vmul.f32 %v717, %v767
    %v833 = vmul.f32 %v720, %v772
    %v834 = vmul.f32 %v722, %v777
    %v835 = vmul.f32 %v725, %v782
    %v836 = vmul.f32 %v727, %v787
    %v837 = vmul.f32 %v730, %v792
    %v838 = vmul.f32 %v732, %v797
    %v839 = vmul.f32 %v735, %v802
    %v840 = vmul.f32 %v737, %v807
    %v841 = vmul.f32 %v740, %v812
    %v842 = vmul.f32 %v742, %v817
    %v843 = vmul.f32 %v745, %v822
    %v844 = vmul.f32 %v747, %v827
    %v845 = vadd.f32 %v443, %v829
    %v846 = vadd.f32 %v445, %v830
    %v847 = vadd.f32 %v448, %v831
    %v848 = vadd.f32 %v450, %v832
    %v849 = vadd.f32 %v453, %v833
    %v850 = vadd.f32 %v455, %v834
    %v851 = vadd.f32 %v458, %v835
    %v852 = vadd.f32 %v460, %v836
    %v853 = vadd.f32 %v463, %v837
    %v854 = vadd.f32 %v465, %v838
    %v855 = vadd.f32 %v468, %v839
    %v856 = vadd.f32 %v470, %v840
    %v857 = vadd.f32 %v473, %v841
    %v858 = vadd.f32 %v475, %v842
    %v859 = vadd.f32 %v478, %v843
    %v860 = vadd.f32 %v480, %v844
    %s861 = scalar_lea.vmem [#allocation7], 128
    %v862 = vld [vmem:[%s861] sm:$0xf]
    %v863 = vld [vmem:[%s861 + $0x4] sm:$0xf]
    %v864 = vld [vmem:[%s861 + $0x8] sm:$0xf]
    %v865 = vld [vmem:[%s861 + $0xc] sm:$0xf]
    %v866 = vld [vmem:[%s861 + $0x10] sm:$0xf]
    %v867 = vld [vmem:[%s861 + $0x14] sm:$0xf]
    %v868 = vld [vmem:[%s861 + $0x18] sm:$0xf]
    %v869 = vld [vmem:[%s861 + $0x1c] sm:$0xf]
    %v870 = vld [vmem:[%s861 + $0x20] sm:$0xf]
    %v871 = vld [vmem:[%s861 + $0x24] sm:$0xf]
    %v872 = vld [vmem:[%s861 + $0x28] sm:$0xf]
    %v873 = vld [vmem:[%s861 + $0x2c] sm:$0xf]
    %v874 = vld [vmem:[%s861 + $0x30] sm:$0xf]
    %v875 = vld [vmem:[%s861 + $0x34] sm:$0xf]
    %v876 = vld [vmem:[%s861 + $0x38] sm:$0xf]
    %v877 = vld [vmem:[%s861 + $0x3c] sm:$0xf]
    %v894 = vunpack.c.l.b16 %v862
    %v895 = vunpack.c.l.b16 %v863
    %v896 = vunpack.c.l.b16 %v864
    %v897 = vunpack.c.l.b16 %v865
    %v898 = vunpack.c.l.b16 %v866
    %v899 = vunpack.c.l.b16 %v867
    %v900 = vunpack.c.l.b16 %v868
    %v901 = vunpack.c.l.b16 %v869
    %v902 = vunpack.c.l.b16 %v870
    %v903 = vunpack.c.l.b16 %v871
    %v904 = vunpack.c.l.b16 %v872
    %v905 = vunpack.c.l.b16 %v873
    %v906 = vunpack.c.l.b16 %v874
    %v907 = vunpack.c.l.b16 %v875
    %v908 = vunpack.c.l.b16 %v876
    %v909 = vunpack.c.l.b16 %v877
    %v910 = vpack.c.b16 %v895, %v894
    %v911 = vpack.c.b16 %v897, %v896
    %v912 = vpack.c.b16 %v899, %v898
    %v913 = vpack.c.b16 %v901, %v900
    %v914 = vpack.c.b16 %v903, %v902
    %v915 = vpack.c.b16 %v905, %v904
    %v916 = vpack.c.b16 %v907, %v906
    %v917 = vpack.c.b16 %v909, %v908
    %926 = vmatpush.bf16.msra.mxu0 %v917
    %927 = vmatpush.bf16.msra.mxu0 %v916
    %928 = vmatpush.bf16.msra.mxu0 %v915
    %929 = vmatpush.bf16.msra.mxu0 %v914
    %930 = vmatpush.bf16.msra.mxu0 %v913
    %931 = vmatpush.bf16.msra.mxu0 %v912
    %932 = vmatpush.bf16.msra.mxu0 %v911
    %933 = vmatpush.bf16.msra.mxu0 %v910
    %934 = vmatmul.bf16.gmra.mxu0 %v369
    %v935 = vpop.f32.mrf.mxu0
    %v936 = vadd.f32 0.0, %v935
    %v937 = vpop.f32.mrf.mxu0
    %v938 = vadd.f32 0.0, %v937
    %939 = vmatmul.bf16.gmra.mxu0 %v370
    %v940 = vpop.f32.mrf.mxu0
    %v941 = vadd.f32 0.0, %v940
    %v942 = vpop.f32.mrf.mxu0
    %v943 = vadd.f32 0.0, %v942
    %944 = vmatmul.bf16.gmra.mxu0 %v371
    %v945 = vpop.f32.mrf.mxu0
    %v946 = vadd.f32 0.0, %v945
    %v947 = vpop.f32.mrf.mxu0
    %v948 = vadd.f32 0.0, %v947
    %949 = vmatmul.bf16.gmra.mxu0 %v372
    %v950 = vpop.f32.mrf.mxu0
    %v951 = vadd.f32 0.0, %v950
    %v952 = vpop.f32.mrf.mxu0
    %v953 = vadd.f32 0.0, %v952
    %954 = vmatmul.bf16.gmra.mxu0 %v373
    %v955 = vpop.f32.mrf.mxu0
    %v956 = vadd.f32 0.0, %v955
    %v957 = vpop.f32.mrf.mxu0
    %v958 = vadd.f32 0.0, %v957
    %959 = vmatmul.bf16.gmra.mxu0 %v374
    %v960 = vpop.f32.mrf.mxu0
    %v961 = vadd.f32 0.0, %v960
    %v962 = vpop.f32.mrf.mxu0
    %v963 = vadd.f32 0.0, %v962
    %964 = vmatmul.bf16.gmra.mxu0 %v375
    %v965 = vpop.f32.mrf.mxu0
    %v966 = vadd.f32 0.0, %v965
    %v967 = vpop.f32.mrf.mxu0
    %v968 = vadd.f32 0.0, %v967
    %969 = vmatmul.bf16.gmra.mxu0 %v376
    %v970 = vpop.f32.mrf.mxu0
    %v971 = vadd.f32 0.0, %v970
    %v972 = vpop.f32.mrf.mxu0
    %v973 = vadd.f32 0.0, %v972
    %974 = vdwg.mxu0
    %v975 = vpack.c.bf16 %v938, %v936
    %v976 = vpack.c.bf16 %v943, %v941
    %v977 = vpack.c.bf16 %v948, %v946
    %v978 = vpack.c.bf16 %v953, %v951
    %v979 = vpack.c.bf16 %v958, %v956
    %v980 = vpack.c.bf16 %v963, %v961
    %v981 = vpack.c.bf16 %v968, %v966
    %v982 = vpack.c.bf16 %v973, %v971
    %v999 = vunpack.c.l.b16 %v105
    %v1000 = vunpack.c.l.b16 %v106
    %v1001 = vunpack.c.l.b16 %v107
    %v1002 = vunpack.c.l.b16 %v108
    %v1003 = vunpack.c.l.b16 %v109
    %v1004 = vunpack.c.l.b16 %v110
    %v1005 = vunpack.c.l.b16 %v111
    %v1006 = vunpack.c.l.b16 %v112
    %v1007 = vunpack.c.l.b16 %v113
    %v1008 = vunpack.c.l.b16 %v114
    %v1009 = vunpack.c.l.b16 %v115
    %v1010 = vunpack.c.l.b16 %v116
    %v1011 = vunpack.c.l.b16 %v117
    %v1012 = vunpack.c.l.b16 %v118
    %v1013 = vunpack.c.l.b16 %v119
    %v1014 = vunpack.c.l.b16 %v120
    %v1015 = vpack.c.b16 %v1000, %v999
    %v1016 = vpack.c.b16 %v1002, %v1001
    %v1017 = vpack.c.b16 %v1004, %v1003
    %v1018 = vpack.c.b16 %v1006, %v1005
    %v1019 = vpack.c.b16 %v1008, %v1007
    %v1020 = vpack.c.b16 %v1010, %v1009
    %v1021 = vpack.c.b16 %v1012, %v1011
    %v1022 = vpack.c.b16 %v1014, %v1013
    %1031 = vmatpush.bf16.msra.mxu0 %v982
    %1032 = vmatpush.bf16.msra.mxu0 %v981
    %1033 = vmatpush.bf16.msra.mxu0 %v980
    %1034 = vmatpush.bf16.msra.mxu0 %v979
    %1035 = vmatpush.bf16.msra.mxu0 %v978
    %1036 = vmatpush.bf16.msra.mxu0 %v977
    %1037 = vmatpush.bf16.msra.mxu0 %v976
    %1038 = vmatpush.bf16.msra.mxu0 %v975
    %1039 = vmatmul.bf16.gmra.mxu0 %v1015
    %v1040 = vpop.f32.mrf.mxu0
    %v1041 = vadd.f32 0.0, %v1040
    %v1042 = vpop.f32.mrf.mxu0
    %v1043 = vadd.f32 0.0, %v1042
    %1044 = vmatmul.bf16.gmra.mxu0 %v1016
    %v1045 = vpop.f32.mrf.mxu0
    %v1046 = vadd.f32 0.0, %v1045
    %v1047 = vpop.f32.mrf.mxu0
    %v1048 = vadd.f32 0.0, %v1047
    %1049 = vmatmul.bf16.gmra.mxu0 %v1017
    %v1050 = vpop.f32.mrf.mxu0
    %v1051 = vadd.f32 0.0, %v1050
    %v1052 = vpop.f32.mrf.mxu0
    %v1053 = vadd.f32 0.0, %v1052
    %1054 = vmatmul.bf16.gmra.mxu0 %v1018
    %v1055 = vpop.f32.mrf.mxu0
    %v1056 = vadd.f32 0.0, %v1055
    %v1057 = vpop.f32.mrf.mxu0
    %v1058 = vadd.f32 0.0, %v1057
    %1059 = vmatmul.bf16.gmra.mxu0 %v1019
    %v1060 = vpop.f32.mrf.mxu0
    %v1061 = vadd.f32 0.0, %v1060
    %v1062 = vpop.f32.mrf.mxu0
    %v1063 = vadd.f32 0.0, %v1062
    %1064 = vmatmul.bf16.gmra.mxu0 %v1020
    %v1065 = vpop.f32.mrf.mxu0
    %v1066 = vadd.f32 0.0, %v1065
    %v1067 = vpop.f32.mrf.mxu0
    %v1068 = vadd.f32 0.0, %v1067
    %1069 = vmatmul.bf16.gmra.mxu0 %v1021
    %v1070 = vpop.f32.mrf.mxu0
    %v1071 = vadd.f32 0.0, %v1070
    %v1072 = vpop.f32.mrf.mxu0
    %v1073 = vadd.f32 0.0, %v1072
    %1074 = vmatmul.bf16.gmra.mxu0 %v1022
    %v1075 = vpop.f32.mrf.mxu0
    %v1076 = vadd.f32 0.0, %v1075
    %v1077 = vpop.f32.mrf.mxu0
    %v1078 = vadd.f32 0.0, %v1077
    %1079 = vdwg.mxu0
    %1081 = vset.pattern.permute.xlu0 0
    %1082 = vperm.xlu0 %1081, %v155
    %v1083 = vpop.permute.xlu0 %1082
    %1086 = vset.pattern.permute.xlu0 0
    %1087 = vperm.xlu0 %1086, %v156
    %v1088 = vpop.permute.xlu0 %1087
    %1091 = vset.pattern.permute.xlu0 0
    %1092 = vperm.xlu0 %1091, %v157
    %v1093 = vpop.permute.xlu0 %1092
    %1096 = vset.pattern.permute.xlu0 0
    %1097 = vperm.xlu0 %1096, %v158
    %v1098 = vpop.permute.xlu0 %1097
    %1101 = vset.pattern.permute.xlu0 0
    %1102 = vperm.xlu0 %1101, %v159
    %v1103 = vpop.permute.xlu0 %1102
    %1106 = vset.pattern.permute.xlu0 0
    %1107 = vperm.xlu0 %1106, %v160
    %v1108 = vpop.permute.xlu0 %1107
    %1111 = vset.pattern.permute.xlu0 0
    %1112 = vperm.xlu0 %1111, %v161
    %v1113 = vpop.permute.xlu0 %1112
    %1116 = vset.pattern.permute.xlu0 0
    %1117 = vperm.xlu0 %1116, %v162
    %v1118 = vpop.permute.xlu0 %1117
    %1121 = vset.pattern.permute.xlu0 0
    %1122 = vperm.xlu0 %1121, %v163
    %v1123 = vpop.permute.xlu0 %1122
    %1126 = vset.pattern.permute.xlu0 0
    %1127 = vperm.xlu0 %1126, %v164
    %v1128 = vpop.permute.xlu0 %1127
    %1131 = vset.pattern.permute.xlu0 0
    %1132 = vperm.xlu0 %1131, %v165
    %v1133 = vpop.permute.xlu0 %1132
    %1136 = vset.pattern.permute.xlu0 0
    %1137 = vperm.xlu0 %1136, %v166
    %v1138 = vpop.permute.xlu0 %1137
    %1141 = vset.pattern.permute.xlu0 0
    %1142 = vperm.xlu0 %1141, %v167
    %v1143 = vpop.permute.xlu0 %1142
    %1146 = vset.pattern.permute.xlu0 0
    %1147 = vperm.xlu0 %1146, %v168
    %v1148 = vpop.permute.xlu0 %1147
    %1151 = vset.pattern.permute.xlu0 0
    %1152 = vperm.xlu0 %1151, %v169
    %v1153 = vpop.permute.xlu0 %1152
    %1156 = vset.pattern.permute.xlu0 0
    %1157 = vperm.xlu0 %1156, %v170
    %v1158 = vpop.permute.xlu0 %1157
    %v1160 = vmul.f32 %v1041, %v1083
    %v1161 = vmul.f32 %v1043, %v1088
    %v1162 = vmul.f32 %v1046, %v1093
    %v1163 = vmul.f32 %v1048, %v1098
    %v1164 = vmul.f32 %v1051, %v1103
    %v1165 = vmul.f32 %v1053, %v1108
    %v1166 = vmul.f32 %v1056, %v1113
    %v1167 = vmul.f32 %v1058, %v1118
    %v1168 = vmul.f32 %v1061, %v1123
    %v1169 = vmul.f32 %v1063, %v1128
    %v1170 = vmul.f32 %v1066, %v1133
    %v1171 = vmul.f32 %v1068, %v1138
    %v1172 = vmul.f32 %v1071, %v1143
    %v1173 = vmul.f32 %v1073, %v1148
    %v1174 = vmul.f32 %v1076, %v1153
    %v1175 = vmul.f32 %v1078, %v1158
    %v1176 = vadd.f32 %v845, %v1160
    %v1177 = vadd.f32 %v846, %v1161
    %v1178 = vadd.f32 %v847, %v1162
    %v1179 = vadd.f32 %v848, %v1163
    %v1180 = vadd.f32 %v849, %v1164
    %v1181 = vadd.f32 %v850, %v1165
    %v1182 = vadd.f32 %v851, %v1166
    %v1183 = vadd.f32 %v852, %v1167
    %v1184 = vadd.f32 %v853, %v1168
    %v1185 = vadd.f32 %v854, %v1169
    %v1186 = vadd.f32 %v855, %v1170
    %v1187 = vadd.f32 %v856, %v1171
    %v1188 = vadd.f32 %v857, %v1172
    %v1189 = vadd.f32 %v858, %v1173
    %v1190 = vadd.f32 %v859, %v1174
    %v1191 = vadd.f32 %v860, %v1175
    %v1192 = vmul.f32 %v1176, %v220
    %v1193 = vmul.f32 %v1177, %v221
    %v1194 = vmul.f32 %v1178, %v222
    %v1195 = vmul.f32 %v1179, %v223
    %v1196 = vmul.f32 %v1180, %v224
    %v1197 = vmul.f32 %v1181, %v225
    %v1198 = vmul.f32 %v1182, %v226
    %v1199 = vmul.f32 %v1183, %v227
    %v1200 = vmul.f32 %v1184, %v228
    %v1201 = vmul.f32 %v1185, %v229
    %v1202 = vmul.f32 %v1186, %v230
    %v1203 = vmul.f32 %v1187, %v231
    %v1204 = vmul.f32 %v1188, %v232
    %v1205 = vmul.f32 %v1189, %v233
    %v1206 = vmul.f32 %v1190, %v234
    %v1207 = vmul.f32 %v1191, %v235
    %v1208 = vmax.f32 %v1192, 0.0
    %v1209 = vmax.f32 %v1193, 0.0
    %v1210 = vmax.f32 %v1194, 0.0
    %v1211 = vmax.f32 %v1195, 0.0
    %v1212 = vmax.f32 %v1196, 0.0
    %v1213 = vmax.f32 %v1197, 0.0
    %v1214 = vmax.f32 %v1198, 0.0
    %v1215 = vmax.f32 %v1199, 0.0
    %v1216 = vmax.f32 %v1200, 0.0
    %v1217 = vmax.f32 %v1201, 0.0
    %v1218 = vmax.f32 %v1202, 0.0
    %v1219 = vmax.f32 %v1203, 0.0
    %v1220 = vmax.f32 %v1204, 0.0
    %v1221 = vmax.f32 %v1205, 0.0
    %v1222 = vmax.f32 %v1206, 0.0
    %v1223 = vmax.f32 %v1207, 0.0
    %s1224 = scalar_lea.vmem %s4, 64
    %v1225 = vld [vmem:[%s1224] sm:$0xf]
    %v1226 = vld [vmem:[%s1224 + $0x4] sm:$0xf]
    %v1227 = vld [vmem:[%s1224 + $0x8] sm:$0xf]
    %v1228 = vld [vmem:[%s1224 + $0xc] sm:$0xf]
    %v1229 = vld [vmem:[%s1224 + $0x10] sm:$0xf]
    %v1230 = vld [vmem:[%s1224 + $0x14] sm:$0xf]
    %v1231 = vld [vmem:[%s1224 + $0x18] sm:$0xf]
    %v1232 = vld [vmem:[%s1224 + $0x1c] sm:$0xf]
    %v1233 = vld [vmem:[%s1224 + $0x20] sm:$0xf]
    %v1234 = vld [vmem:[%s1224 + $0x24] sm:$0xf]
    %v1235 = vld [vmem:[%s1224 + $0x28] sm:$0xf]
    %v1236 = vld [vmem:[%s1224 + $0x2c] sm:$0xf]
    %v1237 = vld [vmem:[%s1224 + $0x30] sm:$0xf]
    %v1238 = vld [vmem:[%s1224 + $0x34] sm:$0xf]
    %v1239 = vld [vmem:[%s1224 + $0x38] sm:$0xf]
    %v1240 = vld [vmem:[%s1224 + $0x3c] sm:$0xf]
    %s1241 = scalar_lea.vmem %s5, 1
    %v1242 = vld [vmem:[%s1241] sm:$0x1]
    %v1244 = vperm.slane %v1242, 0
    %v1262 = vunpack.c.l.b16 %v1225
    %v1263 = vunpack.c.l.b16 %v1226
    %v1264 = vunpack.c.l.b16 %v1227
    %v1265 = vunpack.c.l.b16 %v1228
    %v1266 = vunpack.c.l.b16 %v1229
    %v1267 = vunpack.c.l.b16 %v1230
    %v1268 = vunpack.c.l.b16 %v1231
    %v1269 = vunpack.c.l.b16 %v1232
    %v1270 = vunpack.c.l.b16 %v1233
    %v1271 = vunpack.c.l.b16 %v1234
    %v1272 = vunpack.c.l.b16 %v1235
    %v1273 = vunpack.c.l.b16 %v1236
    %v1274 = vunpack.c.l.b16 %v1237
    %v1275 = vunpack.c.l.b16 %v1238
    %v1276 = vunpack.c.l.b16 %v1239
    %v1277 = vunpack.c.l.b16 %v1240
    %v1278 = vpack.c.b16 %v1263, %v1262
    %v1279 = vpack.c.b16 %v1265, %v1264
    %v1280 = vpack.c.b16 %v1267, %v1266
    %v1281 = vpack.c.b16 %v1269, %v1268
    %v1282 = vpack.c.b16 %v1271, %v1270
    %v1283 = vpack.c.b16 %v1273, %v1272
    %v1284 = vpack.c.b16 %v1275, %v1274
    %v1285 = vpack.c.b16 %v1277, %v1276
    %1294 = vmatpush.bf16.msra.mxu0 %v1285
    %1295 = vmatpush.bf16.msra.mxu0 %v1284
    %1296 = vmatpush.bf16.msra.mxu0 %v1283
    %1297 = vmatpush.bf16.msra.mxu0 %v1282
    %1298 = vmatpush.bf16.msra.mxu0 %v1281
    %1299 = vmatpush.bf16.msra.mxu0 %v1280
    %1300 = vmatpush.bf16.msra.mxu0 %v1279
    %1301 = vmatpush.bf16.msra.mxu0 %v1278
    %1302 = vmatmul.bf16.gmra.mxu0 %v531
    %v1303 = vpop.f32.mrf.mxu0
    %v1304 = vadd.f32 %v1244, %v1303
    %v1305 = vpop.f32.mrf.mxu0
    %v1306 = vadd.f32 %v1244, %v1305
    %1307 = vmatmul.bf16.gmra.mxu0 %v532
    %v1308 = vpop.f32.mrf.mxu0
    %v1309 = vadd.f32 %v1244, %v1308
    %v1310 = vpop.f32.mrf.mxu0
    %v1311 = vadd.f32 %v1244, %v1310
    %1312 = vmatmul.bf16.gmra.mxu0 %v533
    %v1313 = vpop.f32.mrf.mxu0
    %v1314 = vadd.f32 %v1244, %v1313
    %v1315 = vpop.f32.mrf.mxu0
    %v1316 = vadd.f32 %v1244, %v1315
    %1317 = vmatmul.bf16.gmra.mxu0 %v534
    %v1318 = vpop.f32.mrf.mxu0
    %v1319 = vadd.f32 %v1244, %v1318
    %v1320 = vpop.f32.mrf.mxu0
    %v1321 = vadd.f32 %v1244, %v1320
    %1322 = vmatmul.bf16.gmra.mxu0 %v535
    %v1323 = vpop.f32.mrf.mxu0
    %v1324 = vadd.f32 %v1244, %v1323
    %v1325 = vpop.f32.mrf.mxu0
    %v1326 = vadd.f32 %v1244, %v1325
    %1327 = vmatmul.bf16.gmra.mxu0 %v536
    %v1328 = vpop.f32.mrf.mxu0
    %v1329 = vadd.f32 %v1244, %v1328
    %v1330 = vpop.f32.mrf.mxu0
    %v1331 = vadd.f32 %v1244, %v1330
    %1332 = vmatmul.bf16.gmra.mxu0 %v537
    %v1333 = vpop.f32.mrf.mxu0
    %v1334 = vadd.f32 %v1244, %v1333
    %v1335 = vpop.f32.mrf.mxu0
    %v1336 = vadd.f32 %v1244, %v1335
    %1337 = vmatmul.bf16.gmra.mxu0 %v538
    %v1338 = vpop.f32.mrf.mxu0
    %v1339 = vadd.f32 %v1244, %v1338
    %v1340 = vpop.f32.mrf.mxu0
    %v1341 = vadd.f32 %v1244, %v1340
    %1342 = vdwg.mxu0
    %v1343 = vld [vmem:[#allocation7] sm:$0xf]
    %v1344 = vld [vmem:[#allocation7 + $0x4] sm:$0xf]
    %v1345 = vld [vmem:[#allocation7 + $0x8] sm:$0xf]
    %v1346 = vld [vmem:[#allocation7 + $0xc] sm:$0xf]
    %v1347 = vld [vmem:[#allocation7 + $0x10] sm:$0xf]
    %v1348 = vld [vmem:[#allocation7 + $0x14] sm:$0xf]
    %v1349 = vld [vmem:[#allocation7 + $0x18] sm:$0xf]
    %v1350 = vld [vmem:[#allocation7 + $0x1c] sm:$0xf]
    %v1351 = vld [vmem:[#allocation7 + $0x20] sm:$0xf]
    %v1352 = vld [vmem:[#allocation7 + $0x24] sm:$0xf]
    %v1353 = vld [vmem:[#allocation7 + $0x28] sm:$0xf]
    %v1354 = vld [vmem:[#allocation7 + $0x2c] sm:$0xf]
    %v1355 = vld [vmem:[#allocation7 + $0x30] sm:$0xf]
    %v1356 = vld [vmem:[#allocation7 + $0x34] sm:$0xf]
    %v1357 = vld [vmem:[#allocation7 + $0x38] sm:$0xf]
    %v1358 = vld [vmem:[#allocation7 + $0x3c] sm:$0xf]
    %v1375 = vunpack.c.l.b16 %v1343
    %v1376 = vunpack.c.l.b16 %v1344
    %v1377 = vunpack.c.l.b16 %v1345
    %v1378 = vunpack.c.l.b16 %v1346
    %v1379 = vunpack.c.l.b16 %v1347
    %v1380 = vunpack.c.l.b16 %v1348
    %v1381 = vunpack.c.l.b16 %v1349
    %v1382 = vunpack.c.l.b16 %v1350
    %v1383 = vunpack.c.l.b16 %v1351
    %v1384 = vunpack.c.l.b16 %v1352
    %v1385 = vunpack.c.l.b16 %v1353
    %v1386 = vunpack.c.l.b16 %v1354
    %v1387 = vunpack.c.l.b16 %v1355
    %v1388 = vunpack.c.l.b16 %v1356
    %v1389 = vunpack.c.l.b16 %v1357
    %v1390 = vunpack.c.l.b16 %v1358
    %v1391 = vpack.c.b16 %v1376, %v1375
    %v1392 = vpack.c.b16 %v1378, %v1377
    %v1393 = vpack.c.b16 %v1380, %v1379
    %v1394 = vpack.c.b16 %v1382, %v1381
    %v1395 = vpack.c.b16 %v1384, %v1383
    %v1396 = vpack.c.b16 %v1386, %v1385
    %v1397 = vpack.c.b16 %v1388, %v1387
    %v1398 = vpack.c.b16 %v1390, %v1389
    %1407 = vmatpush.bf16.msra.mxu0 %v1398
    %1408 = vmatpush.bf16.msra.mxu0 %v1397
    %1409 = vmatpush.bf16.msra.mxu0 %v1396
    %1410 = vmatpush.bf16.msra.mxu0 %v1395
    %1411 = vmatpush.bf16.msra.mxu0 %v1394
    %1412 = vmatpush.bf16.msra.mxu0 %v1393
    %1413 = vmatpush.bf16.msra.mxu0 %v1392
    %1414 = vmatpush.bf16.msra.mxu0 %v1391
    %1415 = vmatmul.bf16.gmra.mxu0 %v369
    %v1416 = vpop.f32.mrf.mxu0
    %v1417 = vadd.f32 0.0, %v1416
    %v1418 = vpop.f32.mrf.mxu0
    %v1419 = vadd.f32 0.0, %v1418
    %1420 = vmatmul.bf16.gmra.mxu0 %v370
    %v1421 = vpop.f32.mrf.mxu0
    %v1422 = vadd.f32 0.0, %v1421
    %v1423 = vpop.f32.mrf.mxu0
    %v1424 = vadd.f32 0.0, %v1423
    %1425 = vmatmul.bf16.gmra.mxu0 %v371
    %v1426 = vpop.f32.mrf.mxu0
    %v1427 = vadd.f32 0.0, %v1426
    %v1428 = vpop.f32.mrf.mxu0
    %v1429 = vadd.f32 0.0, %v1428
    %1430 = vmatmul.bf16.gmra.mxu0 %v372
    %v1431 = vpop.f32.mrf.mxu0
    %v1432 = vadd.f32 0.0, %v1431
    %v1433 = vpop.f32.mrf.mxu0
    %v1434 = vadd.f32 0.0, %v1433
    %1435 = vmatmul.bf16.gmra.mxu0 %v373
    %v1436 = vpop.f32.mrf.mxu0
    %v1437 = vadd.f32 0.0, %v1436
    %v1438 = vpop.f32.mrf.mxu0
    %v1439 = vadd.f32 0.0, %v1438
    %1440 = vmatmul.bf16.gmra.mxu0 %v374
    %v1441 = vpop.f32.mrf.mxu0
    %v1442 = vadd.f32 0.0, %v1441
    %v1443 = vpop.f32.mrf.mxu0
    %v1444 = vadd.f32 0.0, %v1443
    %1445 = vmatmul.bf16.gmra.mxu0 %v375
    %v1446 = vpop.f32.mrf.mxu0
    %v1447 = vadd.f32 0.0, %v1446
    %v1448 = vpop.f32.mrf.mxu0
    %v1449 = vadd.f32 0.0, %v1448
    %1450 = vmatmul.bf16.gmra.mxu0 %v376
    %v1451 = vpop.f32.mrf.mxu0
    %v1452 = vadd.f32 0.0, %v1451
    %v1453 = vpop.f32.mrf.mxu0
    %v1454 = vadd.f32 0.0, %v1453
    %1455 = vdwg.mxu0
    %v1456 = vpack.c.bf16 %v1419, %v1417
    %v1457 = vpack.c.bf16 %v1424, %v1422
    %v1458 = vpack.c.bf16 %v1429, %v1427
    %v1459 = vpack.c.bf16 %v1434, %v1432
    %v1460 = vpack.c.bf16 %v1439, %v1437
    %v1461 = vpack.c.bf16 %v1444, %v1442
    %v1462 = vpack.c.bf16 %v1449, %v1447
    %v1463 = vpack.c.bf16 %v1454, %v1452
    %v1480 = vunpack.c.l.b16 %v71
    %v1481 = vunpack.c.l.b16 %v72
    %v1482 = vunpack.c.l.b16 %v73
    %v1483 = vunpack.c.l.b16 %v74
    %v1484 = vunpack.c.l.b16 %v75
    %v1485 = vunpack.c.l.b16 %v76
    %v1486 = vunpack.c.l.b16 %v77
    %v1487 = vunpack.c.l.b16 %v78
    %v1488 = vunpack.c.l.b16 %v79
    %v1489 = vunpack.c.l.b16 %v80
    %v1490 = vunpack.c.l.b16 %v81
    %v1491 = vunpack.c.l.b16 %v82
    %v1492 = vunpack.c.l.b16 %v83
    %v1493 = vunpack.c.l.b16 %v84
    %v1494 = vunpack.c.l.b16 %v85
    %v1495 = vunpack.c.l.b16 %v86
    %v1496 = vpack.c.b16 %v1481, %v1480
    %v1497 = vpack.c.b16 %v1483, %v1482
    %v1498 = vpack.c.b16 %v1485, %v1484
    %v1499 = vpack.c.b16 %v1487, %v1486
    %v1500 = vpack.c.b16 %v1489, %v1488
    %v1501 = vpack.c.b16 %v1491, %v1490
    %v1502 = vpack.c.b16 %v1493, %v1492
    %v1503 = vpack.c.b16 %v1495, %v1494
    %1512 = vmatpush.bf16.msra.mxu0 %v1463
    %1513 = vmatpush.bf16.msra.mxu0 %v1462
    %1514 = vmatpush.bf16.msra.mxu0 %v1461
    %1515 = vmatpush.bf16.msra.mxu0 %v1460
    %1516 = vmatpush.bf16.msra.mxu0 %v1459
    %1517 = vmatpush.bf16.msra.mxu0 %v1458
    %1518 = vmatpush.bf16.msra.mxu0 %v1457
    %1519 = vmatpush.bf16.msra.mxu0 %v1456
    %1520 = vmatmul.bf16.gmra.mxu0 %v1496
    %v1521 = vpop.f32.mrf.mxu0
    %v1522 = vadd.f32 0.0, %v1521
    %v1523 = vpop.f32.mrf.mxu0
    %v1524 = vadd.f32 0.0, %v1523
    %1525 = vmatmul.bf16.gmra.mxu0 %v1497
    %v1526 = vpop.f32.mrf.mxu0
    %v1527 = vadd.f32 0.0, %v1526
    %v1528 = vpop.f32.mrf.mxu0
    %v1529 = vadd.f32 0.0, %v1528
    %1530 = vmatmul.bf16.gmra.mxu0 %v1498
    %v1531 = vpop.f32.mrf.mxu0
    %v1532 = vadd.f32 0.0, %v1531
    %v1533 = vpop.f32.mrf.mxu0
    %v1534 = vadd.f32 0.0, %v1533
    %1535 = vmatmul.bf16.gmra.mxu0 %v1499
    %v1536 = vpop.f32.mrf.mxu0
    %v1537 = vadd.f32 0.0, %v1536
    %v1538 = vpop.f32.mrf.mxu0
    %v1539 = vadd.f32 0.0, %v1538
    %1540 = vmatmul.bf16.gmra.mxu0 %v1500
    %v1541 = vpop.f32.mrf.mxu0
    %v1542 = vadd.f32 0.0, %v1541
    %v1543 = vpop.f32.mrf.mxu0
    %v1544 = vadd.f32 0.0, %v1543
    %1545 = vmatmul.bf16.gmra.mxu0 %v1501
    %v1546 = vpop.f32.mrf.mxu0
    %v1547 = vadd.f32 0.0, %v1546
    %v1548 = vpop.f32.mrf.mxu0
    %v1549 = vadd.f32 0.0, %v1548
    %1550 = vmatmul.bf16.gmra.mxu0 %v1502
    %v1551 = vpop.f32.mrf.mxu0
    %v1552 = vadd.f32 0.0, %v1551
    %v1553 = vpop.f32.mrf.mxu0
    %v1554 = vadd.f32 0.0, %v1553
    %1555 = vmatmul.bf16.gmra.mxu0 %v1503
    %v1556 = vpop.f32.mrf.mxu0
    %v1557 = vadd.f32 0.0, %v1556
    %v1558 = vpop.f32.mrf.mxu0
    %v1559 = vadd.f32 0.0, %v1558
    %1560 = vdwg.mxu0
    %1562 = vset.pattern.permute.xlu0 0
    %1563 = vperm.xlu0 %1562, %v121
    %v1564 = vpop.permute.xlu0 %1563
    %1567 = vset.pattern.permute.xlu0 0
    %1568 = vperm.xlu0 %1567, %v122
    %v1569 = vpop.permute.xlu0 %1568
    %1572 = vset.pattern.permute.xlu0 0
    %1573 = vperm.xlu0 %1572, %v123
    %v1574 = vpop.permute.xlu0 %1573
    %1577 = vset.pattern.permute.xlu0 0
    %1578 = vperm.xlu0 %1577, %v124
    %v1579 = vpop.permute.xlu0 %1578
    %1582 = vset.pattern.permute.xlu0 0
    %1583 = vperm.xlu0 %1582, %v125
    %v1584 = vpop.permute.xlu0 %1583
    %1587 = vset.pattern.permute.xlu0 0
    %1588 = vperm.xlu0 %1587, %v126
    %v1589 = vpop.permute.xlu0 %1588
    %1592 = vset.pattern.permute.xlu0 0
    %1593 = vperm.xlu0 %1592, %v127
    %v1594 = vpop.permute.xlu0 %1593
    %1597 = vset.pattern.permute.xlu0 0
    %1598 = vperm.xlu0 %1597, %v128
    %v1599 = vpop.permute.xlu0 %1598
    %1602 = vset.pattern.permute.xlu0 0
    %1603 = vperm.xlu0 %1602, %v129
    %v1604 = vpop.permute.xlu0 %1603
    %1607 = vset.pattern.permute.xlu0 0
    %1608 = vperm.xlu0 %1607, %v130
    %v1609 = vpop.permute.xlu0 %1608
    %1612 = vset.pattern.permute.xlu0 0
    %1613 = vperm.xlu0 %1612, %v131
    %v1614 = vpop.permute.xlu0 %1613
    %1617 = vset.pattern.permute.xlu0 0
    %1618 = vperm.xlu0 %1617, %v132
    %v1619 = vpop.permute.xlu0 %1618
    %1622 = vset.pattern.permute.xlu0 0
    %1623 = vperm.xlu0 %1622, %v133
    %v1624 = vpop.permute.xlu0 %1623
    %1627 = vset.pattern.permute.xlu0 0
    %1628 = vperm.xlu0 %1627, %v134
    %v1629 = vpop.permute.xlu0 %1628
    %1632 = vset.pattern.permute.xlu0 0
    %1633 = vperm.xlu0 %1632, %v135
    %v1634 = vpop.permute.xlu0 %1633
    %1637 = vset.pattern.permute.xlu0 0
    %1638 = vperm.xlu0 %1637, %v136
    %v1639 = vpop.permute.xlu0 %1638
    %v1641 = vmul.f32 %v1522, %v1564
    %v1642 = vmul.f32 %v1524, %v1569
    %v1643 = vmul.f32 %v1527, %v1574
    %v1644 = vmul.f32 %v1529, %v1579
    %v1645 = vmul.f32 %v1532, %v1584
    %v1646 = vmul.f32 %v1534, %v1589
    %v1647 = vmul.f32 %v1537, %v1594
    %v1648 = vmul.f32 %v1539, %v1599
    %v1649 = vmul.f32 %v1542, %v1604
    %v1650 = vmul.f32 %v1544, %v1609
    %v1651 = vmul.f32 %v1547, %v1614
    %v1652 = vmul.f32 %v1549, %v1619
    %v1653 = vmul.f32 %v1552, %v1624
    %v1654 = vmul.f32 %v1554, %v1629
    %v1655 = vmul.f32 %v1557, %v1634
    %v1656 = vmul.f32 %v1559, %v1639
    %v1657 = vadd.f32 %v1304, %v1641
    %v1658 = vadd.f32 %v1306, %v1642
    %v1659 = vadd.f32 %v1309, %v1643
    %v1660 = vadd.f32 %v1311, %v1644
    %v1661 = vadd.f32 %v1314, %v1645
    %v1662 = vadd.f32 %v1316, %v1646
    %v1663 = vadd.f32 %v1319, %v1647
    %v1664 = vadd.f32 %v1321, %v1648
    %v1665 = vadd.f32 %v1324, %v1649
    %v1666 = vadd.f32 %v1326, %v1650
    %v1667 = vadd.f32 %v1329, %v1651
    %v1668 = vadd.f32 %v1331, %v1652
    %v1669 = vadd.f32 %v1334, %v1653
    %v1670 = vadd.f32 %v1336, %v1654
    %v1671 = vadd.f32 %v1339, %v1655
    %v1672 = vadd.f32 %v1341, %v1656
    %v1673 = vmul.f32 %v1657, %v268
    %v1674 = vmul.f32 %v1658, %v269
    %v1675 = vmul.f32 %v1659, %v270
    %v1676 = vmul.f32 %v1660, %v271
    %v1677 = vmul.f32 %v1661, %v272
    %v1678 = vmul.f32 %v1662, %v273
    %v1679 = vmul.f32 %v1663, %v274
    %v1680 = vmul.f32 %v1664, %v275
    %v1681 = vmul.f32 %v1665, %v276
    %v1682 = vmul.f32 %v1666, %v277
    %v1683 = vmul.f32 %v1667, %v278
    %v1684 = vmul.f32 %v1668, %v279
    %v1685 = vmul.f32 %v1669, %v280
    %v1686 = vmul.f32 %v1670, %v281
    %v1687 = vmul.f32 %v1671, %v282
    %v1688 = vmul.f32 %v1672, %v283
    %v1689 = vmax.f32 %v1673, 0.0
    %v1690 = vmax.f32 %v1674, 0.0
    %v1691 = vmax.f32 %v1675, 0.0
    %v1692 = vmax.f32 %v1676, 0.0
    %v1693 = vmax.f32 %v1677, 0.0
    %v1694 = vmax.f32 %v1678, 0.0
    %v1695 = vmax.f32 %v1679, 0.0
    %v1696 = vmax.f32 %v1680, 0.0
    %v1697 = vmax.f32 %v1681, 0.0
    %v1698 = vmax.f32 %v1682, 0.0
    %v1699 = vmax.f32 %v1683, 0.0
    %v1700 = vmax.f32 %v1684, 0.0
    %v1701 = vmax.f32 %v1685, 0.0
    %v1702 = vmax.f32 %v1686, 0.0
    %v1703 = vmax.f32 %v1687, 0.0
    %v1704 = vmax.f32 %v1688, 0.0
    %v1705 = vpack.c.bf16 %v1209, %v1208
    %v1706 = vpack.c.bf16 %v1211, %v1210
    %v1707 = vpack.c.bf16 %v1213, %v1212
    %v1708 = vpack.c.bf16 %v1215, %v1214
    %v1709 = vpack.c.bf16 %v1217, %v1216
    %v1710 = vpack.c.bf16 %v1219, %v1218
    %v1711 = vpack.c.bf16 %v1221, %v1220
    %v1712 = vpack.c.bf16 %v1223, %v1222
    %s1713 = scalar_lea.vmem %s4, 128
    %v1714 = vld [vmem:[%s1713] sm:$0xf]
    %v1715 = vld [vmem:[%s1713 + $0x4] sm:$0xf]
    %v1716 = vld [vmem:[%s1713 + $0x8] sm:$0xf]
    %v1717 = vld [vmem:[%s1713 + $0xc] sm:$0xf]
    %v1718 = vld [vmem:[%s1713 + $0x10] sm:$0xf]
    %v1719 = vld [vmem:[%s1713 + $0x14] sm:$0xf]
    %v1720 = vld [vmem:[%s1713 + $0x18] sm:$0xf]
    %v1721 = vld [vmem:[%s1713 + $0x1c] sm:$0xf]
    %v1722 = vld [vmem:[%s1713 + $0x20] sm:$0xf]
    %v1723 = vld [vmem:[%s1713 + $0x24] sm:$0xf]
    %v1724 = vld [vmem:[%s1713 + $0x28] sm:$0xf]
    %v1725 = vld [vmem:[%s1713 + $0x2c] sm:$0xf]
    %v1726 = vld [vmem:[%s1713 + $0x30] sm:$0xf]
    %v1727 = vld [vmem:[%s1713 + $0x34] sm:$0xf]
    %v1728 = vld [vmem:[%s1713 + $0x38] sm:$0xf]
    %v1729 = vld [vmem:[%s1713 + $0x3c] sm:$0xf]
    %s1730 = scalar_lea.vmem %s5, 2
    %v1731 = vld [vmem:[%s1730] sm:$0x1]
    %v1733 = vperm.slane %v1731, 0
    %v1751 = vunpack.c.l.b16 %v1714
    %v1752 = vunpack.c.l.b16 %v1715
    %v1753 = vunpack.c.l.b16 %v1716
    %v1754 = vunpack.c.l.b16 %v1717
    %v1755 = vunpack.c.l.b16 %v1718
    %v1756 = vunpack.c.l.b16 %v1719
    %v1757 = vunpack.c.l.b16 %v1720
    %v1758 = vunpack.c.l.b16 %v1721
    %v1759 = vunpack.c.l.b16 %v1722
    %v1760 = vunpack.c.l.b16 %v1723
    %v1761 = vunpack.c.l.b16 %v1724
    %v1762 = vunpack.c.l.b16 %v1725
    %v1763 = vunpack.c.l.b16 %v1726
    %v1764 = vunpack.c.l.b16 %v1727
    %v1765 = vunpack.c.l.b16 %v1728
    %v1766 = vunpack.c.l.b16 %v1729
    %v1767 = vpack.c.b16 %v1752, %v1751
    %v1768 = vpack.c.b16 %v1754, %v1753
    %v1769 = vpack.c.b16 %v1756, %v1755
    %v1770 = vpack.c.b16 %v1758, %v1757
    %v1771 = vpack.c.b16 %v1760, %v1759
    %v1772 = vpack.c.b16 %v1762, %v1761
    %v1773 = vpack.c.b16 %v1764, %v1763
    %v1774 = vpack.c.b16 %v1766, %v1765
    %1783 = vmatpush.bf16.msra.mxu0 %v1774
    %1784 = vmatpush.bf16.msra.mxu0 %v1773
    %1785 = vmatpush.bf16.msra.mxu0 %v1772
    %1786 = vmatpush.bf16.msra.mxu0 %v1771
    %1787 = vmatpush.bf16.msra.mxu0 %v1770
    %1788 = vmatpush.bf16.msra.mxu0 %v1769
    %1789 = vmatpush.bf16.msra.mxu0 %v1768
    %1790 = vmatpush.bf16.msra.mxu0 %v1767
    %1791 = vmatmul.bf16.gmra.mxu0 %v1705
    %v1792 = vpop.f32.mrf.mxu0
    %v1793 = vadd.f32 %v1733, %v1792
    %v1794 = vpop.f32.mrf.mxu0
    %v1795 = vadd.f32 %v1733, %v1794
    %1796 = vmatmul.bf16.gmra.mxu0 %v1706
    %v1797 = vpop.f32.mrf.mxu0
    %v1798 = vadd.f32 %v1733, %v1797
    %v1799 = vpop.f32.mrf.mxu0
    %v1800 = vadd.f32 %v1733, %v1799
    %1801 = vmatmul.bf16.gmra.mxu0 %v1707
    %v1802 = vpop.f32.mrf.mxu0
    %v1803 = vadd.f32 %v1733, %v1802
    %v1804 = vpop.f32.mrf.mxu0
    %v1805 = vadd.f32 %v1733, %v1804
    %1806 = vmatmul.bf16.gmra.mxu0 %v1708
    %v1807 = vpop.f32.mrf.mxu0
    %v1808 = vadd.f32 %v1733, %v1807
    %v1809 = vpop.f32.mrf.mxu0
    %v1810 = vadd.f32 %v1733, %v1809
    %1811 = vmatmul.bf16.gmra.mxu0 %v1709
    %v1812 = vpop.f32.mrf.mxu0
    %v1813 = vadd.f32 %v1733, %v1812
    %v1814 = vpop.f32.mrf.mxu0
    %v1815 = vadd.f32 %v1733, %v1814
    %1816 = vmatmul.bf16.gmra.mxu0 %v1710
    %v1817 = vpop.f32.mrf.mxu0
    %v1818 = vadd.f32 %v1733, %v1817
    %v1819 = vpop.f32.mrf.mxu0
    %v1820 = vadd.f32 %v1733, %v1819
    %1821 = vmatmul.bf16.gmra.mxu0 %v1711
    %v1822 = vpop.f32.mrf.mxu0
    %v1823 = vadd.f32 %v1733, %v1822
    %v1824 = vpop.f32.mrf.mxu0
    %v1825 = vadd.f32 %v1733, %v1824
    %1826 = vmatmul.bf16.gmra.mxu0 %v1712
    %v1827 = vpop.f32.mrf.mxu0
    %v1828 = vadd.f32 %v1733, %v1827
    %v1829 = vpop.f32.mrf.mxu0
    %v1830 = vadd.f32 %v1733, %v1829
    %1831 = vdwg.mxu0
    %v1832 = vpack.c.bf16 %v1690, %v1689
    %v1833 = vpack.c.bf16 %v1692, %v1691
    %v1834 = vpack.c.bf16 %v1694, %v1693
    %v1835 = vpack.c.bf16 %v1696, %v1695
    %v1836 = vpack.c.bf16 %v1698, %v1697
    %v1837 = vpack.c.bf16 %v1700, %v1699
    %v1838 = vpack.c.bf16 %v1702, %v1701
    %v1839 = vpack.c.bf16 %v1704, %v1703
    %s1840 = scalar_lea.vmem [#allocation7], 256
    %v1841 = vld [vmem:[%s1840] sm:$0xf]
    %v1842 = vld [vmem:[%s1840 + $0x4] sm:$0xf]
    %v1843 = vld [vmem:[%s1840 + $0x8] sm:$0xf]
    %v1844 = vld [vmem:[%s1840 + $0xc] sm:$0xf]
    %v1845 = vld [vmem:[%s1840 + $0x10] sm:$0xf]
    %v1846 = vld [vmem:[%s1840 + $0x14] sm:$0xf]
    %v1847 = vld [vmem:[%s1840 + $0x18] sm:$0xf]
    %v1848 = vld [vmem:[%s1840 + $0x1c] sm:$0xf]
    %v1849 = vld [vmem:[%s1840 + $0x20] sm:$0xf]
    %v1850 = vld [vmem:[%s1840 + $0x24] sm:$0xf]
    %v1851 = vld [vmem:[%s1840 + $0x28] sm:$0xf]
    %v1852 = vld [vmem:[%s1840 + $0x2c] sm:$0xf]
    %v1853 = vld [vmem:[%s1840 + $0x30] sm:$0xf]
    %v1854 = vld [vmem:[%s1840 + $0x34] sm:$0xf]
    %v1855 = vld [vmem:[%s1840 + $0x38] sm:$0xf]
    %v1856 = vld [vmem:[%s1840 + $0x3c] sm:$0xf]
    %v1873 = vunpack.c.l.b16 %v1841
    %v1874 = vunpack.c.l.b16 %v1842
    %v1875 = vunpack.c.l.b16 %v1843
    %v1876 = vunpack.c.l.b16 %v1844
    %v1877 = vunpack.c.l.b16 %v1845
    %v1878 = vunpack.c.l.b16 %v1846
    %v1879 = vunpack.c.l.b16 %v1847
    %v1880 = vunpack.c.l.b16 %v1848
    %v1881 = vunpack.c.l.b16 %v1849
    %v1882 = vunpack.c.l.b16 %v1850
    %v1883 = vunpack.c.l.b16 %v1851
    %v1884 = vunpack.c.l.b16 %v1852
    %v1885 = vunpack.c.l.b16 %v1853
    %v1886 = vunpack.c.l.b16 %v1854
    %v1887 = vunpack.c.l.b16 %v1855
    %v1888 = vunpack.c.l.b16 %v1856
    %v1889 = vpack.c.b16 %v1874, %v1873
    %v1890 = vpack.c.b16 %v1876, %v1875
    %v1891 = vpack.c.b16 %v1878, %v1877
    %v1892 = vpack.c.b16 %v1880, %v1879
    %v1893 = vpack.c.b16 %v1882, %v1881
    %v1894 = vpack.c.b16 %v1884, %v1883
    %v1895 = vpack.c.b16 %v1886, %v1885
    %v1896 = vpack.c.b16 %v1888, %v1887
    %1905 = vmatpush.bf16.msra.mxu0 %v1896
    %1906 = vmatpush.bf16.msra.mxu0 %v1895
    %1907 = vmatpush.bf16.msra.mxu0 %v1894
    %1908 = vmatpush.bf16.msra.mxu0 %v1893
    %1909 = vmatpush.bf16.msra.mxu0 %v1892
    %1910 = vmatpush.bf16.msra.mxu0 %v1891
    %1911 = vmatpush.bf16.msra.mxu0 %v1890
    %1912 = vmatpush.bf16.msra.mxu0 %v1889
    %1913 = vmatmul.bf16.gmra.mxu0 %v1832
    %v1914 = vpop.f32.mrf.mxu0
    %v1915 = vadd.f32 0.0, %v1914
    %v1916 = vpop.f32.mrf.mxu0
    %v1917 = vadd.f32 0.0, %v1916
    %1918 = vmatmul.bf16.gmra.mxu0 %v1833
    %v1919 = vpop.f32.mrf.mxu0
    %v1920 = vadd.f32 0.0, %v1919
    %v1921 = vpop.f32.mrf.mxu0
    %v1922 = vadd.f32 0.0, %v1921
    %1923 = vmatmul.bf16.gmra.mxu0 %v1834
    %v1924 = vpop.f32.mrf.mxu0
    %v1925 = vadd.f32 0.0, %v1924
    %v1926 = vpop.f32.mrf.mxu0
    %v1927 = vadd.f32 0.0, %v1926
    %1928 = vmatmul.bf16.gmra.mxu0 %v1835
    %v1929 = vpop.f32.mrf.mxu0
    %v1930 = vadd.f32 0.0, %v1929
    %v1931 = vpop.f32.mrf.mxu0
    %v1932 = vadd.f32 0.0, %v1931
    %1933 = vmatmul.bf16.gmra.mxu0 %v1836
    %v1934 = vpop.f32.mrf.mxu0
    %v1935 = vadd.f32 0.0, %v1934
    %v1936 = vpop.f32.mrf.mxu0
    %v1937 = vadd.f32 0.0, %v1936
    %1938 = vmatmul.bf16.gmra.mxu0 %v1837
    %v1939 = vpop.f32.mrf.mxu0
    %v1940 = vadd.f32 0.0, %v1939
    %v1941 = vpop.f32.mrf.mxu0
    %v1942 = vadd.f32 0.0, %v1941
    %1943 = vmatmul.bf16.gmra.mxu0 %v1838
    %v1944 = vpop.f32.mrf.mxu0
    %v1945 = vadd.f32 0.0, %v1944
    %v1946 = vpop.f32.mrf.mxu0
    %v1947 = vadd.f32 0.0, %v1946
    %1948 = vmatmul.bf16.gmra.mxu0 %v1839
    %v1949 = vpop.f32.mrf.mxu0
    %v1950 = vadd.f32 0.0, %v1949
    %v1951 = vpop.f32.mrf.mxu0
    %v1952 = vadd.f32 0.0, %v1951
    %1953 = vdwg.mxu0
    %v1954 = vpack.c.bf16 %v1917, %v1915
    %v1955 = vpack.c.bf16 %v1922, %v1920
    %v1956 = vpack.c.bf16 %v1927, %v1925
    %v1957 = vpack.c.bf16 %v1932, %v1930
    %v1958 = vpack.c.bf16 %v1937, %v1935
    %v1959 = vpack.c.bf16 %v1942, %v1940
    %v1960 = vpack.c.bf16 %v1947, %v1945
    %v1961 = vpack.c.bf16 %v1952, %v1950
    %1962 = vmatpush.bf16.msra.mxu0 %v1961
    %1963 = vmatpush.bf16.msra.mxu0 %v1960
    %1964 = vmatpush.bf16.msra.mxu0 %v1959
    %1965 = vmatpush.bf16.msra.mxu0 %v1958
    %1966 = vmatpush.bf16.msra.mxu0 %v1957
    %1967 = vmatpush.bf16.msra.mxu0 %v1956
    %1968 = vmatpush.bf16.msra.mxu0 %v1955
    %1969 = vmatpush.bf16.msra.mxu0 %v1954
    %1970 = vmatmul.bf16.gmra.mxu0 %v684
    %v1971 = vpop.f32.mrf.mxu0
    %v1972 = vadd.f32 0.0, %v1971
    %v1973 = vpop.f32.mrf.mxu0
    %v1974 = vadd.f32 0.0, %v1973
    %1975 = vmatmul.bf16.gmra.mxu0 %v685
    %v1976 = vpop.f32.mrf.mxu0
    %v1977 = vadd.f32 0.0, %v1976
    %v1978 = vpop.f32.mrf.mxu0
    %v1979 = vadd.f32 0.0, %v1978
    %1980 = vmatmul.bf16.gmra.mxu0 %v686
    %v1981 = vpop.f32.mrf.mxu0
    %v1982 = vadd.f32 0.0, %v1981
    %v1983 = vpop.f32.mrf.mxu0
    %v1984 = vadd.f32 0.0, %v1983
    %1985 = vmatmul.bf16.gmra.mxu0 %v687
    %v1986 = vpop.f32.mrf.mxu0
    %v1987 = vadd.f32 0.0, %v1986
    %v1988 = vpop.f32.mrf.mxu0
    %v1989 = vadd.f32 0.0, %v1988
    %1990 = vmatmul.bf16.gmra.mxu0 %v688
    %v1991 = vpop.f32.mrf.mxu0
    %v1992 = vadd.f32 0.0, %v1991
    %v1993 = vpop.f32.mrf.mxu0
    %v1994 = vadd.f32 0.0, %v1993
    %1995 = vmatmul.bf16.gmra.mxu0 %v689
    %v1996 = vpop.f32.mrf.mxu0
    %v1997 = vadd.f32 0.0, %v1996
    %v1998 = vpop.f32.mrf.mxu0
    %v1999 = vadd.f32 0.0, %v1998
    %2000 = vmatmul.bf16.gmra.mxu0 %v690
    %v2001 = vpop.f32.mrf.mxu0
    %v2002 = vadd.f32 0.0, %v2001
    %v2003 = vpop.f32.mrf.mxu0
    %v2004 = vadd.f32 0.0, %v2003
    %2005 = vmatmul.bf16.gmra.mxu0 %v691
    %v2006 = vpop.f32.mrf.mxu0
    %v2007 = vadd.f32 0.0, %v2006
    %v2008 = vpop.f32.mrf.mxu0
    %v2009 = vadd.f32 0.0, %v2008
    %2010 = vdwg.mxu0
    %v2011 = vmul.f32 %v1972, %v752
    %v2012 = vmul.f32 %v1974, %v757
    %v2013 = vmul.f32 %v1977, %v762
    %v2014 = vmul.f32 %v1979, %v767
    %v2015 = vmul.f32 %v1982, %v772
    %v2016 = vmul.f32 %v1984, %v777
    %v2017 = vmul.f32 %v1987, %v782
    %v2018 = vmul.f32 %v1989, %v787
    %v2019 = vmul.f32 %v1992, %v792
    %v2020 = vmul.f32 %v1994, %v797
    %v2021 = vmul.f32 %v1997, %v802
    %v2022 = vmul.f32 %v1999, %v807
    %v2023 = vmul.f32 %v2002, %v812
    %v2024 = vmul.f32 %v2004, %v817
    %v2025 = vmul.f32 %v2007, %v822
    %v2026 = vmul.f32 %v2009, %v827
    %v2027 = vadd.f32 %v1793, %v2011
    %v2028 = vadd.f32 %v1795, %v2012
    %v2029 = vadd.f32 %v1798, %v2013
    %v2030 = vadd.f32 %v1800, %v2014
    %v2031 = vadd.f32 %v1803, %v2015
    %v2032 = vadd.f32 %v1805, %v2016
    %v2033 = vadd.f32 %v1808, %v2017
    %v2034 = vadd.f32 %v1810, %v2018
    %v2035 = vadd.f32 %v1813, %v2019
    %v2036 = vadd.f32 %v1815, %v2020
    %v2037 = vadd.f32 %v1818, %v2021
    %v2038 = vadd.f32 %v1820, %v2022
    %v2039 = vadd.f32 %v1823, %v2023
    %v2040 = vadd.f32 %v1825, %v2024
    %v2041 = vadd.f32 %v1828, %v2025
    %v2042 = vadd.f32 %v1830, %v2026
    %s2043 = scalar_lea.vmem [#allocation7], 320
    %v2044 = vld [vmem:[%s2043] sm:$0xf]
    %v2045 = vld [vmem:[%s2043 + $0x4] sm:$0xf]
    %v2046 = vld [vmem:[%s2043 + $0x8] sm:$0xf]
    %v2047 = vld [vmem:[%s2043 + $0xc] sm:$0xf]
    %v2048 = vld [vmem:[%s2043 + $0x10] sm:$0xf]
    %v2049 = vld [vmem:[%s2043 + $0x14] sm:$0xf]
    %v2050 = vld [vmem:[%s2043 + $0x18] sm:$0xf]
    %v2051 = vld [vmem:[%s2043 + $0x1c] sm:$0xf]
    %v2052 = vld [vmem:[%s2043 + $0x20] sm:$0xf]
    %v2053 = vld [vmem:[%s2043 + $0x24] sm:$0xf]
    %v2054 = vld [vmem:[%s2043 + $0x28] sm:$0xf]
    %v2055 = vld [vmem:[%s2043 + $0x2c] sm:$0xf]
    %v2056 = vld [vmem:[%s2043 + $0x30] sm:$0xf]
    %v2057 = vld [vmem:[%s2043 + $0x34] sm:$0xf]
    %v2058 = vld [vmem:[%s2043 + $0x38] sm:$0xf]
    %v2059 = vld [vmem:[%s2043 + $0x3c] sm:$0xf]
    %v2076 = vunpack.c.l.b16 %v2044
    %v2077 = vunpack.c.l.b16 %v2045
    %v2078 = vunpack.c.l.b16 %v2046
    %v2079 = vunpack.c.l.b16 %v2047
    %v2080 = vunpack.c.l.b16 %v2048
    %v2081 = vunpack.c.l.b16 %v2049
    %v2082 = vunpack.c.l.b16 %v2050
    %v2083 = vunpack.c.l.b16 %v2051
    %v2084 = vunpack.c.l.b16 %v2052
    %v2085 = vunpack.c.l.b16 %v2053
    %v2086 = vunpack.c.l.b16 %v2054
    %v2087 = vunpack.c.l.b16 %v2055
    %v2088 = vunpack.c.l.b16 %v2056
    %v2089 = vunpack.c.l.b16 %v2057
    %v2090 = vunpack.c.l.b16 %v2058
    %v2091 = vunpack.c.l.b16 %v2059
    %v2092 = vpack.c.b16 %v2077, %v2076
    %v2093 = vpack.c.b16 %v2079, %v2078
    %v2094 = vpack.c.b16 %v2081, %v2080
    %v2095 = vpack.c.b16 %v2083, %v2082
    %v2096 = vpack.c.b16 %v2085, %v2084
    %v2097 = vpack.c.b16 %v2087, %v2086
    %v2098 = vpack.c.b16 %v2089, %v2088
    %v2099 = vpack.c.b16 %v2091, %v2090
    %2108 = vmatpush.bf16.msra.mxu0 %v2099
    %2109 = vmatpush.bf16.msra.mxu0 %v2098
    %2110 = vmatpush.bf16.msra.mxu0 %v2097
    %2111 = vmatpush.bf16.msra.mxu0 %v2096
    %2112 = vmatpush.bf16.msra.mxu0 %v2095
    %2113 = vmatpush.bf16.msra.mxu0 %v2094
    %2114 = vmatpush.bf16.msra.mxu0 %v2093
    %2115 = vmatpush.bf16.msra.mxu0 %v2092
    %2116 = vmatmul.bf16.gmra.mxu0 %v1705
    %v2117 = vpop.f32.mrf.mxu0
    %v2118 = vadd.f32 0.0, %v2117
    %v2119 = vpop.f32.mrf.mxu0
    %v2120 = vadd.f32 0.0, %v2119
    %2121 = vmatmul.bf16.gmra.mxu0 %v1706
    %v2122 = vpop.f32.mrf.mxu0
    %v2123 = vadd.f32 0.0, %v2122
    %v2124 = vpop.f32.mrf.mxu0
    %v2125 = vadd.f32 0.0, %v2124
    %2126 = vmatmul.bf16.gmra.mxu0 %v1707
    %v2127 = vpop.f32.mrf.mxu0
    %v2128 = vadd.f32 0.0, %v2127
    %v2129 = vpop.f32.mrf.mxu0
    %v2130 = vadd.f32 0.0, %v2129
    %2131 = vmatmul.bf16.gmra.mxu0 %v1708
    %v2132 = vpop.f32.mrf.mxu0
    %v2133 = vadd.f32 0.0, %v2132
    %v2134 = vpop.f32.mrf.mxu0
    %v2135 = vadd.f32 0.0, %v2134
    %2136 = vmatmul.bf16.gmra.mxu0 %v1709
    %v2137 = vpop.f32.mrf.mxu0
    %v2138 = vadd.f32 0.0, %v2137
    %v2139 = vpop.f32.mrf.mxu0
    %v2140 = vadd.f32 0.0, %v2139
    %2141 = vmatmul.bf16.gmra.mxu0 %v1710
    %v2142 = vpop.f32.mrf.mxu0
    %v2143 = vadd.f32 0.0, %v2142
    %v2144 = vpop.f32.mrf.mxu0
    %v2145 = vadd.f32 0.0, %v2144
    %2146 = vmatmul.bf16.gmra.mxu0 %v1711
    %v2147 = vpop.f32.mrf.mxu0
    %v2148 = vadd.f32 0.0, %v2147
    %v2149 = vpop.f32.mrf.mxu0
    %v2150 = vadd.f32 0.0, %v2149
    %2151 = vmatmul.bf16.gmra.mxu0 %v1712
    %v2152 = vpop.f32.mrf.mxu0
    %v2153 = vadd.f32 0.0, %v2152
    %v2154 = vpop.f32.mrf.mxu0
    %v2155 = vadd.f32 0.0, %v2154
    %2156 = vdwg.mxu0
    %v2157 = vpack.c.bf16 %v2120, %v2118
    %v2158 = vpack.c.bf16 %v2125, %v2123
    %v2159 = vpack.c.bf16 %v2130, %v2128
    %v2160 = vpack.c.bf16 %v2135, %v2133
    %v2161 = vpack.c.bf16 %v2140, %v2138
    %v2162 = vpack.c.bf16 %v2145, %v2143
    %v2163 = vpack.c.bf16 %v2150, %v2148
    %v2164 = vpack.c.bf16 %v2155, %v2153
    %2165 = vmatpush.bf16.msra.mxu0 %v2164
    %2166 = vmatpush.bf16.msra.mxu0 %v2163
    %2167 = vmatpush.bf16.msra.mxu0 %v2162
    %2168 = vmatpush.bf16.msra.mxu0 %v2161
    %2169 = vmatpush.bf16.msra.mxu0 %v2160
    %2170 = vmatpush.bf16.msra.mxu0 %v2159
    %2171 = vmatpush.bf16.msra.mxu0 %v2158
    %2172 = vmatpush.bf16.msra.mxu0 %v2157
    %2173 = vmatmul.bf16.gmra.mxu0 %v1015
    %v2174 = vpop.f32.mrf.mxu0
    %v2175 = vadd.f32 0.0, %v2174
    %v2176 = vpop.f32.mrf.mxu0
    %v2177 = vadd.f32 0.0, %v2176
    %2178 = vmatmul.bf16.gmra.mxu0 %v1016
    %v2179 = vpop.f32.mrf.mxu0
    %v2180 = vadd.f32 0.0, %v2179
    %v2181 = vpop.f32.mrf.mxu0
    %v2182 = vadd.f32 0.0, %v2181
    %2183 = vmatmul.bf16.gmra.mxu0 %v1017
    %v2184 = vpop.f32.mrf.mxu0
    %v2185 = vadd.f32 0.0, %v2184
    %v2186 = vpop.f32.mrf.mxu0
    %v2187 = vadd.f32 0.0, %v2186
    %2188 = vmatmul.bf16.gmra.mxu0 %v1018
    %v2189 = vpop.f32.mrf.mxu0
    %v2190 = vadd.f32 0.0, %v2189
    %v2191 = vpop.f32.mrf.mxu0
    %v2192 = vadd.f32 0.0, %v2191
    %2193 = vmatmul.bf16.gmra.mxu0 %v1019
    %v2194 = vpop.f32.mrf.mxu0
    %v2195 = vadd.f32 0.0, %v2194
    %v2196 = vpop.f32.mrf.mxu0
    %v2197 = vadd.f32 0.0, %v2196
    %2198 = vmatmul.bf16.gmra.mxu0 %v1020
    %v2199 = vpop.f32.mrf.mxu0
    %v2200 = vadd.f32 0.0, %v2199
    %v2201 = vpop.f32.mrf.mxu0
    %v2202 = vadd.f32 0.0, %v2201
    %2203 = vmatmul.bf16.gmra.mxu0 %v1021
    %v2204 = vpop.f32.mrf.mxu0
    %v2205 = vadd.f32 0.0, %v2204
    %v2206 = vpop.f32.mrf.mxu0
    %v2207 = vadd.f32 0.0, %v2206
    %2208 = vmatmul.bf16.gmra.mxu0 %v1022
    %v2209 = vpop.f32.mrf.mxu0
    %v2210 = vadd.f32 0.0, %v2209
    %v2211 = vpop.f32.mrf.mxu0
    %v2212 = vadd.f32 0.0, %v2211
    %2213 = vdwg.mxu0
    %v2214 = vmul.f32 %v2175, %v1083
    %v2215 = vmul.f32 %v2177, %v1088
    %v2216 = vmul.f32 %v2180, %v1093
    %v2217 = vmul.f32 %v2182, %v1098
    %v2218 = vmul.f32 %v2185, %v1103
    %v2219 = vmul.f32 %v2187, %v1108
    %v2220 = vmul.f32 %v2190, %v1113
    %v2221 = vmul.f32 %v2192, %v1118
    %v2222 = vmul.f32 %v2195, %v1123
    %v2223 = vmul.f32 %v2197, %v1128
    %v2224 = vmul.f32 %v2200, %v1133
    %v2225 = vmul.f32 %v2202, %v1138
    %v2226 = vmul.f32 %v2205, %v1143
    %v2227 = vmul.f32 %v2207, %v1148
    %v2228 = vmul.f32 %v2210, %v1153
    %v2229 = vmul.f32 %v2212, %v1158
    %v2230 = vadd.f32 %v2027, %v2214
    %v2231 = vadd.f32 %v2028, %v2215
    %v2232 = vadd.f32 %v2029, %v2216
    %v2233 = vadd.f32 %v2030, %v2217
    %v2234 = vadd.f32 %v2031, %v2218
    %v2235 = vadd.f32 %v2032, %v2219
    %v2236 = vadd.f32 %v2033, %v2220
    %v2237 = vadd.f32 %v2034, %v2221
    %v2238 = vadd.f32 %v2035, %v2222
    %v2239 = vadd.f32 %v2036, %v2223
    %v2240 = vadd.f32 %v2037, %v2224
    %v2241 = vadd.f32 %v2038, %v2225
    %v2242 = vadd.f32 %v2039, %v2226
    %v2243 = vadd.f32 %v2040, %v2227
    %v2244 = vadd.f32 %v2041, %v2228
    %v2245 = vadd.f32 %v2042, %v2229
    %v2246 = vmul.f32 %v2230, %v220
    %v2247 = vmul.f32 %v2231, %v221
    %v2248 = vmul.f32 %v2232, %v222
    %v2249 = vmul.f32 %v2233, %v223
    %v2250 = vmul.f32 %v2234, %v224
    %v2251 = vmul.f32 %v2235, %v225
    %v2252 = vmul.f32 %v2236, %v226
    %v2253 = vmul.f32 %v2237, %v227
    %v2254 = vmul.f32 %v2238, %v228
    %v2255 = vmul.f32 %v2239, %v229
    %v2256 = vmul.f32 %v2240, %v230
    %v2257 = vmul.f32 %v2241, %v231
    %v2258 = vmul.f32 %v2242, %v232
    %v2259 = vmul.f32 %v2243, %v233
    %v2260 = vmul.f32 %v2244, %v234
    %v2261 = vmul.f32 %v2245, %v235
    %v2262 = vmax.f32 %v2246, 0.0
    %v2263 = vmax.f32 %v2247, 0.0
    %v2264 = vmax.f32 %v2248, 0.0
    %v2265 = vmax.f32 %v2249, 0.0
    %v2266 = vmax.f32 %v2250, 0.0
    %v2267 = vmax.f32 %v2251, 0.0
    %v2268 = vmax.f32 %v2252, 0.0
    %v2269 = vmax.f32 %v2253, 0.0
    %v2270 = vmax.f32 %v2254, 0.0
    %v2271 = vmax.f32 %v2255, 0.0
    %v2272 = vmax.f32 %v2256, 0.0
    %v2273 = vmax.f32 %v2257, 0.0
    %v2274 = vmax.f32 %v2258, 0.0
    %v2275 = vmax.f32 %v2259, 0.0
    %v2276 = vmax.f32 %v2260, 0.0
    %v2277 = vmax.f32 %v2261, 0.0
    %s2278 = scalar_lea.vmem %s4, 192
    %v2279 = vld [vmem:[%s2278] sm:$0xf]
    %v2280 = vld [vmem:[%s2278 + $0x4] sm:$0xf]
    %v2281 = vld [vmem:[%s2278 + $0x8] sm:$0xf]
    %v2282 = vld [vmem:[%s2278 + $0xc] sm:$0xf]
    %v2283 = vld [vmem:[%s2278 + $0x10] sm:$0xf]
    %v2284 = vld [vmem:[%s2278 + $0x14] sm:$0xf]
    %v2285 = vld [vmem:[%s2278 + $0x18] sm:$0xf]
    %v2286 = vld [vmem:[%s2278 + $0x1c] sm:$0xf]
    %v2287 = vld [vmem:[%s2278 + $0x20] sm:$0xf]
    %v2288 = vld [vmem:[%s2278 + $0x24] sm:$0xf]
    %v2289 = vld [vmem:[%s2278 + $0x28] sm:$0xf]
    %v2290 = vld [vmem:[%s2278 + $0x2c] sm:$0xf]
    %v2291 = vld [vmem:[%s2278 + $0x30] sm:$0xf]
    %v2292 = vld [vmem:[%s2278 + $0x34] sm:$0xf]
    %v2293 = vld [vmem:[%s2278 + $0x38] sm:$0xf]
    %v2294 = vld [vmem:[%s2278 + $0x3c] sm:$0xf]
    %s2295 = scalar_lea.vmem %s5, 3
    %v2296 = vld [vmem:[%s2295] sm:$0x1]
    %v2298 = vperm.slane %v2296, 0
    %v2316 = vunpack.c.l.b16 %v2279
    %v2317 = vunpack.c.l.b16 %v2280
    %v2318 = vunpack.c.l.b16 %v2281
    %v2319 = vunpack.c.l.b16 %v2282
    %v2320 = vunpack.c.l.b16 %v2283
    %v2321 = vunpack.c.l.b16 %v2284
    %v2322 = vunpack.c.l.b16 %v2285
    %v2323 = vunpack.c.l.b16 %v2286
    %v2324 = vunpack.c.l.b16 %v2287
    %v2325 = vunpack.c.l.b16 %v2288
    %v2326 = vunpack.c.l.b16 %v2289
    %v2327 = vunpack.c.l.b16 %v2290
    %v2328 = vunpack.c.l.b16 %v2291
    %v2329 = vunpack.c.l.b16 %v2292
    %v2330 = vunpack.c.l.b16 %v2293
    %v2331 = vunpack.c.l.b16 %v2294
    %v2332 = vpack.c.b16 %v2317, %v2316
    %v2333 = vpack.c.b16 %v2319, %v2318
    %v2334 = vpack.c.b16 %v2321, %v2320
    %v2335 = vpack.c.b16 %v2323, %v2322
    %v2336 = vpack.c.b16 %v2325, %v2324
    %v2337 = vpack.c.b16 %v2327, %v2326
    %v2338 = vpack.c.b16 %v2329, %v2328
    %v2339 = vpack.c.b16 %v2331, %v2330
    %2348 = vmatpush.bf16.msra.mxu0 %v2339
    %2349 = vmatpush.bf16.msra.mxu0 %v2338
    %2350 = vmatpush.bf16.msra.mxu0 %v2337
    %2351 = vmatpush.bf16.msra.mxu0 %v2336
    %2352 = vmatpush.bf16.msra.mxu0 %v2335
    %2353 = vmatpush.bf16.msra.mxu0 %v2334
    %2354 = vmatpush.bf16.msra.mxu0 %v2333
    %2355 = vmatpush.bf16.msra.mxu0 %v2332
    %2356 = vmatmul.bf16.gmra.mxu0 %v1832
    %v2357 = vpop.f32.mrf.mxu0
    %v2358 = vadd.f32 %v2298, %v2357
    %v2359 = vpop.f32.mrf.mxu0
    %v2360 = vadd.f32 %v2298, %v2359
    %2361 = vmatmul.bf16.gmra.mxu0 %v1833
    %v2362 = vpop.f32.mrf.mxu0
    %v2363 = vadd.f32 %v2298, %v2362
    %v2364 = vpop.f32.mrf.mxu0
    %v2365 = vadd.f32 %v2298, %v2364
    %2366 = vmatmul.bf16.gmra.mxu0 %v1834
    %v2367 = vpop.f32.mrf.mxu0
    %v2368 = vadd.f32 %v2298, %v2367
    %v2369 = vpop.f32.mrf.mxu0
    %v2370 = vadd.f32 %v2298, %v2369
    %2371 = vmatmul.bf16.gmra.mxu0 %v1835
    %v2372 = vpop.f32.mrf.mxu0
    %v2373 = vadd.f32 %v2298, %v2372
    %v2374 = vpop.f32.mrf.mxu0
    %v2375 = vadd.f32 %v2298, %v2374
    %2376 = vmatmul.bf16.gmra.mxu0 %v1836
    %v2377 = vpop.f32.mrf.mxu0
    %v2378 = vadd.f32 %v2298, %v2377
    %v2379 = vpop.f32.mrf.mxu0
    %v2380 = vadd.f32 %v2298, %v2379
    %2381 = vmatmul.bf16.gmra.mxu0 %v1837
    %v2382 = vpop.f32.mrf.mxu0
    %v2383 = vadd.f32 %v2298, %v2382
    %v2384 = vpop.f32.mrf.mxu0
    %v2385 = vadd.f32 %v2298, %v2384
    %2386 = vmatmul.bf16.gmra.mxu0 %v1838
    %v2387 = vpop.f32.mrf.mxu0
    %v2388 = vadd.f32 %v2298, %v2387
    %v2389 = vpop.f32.mrf.mxu0
    %v2390 = vadd.f32 %v2298, %v2389
    %2391 = vmatmul.bf16.gmra.mxu0 %v1839
    %v2392 = vpop.f32.mrf.mxu0
    %v2393 = vadd.f32 %v2298, %v2392
    %v2394 = vpop.f32.mrf.mxu0
    %v2395 = vadd.f32 %v2298, %v2394
    %2396 = vdwg.mxu0
    %s2397 = scalar_lea.vmem [#allocation7], 192
    %v2398 = vld [vmem:[%s2397] sm:$0xf]
    %v2399 = vld [vmem:[%s2397 + $0x4] sm:$0xf]
    %v2400 = vld [vmem:[%s2397 + $0x8] sm:$0xf]
    %v2401 = vld [vmem:[%s2397 + $0xc] sm:$0xf]
    %v2402 = vld [vmem:[%s2397 + $0x10] sm:$0xf]
    %v2403 = vld [vmem:[%s2397 + $0x14] sm:$0xf]
    %v2404 = vld [vmem:[%s2397 + $0x18] sm:$0xf]
    %v2405 = vld [vmem:[%s2397 + $0x1c] sm:$0xf]
    %v2406 = vld [vmem:[%s2397 + $0x20] sm:$0xf]
    %v2407 = vld [vmem:[%s2397 + $0x24] sm:$0xf]
    %v2408 = vld [vmem:[%s2397 + $0x28] sm:$0xf]
    %v2409 = vld [vmem:[%s2397 + $0x2c] sm:$0xf]
    %v2410 = vld [vmem:[%s2397 + $0x30] sm:$0xf]
    %v2411 = vld [vmem:[%s2397 + $0x34] sm:$0xf]
    %v2412 = vld [vmem:[%s2397 + $0x38] sm:$0xf]
    %v2413 = vld [vmem:[%s2397 + $0x3c] sm:$0xf]
    %v2430 = vunpack.c.l.b16 %v2398
    %v2431 = vunpack.c.l.b16 %v2399
    %v2432 = vunpack.c.l.b16 %v2400
    %v2433 = vunpack.c.l.b16 %v2401
    %v2434 = vunpack.c.l.b16 %v2402
    %v2435 = vunpack.c.l.b16 %v2403
    %v2436 = vunpack.c.l.b16 %v2404
    %v2437 = vunpack.c.l.b16 %v2405
    %v2438 = vunpack.c.l.b16 %v2406
    %v2439 = vunpack.c.l.b16 %v2407
    %v2440 = vunpack.c.l.b16 %v2408
    %v2441 = vunpack.c.l.b16 %v2409
    %v2442 = vunpack.c.l.b16 %v2410
    %v2443 = vunpack.c.l.b16 %v2411
    %v2444 = vunpack.c.l.b16 %v2412
    %v2445 = vunpack.c.l.b16 %v2413
    %v2446 = vpack.c.b16 %v2431, %v2430
    %v2447 = vpack.c.b16 %v2433, %v2432
    %v2448 = vpack.c.b16 %v2435, %v2434
    %v2449 = vpack.c.b16 %v2437, %v2436
    %v2450 = vpack.c.b16 %v2439, %v2438
    %v2451 = vpack.c.b16 %v2441, %v2440
    %v2452 = vpack.c.b16 %v2443, %v2442
    %v2453 = vpack.c.b16 %v2445, %v2444
    %2462 = vmatpush.bf16.msra.mxu0 %v2453
    %2463 = vmatpush.bf16.msra.mxu0 %v2452
    %2464 = vmatpush.bf16.msra.mxu0 %v2451
    %2465 = vmatpush.bf16.msra.mxu0 %v2450
    %2466 = vmatpush.bf16.msra.mxu0 %v2449
    %2467 = vmatpush.bf16.msra.mxu0 %v2448
    %2468 = vmatpush.bf16.msra.mxu0 %v2447
    %2469 = vmatpush.bf16.msra.mxu0 %v2446
    %2470 = vmatmul.bf16.gmra.mxu0 %v1705
    %v2471 = vpop.f32.mrf.mxu0
    %v2472 = vadd.f32 0.0, %v2471
    %v2473 = vpop.f32.mrf.mxu0
    %v2474 = vadd.f32 0.0, %v2473
    %2475 = vmatmul.bf16.gmra.mxu0 %v1706
    %v2476 = vpop.f32.mrf.mxu0
    %v2477 = vadd.f32 0.0, %v2476
    %v2478 = vpop.f32.mrf.mxu0
    %v2479 = vadd.f32 0.0, %v2478
    %2480 = vmatmul.bf16.gmra.mxu0 %v1707
    %v2481 = vpop.f32.mrf.mxu0
    %v2482 = vadd.f32 0.0, %v2481
    %v2483 = vpop.f32.mrf.mxu0
    %v2484 = vadd.f32 0.0, %v2483
    %2485 = vmatmul.bf16.gmra.mxu0 %v1708
    %v2486 = vpop.f32.mrf.mxu0
    %v2487 = vadd.f32 0.0, %v2486
    %v2488 = vpop.f32.mrf.mxu0
    %v2489 = vadd.f32 0.0, %v2488
    %2490 = vmatmul.bf16.gmra.mxu0 %v1709
    %v2491 = vpop.f32.mrf.mxu0
    %v2492 = vadd.f32 0.0, %v2491
    %v2493 = vpop.f32.mrf.mxu0
    %v2494 = vadd.f32 0.0, %v2493
    %2495 = vmatmul.bf16.gmra.mxu0 %v1710
    %v2496 = vpop.f32.mrf.mxu0
    %v2497 = vadd.f32 0.0, %v2496
    %v2498 = vpop.f32.mrf.mxu0
    %v2499 = vadd.f32 0.0, %v2498
    %2500 = vmatmul.bf16.gmra.mxu0 %v1711
    %v2501 = vpop.f32.mrf.mxu0
    %v2502 = vadd.f32 0.0, %v2501
    %v2503 = vpop.f32.mrf.mxu0
    %v2504 = vadd.f32 0.0, %v2503
    %2505 = vmatmul.bf16.gmra.mxu0 %v1712
    %v2506 = vpop.f32.mrf.mxu0
    %v2507 = vadd.f32 0.0, %v2506
    %v2508 = vpop.f32.mrf.mxu0
    %v2509 = vadd.f32 0.0, %v2508
    %2510 = vdwg.mxu0
    %v2511 = vpack.c.bf16 %v2474, %v2472
    %v2512 = vpack.c.bf16 %v2479, %v2477
    %v2513 = vpack.c.bf16 %v2484, %v2482
    %v2514 = vpack.c.bf16 %v2489, %v2487
    %v2515 = vpack.c.bf16 %v2494, %v2492
    %v2516 = vpack.c.bf16 %v2499, %v2497
    %v2517 = vpack.c.bf16 %v2504, %v2502
    %v2518 = vpack.c.bf16 %v2509, %v2507
    %2519 = vmatpush.bf16.msra.mxu0 %v2518
    %2520 = vmatpush.bf16.msra.mxu0 %v2517
    %2521 = vmatpush.bf16.msra.mxu0 %v2516
    %2522 = vmatpush.bf16.msra.mxu0 %v2515
    %2523 = vmatpush.bf16.msra.mxu0 %v2514
    %2524 = vmatpush.bf16.msra.mxu0 %v2513
    %2525 = vmatpush.bf16.msra.mxu0 %v2512
    %2526 = vmatpush.bf16.msra.mxu0 %v2511
    %2527 = vmatmul.bf16.gmra.mxu0 %v1496
    %v2528 = vpop.f32.mrf.mxu0
    %v2529 = vadd.f32 0.0, %v2528
    %v2530 = vpop.f32.mrf.mxu0
    %v2531 = vadd.f32 0.0, %v2530
    %2532 = vmatmul.bf16.gmra.mxu0 %v1497
    %v2533 = vpop.f32.mrf.mxu0
    %v2534 = vadd.f32 0.0, %v2533
    %v2535 = vpop.f32.mrf.mxu0
    %v2536 = vadd.f32 0.0, %v2535
    %2537 = vmatmul.bf16.gmra.mxu0 %v1498
    %v2538 = vpop.f32.mrf.mxu0
    %v2539 = vadd.f32 0.0, %v2538
    %v2540 = vpop.f32.mrf.mxu0
    %v2541 = vadd.f32 0.0, %v2540
    %2542 = vmatmul.bf16.gmra.mxu0 %v1499
    %v2543 = vpop.f32.mrf.mxu0
    %v2544 = vadd.f32 0.0, %v2543
    %v2545 = vpop.f32.mrf.mxu0
    %v2546 = vadd.f32 0.0, %v2545
    %2547 = vmatmul.bf16.gmra.mxu0 %v1500
    %v2548 = vpop.f32.mrf.mxu0
    %v2549 = vadd.f32 0.0, %v2548
    %v2550 = vpop.f32.mrf.mxu0
    %v2551 = vadd.f32 0.0, %v2550
    %2552 = vmatmul.bf16.gmra.mxu0 %v1501
    %v2553 = vpop.f32.mrf.mxu0
    %v2554 = vadd.f32 0.0, %v2553
    %v2555 = vpop.f32.mrf.mxu0
    %v2556 = vadd.f32 0.0, %v2555
    %2557 = vmatmul.bf16.gmra.mxu0 %v1502
    %v2558 = vpop.f32.mrf.mxu0
    %v2559 = vadd.f32 0.0, %v2558
    %v2560 = vpop.f32.mrf.mxu0
    %v2561 = vadd.f32 0.0, %v2560
    %2562 = vmatmul.bf16.gmra.mxu0 %v1503
    %v2563 = vpop.f32.mrf.mxu0
    %v2564 = vadd.f32 0.0, %v2563
    %v2565 = vpop.f32.mrf.mxu0
    %v2566 = vadd.f32 0.0, %v2565
    %2567 = vdwg.mxu0
    %v2568 = vmul.f32 %v2529, %v1564
    %v2569 = vmul.f32 %v2531, %v1569
    %v2570 = vmul.f32 %v2534, %v1574
    %v2571 = vmul.f32 %v2536, %v1579
    %v2572 = vmul.f32 %v2539, %v1584
    %v2573 = vmul.f32 %v2541, %v1589
    %v2574 = vmul.f32 %v2544, %v1594
    %v2575 = vmul.f32 %v2546, %v1599
    %v2576 = vmul.f32 %v2549, %v1604
    %v2577 = vmul.f32 %v2551, %v1609
    %v2578 = vmul.f32 %v2554, %v1614
    %v2579 = vmul.f32 %v2556, %v1619
    %v2580 = vmul.f32 %v2559, %v1624
    %v2581 = vmul.f32 %v2561, %v1629
    %v2582 = vmul.f32 %v2564, %v1634
    %v2583 = vmul.f32 %v2566, %v1639
    %v2584 = vadd.f32 %v2358, %v2568
    %v2585 = vadd.f32 %v2360, %v2569
    %v2586 = vadd.f32 %v2363, %v2570
    %v2587 = vadd.f32 %v2365, %v2571
    %v2588 = vadd.f32 %v2368, %v2572
    %v2589 = vadd.f32 %v2370, %v2573
    %v2590 = vadd.f32 %v2373, %v2574
    %v2591 = vadd.f32 %v2375, %v2575
    %v2592 = vadd.f32 %v2378, %v2576
    %v2593 = vadd.f32 %v2380, %v2577
    %v2594 = vadd.f32 %v2383, %v2578
    %v2595 = vadd.f32 %v2385, %v2579
    %v2596 = vadd.f32 %v2388, %v2580
    %v2597 = vadd.f32 %v2390, %v2581
    %v2598 = vadd.f32 %v2393, %v2582
    %v2599 = vadd.f32 %v2395, %v2583
    %v2600 = vmul.f32 %v2584, %v268
    %v2601 = vmul.f32 %v2585, %v269
    %v2602 = vmul.f32 %v2586, %v270
    %v2603 = vmul.f32 %v2587, %v271
    %v2604 = vmul.f32 %v2588, %v272
    %v2605 = vmul.f32 %v2589, %v273
    %v2606 = vmul.f32 %v2590, %v274
    %v2607 = vmul.f32 %v2591, %v275
    %v2608 = vmul.f32 %v2592, %v276
    %v2609 = vmul.f32 %v2593, %v277
    %v2610 = vmul.f32 %v2594, %v278
    %v2611 = vmul.f32 %v2595, %v279
    %v2612 = vmul.f32 %v2596, %v280
    %v2613 = vmul.f32 %v2597, %v281
    %v2614 = vmul.f32 %v2598, %v282
    %v2615 = vmul.f32 %v2599, %v283
    %v2616 = vmax.f32 %v2600, 0.0
    %v2617 = vmax.f32 %v2601, 0.0
    %v2618 = vmax.f32 %v2602, 0.0
    %v2619 = vmax.f32 %v2603, 0.0
    %v2620 = vmax.f32 %v2604, 0.0
    %v2621 = vmax.f32 %v2605, 0.0
    %v2622 = vmax.f32 %v2606, 0.0
    %v2623 = vmax.f32 %v2607, 0.0
    %v2624 = vmax.f32 %v2608, 0.0
    %v2625 = vmax.f32 %v2609, 0.0
    %v2626 = vmax.f32 %v2610, 0.0
    %v2627 = vmax.f32 %v2611, 0.0
    %v2628 = vmax.f32 %v2612, 0.0
    %v2629 = vmax.f32 %v2613, 0.0
    %v2630 = vmax.f32 %v2614, 0.0
    %v2631 = vmax.f32 %v2615, 0.0
    %v2632 = vpack.c.bf16 %v2263, %v2262
    %v2633 = vpack.c.bf16 %v2265, %v2264
    %v2634 = vpack.c.bf16 %v2267, %v2266
    %v2635 = vpack.c.bf16 %v2269, %v2268
    %v2636 = vpack.c.bf16 %v2271, %v2270
    %v2637 = vpack.c.bf16 %v2273, %v2272
    %v2638 = vpack.c.bf16 %v2275, %v2274
    %v2639 = vpack.c.bf16 %v2277, %v2276
    %s2640 = scalar_lea.vmem %s4, 256
    %v2641 = vld [vmem:[%s2640] sm:$0xf]
    %v2642 = vld [vmem:[%s2640 + $0x4] sm:$0xf]
    %v2643 = vld [vmem:[%s2640 + $0x8] sm:$0xf]
    %v2644 = vld [vmem:[%s2640 + $0xc] sm:$0xf]
    %v2645 = vld [vmem:[%s2640 + $0x10] sm:$0xf]
    %v2646 = vld [vmem:[%s2640 + $0x14] sm:$0xf]
    %v2647 = vld [vmem:[%s2640 + $0x18] sm:$0xf]
    %v2648 = vld [vmem:[%s2640 + $0x1c] sm:$0xf]
    %v2649 = vld [vmem:[%s2640 + $0x20] sm:$0xf]
    %v2650 = vld [vmem:[%s2640 + $0x24] sm:$0xf]
    %v2651 = vld [vmem:[%s2640 + $0x28] sm:$0xf]
    %v2652 = vld [vmem:[%s2640 + $0x2c] sm:$0xf]
    %v2653 = vld [vmem:[%s2640 + $0x30] sm:$0xf]
    %v2654 = vld [vmem:[%s2640 + $0x34] sm:$0xf]
    %v2655 = vld [vmem:[%s2640 + $0x38] sm:$0xf]
    %v2656 = vld [vmem:[%s2640 + $0x3c] sm:$0xf]
    %s2657 = scalar_lea.vmem %s5, 4
    %v2658 = vld [vmem:[%s2657] sm:$0x1]
    %v2660 = vperm.slane %v2658, 0
    %v2678 = vunpack.c.l.b16 %v2641
    %v2679 = vunpack.c.l.b16 %v2642
    %v2680 = vunpack.c.l.b16 %v2643
    %v2681 = vunpack.c.l.b16 %v2644
    %v2682 = vunpack.c.l.b16 %v2645
    %v2683 = vunpack.c.l.b16 %v2646
    %v2684 = vunpack.c.l.b16 %v2647
    %v2685 = vunpack.c.l.b16 %v2648
    %v2686 = vunpack.c.l.b16 %v2649
    %v2687 = vunpack.c.l.b16 %v2650
    %v2688 = vunpack.c.l.b16 %v2651
    %v2689 = vunpack.c.l.b16 %v2652
    %v2690 = vunpack.c.l.b16 %v2653
    %v2691 = vunpack.c.l.b16 %v2654
    %v2692 = vunpack.c.l.b16 %v2655
    %v2693 = vunpack.c.l.b16 %v2656
    %v2694 = vpack.c.b16 %v2679, %v2678
    %v2695 = vpack.c.b16 %v2681, %v2680
    %v2696 = vpack.c.b16 %v2683, %v2682
    %v2697 = vpack.c.b16 %v2685, %v2684
    %v2698 = vpack.c.b16 %v2687, %v2686
    %v2699 = vpack.c.b16 %v2689, %v2688
    %v2700 = vpack.c.b16 %v2691, %v2690
    %v2701 = vpack.c.b16 %v2693, %v2692
    %2710 = vmatpush.bf16.msra.mxu0 %v2701
    %2711 = vmatpush.bf16.msra.mxu0 %v2700
    %2712 = vmatpush.bf16.msra.mxu0 %v2699
    %2713 = vmatpush.bf16.msra.mxu0 %v2698
    %2714 = vmatpush.bf16.msra.mxu0 %v2697
    %2715 = vmatpush.bf16.msra.mxu0 %v2696
    %2716 = vmatpush.bf16.msra.mxu0 %v2695
    %2717 = vmatpush.bf16.msra.mxu0 %v2694
    %2718 = vmatmul.bf16.gmra.mxu0 %v2632
    %v2719 = vpop.f32.mrf.mxu0
    %v2720 = vadd.f32 %v2660, %v2719
    %v2721 = vpop.f32.mrf.mxu0
    %v2722 = vadd.f32 %v2660, %v2721
    %2723 = vmatmul.bf16.gmra.mxu0 %v2633
    %v2724 = vpop.f32.mrf.mxu0
    %v2725 = vadd.f32 %v2660, %v2724
    %v2726 = vpop.f32.mrf.mxu0
    %v2727 = vadd.f32 %v2660, %v2726
    %2728 = vmatmul.bf16.gmra.mxu0 %v2634
    %v2729 = vpop.f32.mrf.mxu0
    %v2730 = vadd.f32 %v2660, %v2729
    %v2731 = vpop.f32.mrf.mxu0
    %v2732 = vadd.f32 %v2660, %v2731
    %2733 = vmatmul.bf16.gmra.mxu0 %v2635
    %v2734 = vpop.f32.mrf.mxu0
    %v2735 = vadd.f32 %v2660, %v2734
    %v2736 = vpop.f32.mrf.mxu0
    %v2737 = vadd.f32 %v2660, %v2736
    %2738 = vmatmul.bf16.gmra.mxu0 %v2636
    %v2739 = vpop.f32.mrf.mxu0
    %v2740 = vadd.f32 %v2660, %v2739
    %v2741 = vpop.f32.mrf.mxu0
    %v2742 = vadd.f32 %v2660, %v2741
    %2743 = vmatmul.bf16.gmra.mxu0 %v2637
    %v2744 = vpop.f32.mrf.mxu0
    %v2745 = vadd.f32 %v2660, %v2744
    %v2746 = vpop.f32.mrf.mxu0
    %v2747 = vadd.f32 %v2660, %v2746
    %2748 = vmatmul.bf16.gmra.mxu0 %v2638
    %v2749 = vpop.f32.mrf.mxu0
    %v2750 = vadd.f32 %v2660, %v2749
    %v2751 = vpop.f32.mrf.mxu0
    %v2752 = vadd.f32 %v2660, %v2751
    %2753 = vmatmul.bf16.gmra.mxu0 %v2639
    %v2754 = vpop.f32.mrf.mxu0
    %v2755 = vadd.f32 %v2660, %v2754
    %v2756 = vpop.f32.mrf.mxu0
    %v2757 = vadd.f32 %v2660, %v2756
    %2758 = vdwg.mxu0
    %v2759 = vpack.c.bf16 %v2617, %v2616
    %v2760 = vpack.c.bf16 %v2619, %v2618
    %v2761 = vpack.c.bf16 %v2621, %v2620
    %v2762 = vpack.c.bf16 %v2623, %v2622
    %v2763 = vpack.c.bf16 %v2625, %v2624
    %v2764 = vpack.c.bf16 %v2627, %v2626
    %v2765 = vpack.c.bf16 %v2629, %v2628
    %v2766 = vpack.c.bf16 %v2631, %v2630
    %s2767 = scalar_lea.vmem [#allocation7], 448
    %v2768 = vld [vmem:[%s2767] sm:$0xf]
    %v2769 = vld [vmem:[%s2767 + $0x4] sm:$0xf]
    %v2770 = vld [vmem:[%s2767 + $0x8] sm:$0xf]
    %v2771 = vld [vmem:[%s2767 + $0xc] sm:$0xf]
    %v2772 = vld [vmem:[%s2767 + $0x10] sm:$0xf]
    %v2773 = vld [vmem:[%s2767 + $0x14] sm:$0xf]
    %v2774 = vld [vmem:[%s2767 + $0x18] sm:$0xf]
    %v2775 = vld [vmem:[%s2767 + $0x1c] sm:$0xf]
    %v2776 = vld [vmem:[%s2767 + $0x20] sm:$0xf]
    %v2777 = vld [vmem:[%s2767 + $0x24] sm:$0xf]
    %v2778 = vld [vmem:[%s2767 + $0x28] sm:$0xf]
    %v2779 = vld [vmem:[%s2767 + $0x2c] sm:$0xf]
    %v2780 = vld [vmem:[%s2767 + $0x30] sm:$0xf]
    %v2781 = vld [vmem:[%s2767 + $0x34] sm:$0xf]
    %v2782 = vld [vmem:[%s2767 + $0x38] sm:$0xf]
    %v2783 = vld [vmem:[%s2767 + $0x3c] sm:$0xf]
    %v2800 = vunpack.c.l.b16 %v2768
    %v2801 = vunpack.c.l.b16 %v2769
    %v2802 = vunpack.c.l.b16 %v2770
    %v2803 = vunpack.c.l.b16 %v2771
    %v2804 = vunpack.c.l.b16 %v2772
    %v2805 = vunpack.c.l.b16 %v2773
    %v2806 = vunpack.c.l.b16 %v2774
    %v2807 = vunpack.c.l.b16 %v2775
    %v2808 = vunpack.c.l.b16 %v2776
    %v2809 = vunpack.c.l.b16 %v2777
    %v2810 = vunpack.c.l.b16 %v2778
    %v2811 = vunpack.c.l.b16 %v2779
    %v2812 = vunpack.c.l.b16 %v2780
    %v2813 = vunpack.c.l.b16 %v2781
    %v2814 = vunpack.c.l.b16 %v2782
    %v2815 = vunpack.c.l.b16 %v2783
    %v2816 = vpack.c.b16 %v2801, %v2800
    %v2817 = vpack.c.b16 %v2803, %v2802
    %v2818 = vpack.c.b16 %v2805, %v2804
    %v2819 = vpack.c.b16 %v2807, %v2806
    %v2820 = vpack.c.b16 %v2809, %v2808
    %v2821 = vpack.c.b16 %v2811, %v2810
    %v2822 = vpack.c.b16 %v2813, %v2812
    %v2823 = vpack.c.b16 %v2815, %v2814
    %2832 = vmatpush.bf16.msra.mxu0 %v2823
    %2833 = vmatpush.bf16.msra.mxu0 %v2822
    %2834 = vmatpush.bf16.msra.mxu0 %v2821
    %2835 = vmatpush.bf16.msra.mxu0 %v2820
    %2836 = vmatpush.bf16.msra.mxu0 %v2819
    %2837 = vmatpush.bf16.msra.mxu0 %v2818
    %2838 = vmatpush.bf16.msra.mxu0 %v2817
    %2839 = vmatpush.bf16.msra.mxu0 %v2816
    %2840 = vmatmul.bf16.gmra.mxu0 %v2759
    %v2841 = vpop.f32.mrf.mxu0
    %v2842 = vadd.f32 0.0, %v2841
    %v2843 = vpop.f32.mrf.mxu0
    %v2844 = vadd.f32 0.0, %v2843
    %2845 = vmatmul.bf16.gmra.mxu0 %v2760
    %v2846 = vpop.f32.mrf.mxu0
    %v2847 = vadd.f32 0.0, %v2846
    %v2848 = vpop.f32.mrf.mxu0
    %v2849 = vadd.f32 0.0, %v2848
    %2850 = vmatmul.bf16.gmra.mxu0 %v2761
    %v2851 = vpop.f32.mrf.mxu0
    %v2852 = vadd.f32 0.0, %v2851
    %v2853 = vpop.f32.mrf.mxu0
    %v2854 = vadd.f32 0.0, %v2853
    %2855 = vmatmul.bf16.gmra.mxu0 %v2762
    %v2856 = vpop.f32.mrf.mxu0
    %v2857 = vadd.f32 0.0, %v2856
    %v2858 = vpop.f32.mrf.mxu0
    %v2859 = vadd.f32 0.0, %v2858
    %2860 = vmatmul.bf16.gmra.mxu0 %v2763
    %v2861 = vpop.f32.mrf.mxu0
    %v2862 = vadd.f32 0.0, %v2861
    %v2863 = vpop.f32.mrf.mxu0
    %v2864 = vadd.f32 0.0, %v2863
    %2865 = vmatmul.bf16.gmra.mxu0 %v2764
    %v2866 = vpop.f32.mrf.mxu0
    %v2867 = vadd.f32 0.0, %v2866
    %v2868 = vpop.f32.mrf.mxu0
    %v2869 = vadd.f32 0.0, %v2868
    %2870 = vmatmul.bf16.gmra.mxu0 %v2765
    %v2871 = vpop.f32.mrf.mxu0
    %v2872 = vadd.f32 0.0, %v2871
    %v2873 = vpop.f32.mrf.mxu0
    %v2874 = vadd.f32 0.0, %v2873
    %2875 = vmatmul.bf16.gmra.mxu0 %v2766
    %v2876 = vpop.f32.mrf.mxu0
    %v2877 = vadd.f32 0.0, %v2876
    %v2878 = vpop.f32.mrf.mxu0
    %v2879 = vadd.f32 0.0, %v2878
    %2880 = vdwg.mxu0
    %v2881 = vpack.c.bf16 %v2844, %v2842
    %v2882 = vpack.c.bf16 %v2849, %v2847
    %v2883 = vpack.c.bf16 %v2854, %v2852
    %v2884 = vpack.c.bf16 %v2859, %v2857
    %v2885 = vpack.c.bf16 %v2864, %v2862
    %v2886 = vpack.c.bf16 %v2869, %v2867
    %v2887 = vpack.c.bf16 %v2874, %v2872
    %v2888 = vpack.c.bf16 %v2879, %v2877
    %2889 = vmatpush.bf16.msra.mxu0 %v2888
    %2890 = vmatpush.bf16.msra.mxu0 %v2887
    %2891 = vmatpush.bf16.msra.mxu0 %v2886
    %2892 = vmatpush.bf16.msra.mxu0 %v2885
    %2893 = vmatpush.bf16.msra.mxu0 %v2884
    %2894 = vmatpush.bf16.msra.mxu0 %v2883
    %2895 = vmatpush.bf16.msra.mxu0 %v2882
    %2896 = vmatpush.bf16.msra.mxu0 %v2881
    %2897 = vmatmul.bf16.gmra.mxu0 %v684
    %v2898 = vpop.f32.mrf.mxu0
    %v2899 = vadd.f32 0.0, %v2898
    %v2900 = vpop.f32.mrf.mxu0
    %v2901 = vadd.f32 0.0, %v2900
    %2902 = vmatmul.bf16.gmra.mxu0 %v685
    %v2903 = vpop.f32.mrf.mxu0
    %v2904 = vadd.f32 0.0, %v2903
    %v2905 = vpop.f32.mrf.mxu0
    %v2906 = vadd.f32 0.0, %v2905
    %2907 = vmatmul.bf16.gmra.mxu0 %v686
    %v2908 = vpop.f32.mrf.mxu0
    %v2909 = vadd.f32 0.0, %v2908
    %v2910 = vpop.f32.mrf.mxu0
    %v2911 = vadd.f32 0.0, %v2910
    %2912 = vmatmul.bf16.gmra.mxu0 %v687
    %v2913 = vpop.f32.mrf.mxu0
    %v2914 = vadd.f32 0.0, %v2913
    %v2915 = vpop.f32.mrf.mxu0
    %v2916 = vadd.f32 0.0, %v2915
    %2917 = vmatmul.bf16.gmra.mxu0 %v688
    %v2918 = vpop.f32.mrf.mxu0
    %v2919 = vadd.f32 0.0, %v2918
    %v2920 = vpop.f32.mrf.mxu0
    %v2921 = vadd.f32 0.0, %v2920
    %2922 = vmatmul.bf16.gmra.mxu0 %v689
    %v2923 = vpop.f32.mrf.mxu0
    %v2924 = vadd.f32 0.0, %v2923
    %v2925 = vpop.f32.mrf.mxu0
    %v2926 = vadd.f32 0.0, %v2925
    %2927 = vmatmul.bf16.gmra.mxu0 %v690
    %v2928 = vpop.f32.mrf.mxu0
    %v2929 = vadd.f32 0.0, %v2928
    %v2930 = vpop.f32.mrf.mxu0
    %v2931 = vadd.f32 0.0, %v2930
    %2932 = vmatmul.bf16.gmra.mxu0 %v691
    %v2933 = vpop.f32.mrf.mxu0
    %v2934 = vadd.f32 0.0, %v2933
    %v2935 = vpop.f32.mrf.mxu0
    %v2936 = vadd.f32 0.0, %v2935
    %2937 = vdwg.mxu0
    %v2938 = vmul.f32 %v2899, %v752
    %v2939 = vmul.f32 %v2901, %v757
    %v2940 = vmul.f32 %v2904, %v762
    %v2941 = vmul.f32 %v2906, %v767
    %v2942 = vmul.f32 %v2909, %v772
    %v2943 = vmul.f32 %v2911, %v777
    %v2944 = vmul.f32 %v2914, %v782
    %v2945 = vmul.f32 %v2916, %v787
    %v2946 = vmul.f32 %v2919, %v792
    %v2947 = vmul.f32 %v2921, %v797
    %v2948 = vmul.f32 %v2924, %v802
    %v2949 = vmul.f32 %v2926, %v807
    %v2950 = vmul.f32 %v2929, %v812
    %v2951 = vmul.f32 %v2931, %v817
    %v2952 = vmul.f32 %v2934, %v822
    %v2953 = vmul.f32 %v2936, %v827
    %v2954 = vadd.f32 %v2720, %v2938
    %v2955 = vadd.f32 %v2722, %v2939
    %v2956 = vadd.f32 %v2725, %v2940
    %v2957 = vadd.f32 %v2727, %v2941
    %v2958 = vadd.f32 %v2730, %v2942
    %v2959 = vadd.f32 %v2732, %v2943
    %v2960 = vadd.f32 %v2735, %v2944
    %v2961 = vadd.f32 %v2737, %v2945
    %v2962 = vadd.f32 %v2740, %v2946
    %v2963 = vadd.f32 %v2742, %v2947
    %v2964 = vadd.f32 %v2745, %v2948
    %v2965 = vadd.f32 %v2747, %v2949
    %v2966 = vadd.f32 %v2750, %v2950
    %v2967 = vadd.f32 %v2752, %v2951
    %v2968 = vadd.f32 %v2755, %v2952
    %v2969 = vadd.f32 %v2757, %v2953
    %s2970 = scalar_lea.vmem [#allocation7], 512
    %v2971 = vld [vmem:[%s2970] sm:$0xf]
    %v2972 = vld [vmem:[%s2970 + $0x4] sm:$0xf]
    %v2973 = vld [vmem:[%s2970 + $0x8] sm:$0xf]
    %v2974 = vld [vmem:[%s2970 + $0xc] sm:$0xf]
    %v2975 = vld [vmem:[%s2970 + $0x10] sm:$0xf]
    %v2976 = vld [vmem:[%s2970 + $0x14] sm:$0xf]
    %v2977 = vld [vmem:[%s2970 + $0x18] sm:$0xf]
    %v2978 = vld [vmem:[%s2970 + $0x1c] sm:$0xf]
    %v2979 = vld [vmem:[%s2970 + $0x20] sm:$0xf]
    %v2980 = vld [vmem:[%s2970 + $0x24] sm:$0xf]
    %v2981 = vld [vmem:[%s2970 + $0x28] sm:$0xf]
    %v2982 = vld [vmem:[%s2970 + $0x2c] sm:$0xf]
    %v2983 = vld [vmem:[%s2970 + $0x30] sm:$0xf]
    %v2984 = vld [vmem:[%s2970 + $0x34] sm:$0xf]
    %v2985 = vld [vmem:[%s2970 + $0x38] sm:$0xf]
    %v2986 = vld [vmem:[%s2970 + $0x3c] sm:$0xf]
    %v3003 = vunpack.c.l.b16 %v2971
    %v3004 = vunpack.c.l.b16 %v2972
    %v3005 = vunpack.c.l.b16 %v2973
    %v3006 = vunpack.c.l.b16 %v2974
    %v3007 = vunpack.c.l.b16 %v2975
    %v3008 = vunpack.c.l.b16 %v2976
    %v3009 = vunpack.c.l.b16 %v2977
    %v3010 = vunpack.c.l.b16 %v2978
    %v3011 = vunpack.c.l.b16 %v2979
    %v3012 = vunpack.c.l.b16 %v2980
    %v3013 = vunpack.c.l.b16 %v2981
    %v3014 = vunpack.c.l.b16 %v2982
    %v3015 = vunpack.c.l.b16 %v2983
    %v3016 = vunpack.c.l.b16 %v2984
    %v3017 = vunpack.c.l.b16 %v2985
    %v3018 = vunpack.c.l.b16 %v2986
    %v3019 = vpack.c.b16 %v3004, %v3003
    %v3020 = vpack.c.b16 %v3006, %v3005
    %v3021 = vpack.c.b16 %v3008, %v3007
    %v3022 = vpack.c.b16 %v3010, %v3009
    %v3023 = vpack.c.b16 %v3012, %v3011
    %v3024 = vpack.c.b16 %v3014, %v3013
    %v3025 = vpack.c.b16 %v3016, %v3015
    %v3026 = vpack.c.b16 %v3018, %v3017
    %3035 = vmatpush.bf16.msra.mxu0 %v3026
    %3036 = vmatpush.bf16.msra.mxu0 %v3025
    %3037 = vmatpush.bf16.msra.mxu0 %v3024
    %3038 = vmatpush.bf16.msra.mxu0 %v3023
    %3039 = vmatpush.bf16.msra.mxu0 %v3022
    %3040 = vmatpush.bf16.msra.mxu0 %v3021
    %3041 = vmatpush.bf16.msra.mxu0 %v3020
    %3042 = vmatpush.bf16.msra.mxu0 %v3019
    %3043 = vmatmul.bf16.gmra.mxu0 %v2632
    %v3044 = vpop.f32.mrf.mxu0
    %v3045 = vadd.f32 0.0, %v3044
    %v3046 = vpop.f32.mrf.mxu0
    %v3047 = vadd.f32 0.0, %v3046
    %3048 = vmatmul.bf16.gmra.mxu0 %v2633
    %v3049 = vpop.f32.mrf.mxu0
    %v3050 = vadd.f32 0.0, %v3049
    %v3051 = vpop.f32.mrf.mxu0
    %v3052 = vadd.f32 0.0, %v3051
    %3053 = vmatmul.bf16.gmra.mxu0 %v2634
    %v3054 = vpop.f32.mrf.mxu0
    %v3055 = vadd.f32 0.0, %v3054
    %v3056 = vpop.f32.mrf.mxu0
    %v3057 = vadd.f32 0.0, %v3056
    %3058 = vmatmul.bf16.gmra.mxu0 %v2635
    %v3059 = vpop.f32.mrf.mxu0
    %v3060 = vadd.f32 0.0, %v3059
    %v3061 = vpop.f32.mrf.mxu0
    %v3062 = vadd.f32 0.0, %v3061
    %3063 = vmatmul.bf16.gmra.mxu0 %v2636
    %v3064 = vpop.f32.mrf.mxu0
    %v3065 = vadd.f32 0.0, %v3064
    %v3066 = vpop.f32.mrf.mxu0
    %v3067 = vadd.f32 0.0, %v3066
    %3068 = vmatmul.bf16.gmra.mxu0 %v2637
    %v3069 = vpop.f32.mrf.mxu0
    %v3070 = vadd.f32 0.0, %v3069
    %v3071 = vpop.f32.mrf.mxu0
    %v3072 = vadd.f32 0.0, %v3071
    %3073 = vmatmul.bf16.gmra.mxu0 %v2638
    %v3074 = vpop.f32.mrf.mxu0
    %v3075 = vadd.f32 0.0, %v3074
    %v3076 = vpop.f32.mrf.mxu0
    %v3077 = vadd.f32 0.0, %v3076
    %3078 = vmatmul.bf16.gmra.mxu0 %v2639
    %v3079 = vpop.f32.mrf.mxu0
    %v3080 = vadd.f32 0.0, %v3079
    %v3081 = vpop.f32.mrf.mxu0
    %v3082 = vadd.f32 0.0, %v3081
    %3083 = vdwg.mxu0
    %v3084 = vpack.c.bf16 %v3047, %v3045
    %v3085 = vpack.c.bf16 %v3052, %v3050
    %v3086 = vpack.c.bf16 %v3057, %v3055
    %v3087 = vpack.c.bf16 %v3062, %v3060
    %v3088 = vpack.c.bf16 %v3067, %v3065
    %v3089 = vpack.c.bf16 %v3072, %v3070
    %v3090 = vpack.c.bf16 %v3077, %v3075
    %v3091 = vpack.c.bf16 %v3082, %v3080
    %3092 = vmatpush.bf16.msra.mxu0 %v3091
    %3093 = vmatpush.bf16.msra.mxu0 %v3090
    %3094 = vmatpush.bf16.msra.mxu0 %v3089
    %3095 = vmatpush.bf16.msra.mxu0 %v3088
    %3096 = vmatpush.bf16.msra.mxu0 %v3087
    %3097 = vmatpush.bf16.msra.mxu0 %v3086
    %3098 = vmatpush.bf16.msra.mxu0 %v3085
    %3099 = vmatpush.bf16.msra.mxu0 %v3084
    %3100 = vmatmul.bf16.gmra.mxu0 %v1015
    %v3101 = vpop.f32.mrf.mxu0
    %v3102 = vadd.f32 0.0, %v3101
    %v3103 = vpop.f32.mrf.mxu0
    %v3104 = vadd.f32 0.0, %v3103
    %3105 = vmatmul.bf16.gmra.mxu0 %v1016
    %v3106 = vpop.f32.mrf.mxu0
    %v3107 = vadd.f32 0.0, %v3106
    %v3108 = vpop.f32.mrf.mxu0
    %v3109 = vadd.f32 0.0, %v3108
    %3110 = vmatmul.bf16.gmra.mxu0 %v1017
    %v3111 = vpop.f32.mrf.mxu0
    %v3112 = vadd.f32 0.0, %v3111
    %v3113 = vpop.f32.mrf.mxu0
    %v3114 = vadd.f32 0.0, %v3113
    %3115 = vmatmul.bf16.gmra.mxu0 %v1018
    %v3116 = vpop.f32.mrf.mxu0
    %v3117 = vadd.f32 0.0, %v3116
    %v3118 = vpop.f32.mrf.mxu0
    %v3119 = vadd.f32 0.0, %v3118
    %3120 = vmatmul.bf16.gmra.mxu0 %v1019
    %v3121 = vpop.f32.mrf.mxu0
    %v3122 = vadd.f32 0.0, %v3121
    %v3123 = vpop.f32.mrf.mxu0
    %v3124 = vadd.f32 0.0, %v3123
    %3125 = vmatmul.bf16.gmra.mxu0 %v1020
    %v3126 = vpop.f32.mrf.mxu0
    %v3127 = vadd.f32 0.0, %v3126
    %v3128 = vpop.f32.mrf.mxu0
    %v3129 = vadd.f32 0.0, %v3128
    %3130 = vmatmul.bf16.gmra.mxu0 %v1021
    %v3131 = vpop.f32.mrf.mxu0
    %v3132 = vadd.f32 0.0, %v3131
    %v3133 = vpop.f32.mrf.mxu0
    %v3134 = vadd.f32 0.0, %v3133
    %3135 = vmatmul.bf16.gmra.mxu0 %v1022
    %v3136 = vpop.f32.mrf.mxu0
    %v3137 = vadd.f32 0.0, %v3136
    %v3138 = vpop.f32.mrf.mxu0
    %v3139 = vadd.f32 0.0, %v3138
    %3140 = vdwg.mxu0
    %v3141 = vmul.f32 %v3102, %v1083
    %v3142 = vmul.f32 %v3104, %v1088
    %v3143 = vmul.f32 %v3107, %v1093
    %v3144 = vmul.f32 %v3109, %v1098
    %v3145 = vmul.f32 %v3112, %v1103
    %v3146 = vmul.f32 %v3114, %v1108
    %v3147 = vmul.f32 %v3117, %v1113
    %v3148 = vmul.f32 %v3119, %v1118
    %v3149 = vmul.f32 %v3122, %v1123
    %v3150 = vmul.f32 %v3124, %v1128
    %v3151 = vmul.f32 %v3127, %v1133
    %v3152 = vmul.f32 %v3129, %v1138
    %v3153 = vmul.f32 %v3132, %v1143
    %v3154 = vmul.f32 %v3134, %v1148
    %v3155 = vmul.f32 %v3137, %v1153
    %v3156 = vmul.f32 %v3139, %v1158
    %v3157 = vadd.f32 %v2954, %v3141
    %v3158 = vadd.f32 %v2955, %v3142
    %v3159 = vadd.f32 %v2956, %v3143
    %v3160 = vadd.f32 %v2957, %v3144
    %v3161 = vadd.f32 %v2958, %v3145
    %v3162 = vadd.f32 %v2959, %v3146
    %v3163 = vadd.f32 %v2960, %v3147
    %v3164 = vadd.f32 %v2961, %v3148
    %v3165 = vadd.f32 %v2962, %v3149
    %v3166 = vadd.f32 %v2963, %v3150
    %v3167 = vadd.f32 %v2964, %v3151
    %v3168 = vadd.f32 %v2965, %v3152
    %v3169 = vadd.f32 %v2966, %v3153
    %v3170 = vadd.f32 %v2967, %v3154
    %v3171 = vadd.f32 %v2968, %v3155
    %v3172 = vadd.f32 %v2969, %v3156
    %v3173 = vmul.f32 %v3157, %v220
    %v3174 = vmul.f32 %v3158, %v221
    %v3175 = vmul.f32 %v3159, %v222
    %v3176 = vmul.f32 %v3160, %v223
    %v3177 = vmul.f32 %v3161, %v224
    %v3178 = vmul.f32 %v3162, %v225
    %v3179 = vmul.f32 %v3163, %v226
    %v3180 = vmul.f32 %v3164, %v227
    %v3181 = vmul.f32 %v3165, %v228
    %v3182 = vmul.f32 %v3166, %v229
    %v3183 = vmul.f32 %v3167, %v230
    %v3184 = vmul.f32 %v3168, %v231
    %v3185 = vmul.f32 %v3169, %v232
    %v3186 = vmul.f32 %v3170, %v233
    %v3187 = vmul.f32 %v3171, %v234
    %v3188 = vmul.f32 %v3172, %v235
    %s3189 = scalar_lea.vmem %s4, 320
    %v3190 = vld [vmem:[%s3189] sm:$0xf]
    %v3191 = vld [vmem:[%s3189 + $0x4] sm:$0xf]
    %v3192 = vld [vmem:[%s3189 + $0x8] sm:$0xf]
    %v3193 = vld [vmem:[%s3189 + $0xc] sm:$0xf]
    %v3194 = vld [vmem:[%s3189 + $0x10] sm:$0xf]
    %v3195 = vld [vmem:[%s3189 + $0x14] sm:$0xf]
    %v3196 = vld [vmem:[%s3189 + $0x18] sm:$0xf]
    %v3197 = vld [vmem:[%s3189 + $0x1c] sm:$0xf]
    %v3198 = vld [vmem:[%s3189 + $0x20] sm:$0xf]
    %v3199 = vld [vmem:[%s3189 + $0x24] sm:$0xf]
    %v3200 = vld [vmem:[%s3189 + $0x28] sm:$0xf]
    %v3201 = vld [vmem:[%s3189 + $0x2c] sm:$0xf]
    %v3202 = vld [vmem:[%s3189 + $0x30] sm:$0xf]
    %v3203 = vld [vmem:[%s3189 + $0x34] sm:$0xf]
    %v3204 = vld [vmem:[%s3189 + $0x38] sm:$0xf]
    %v3205 = vld [vmem:[%s3189 + $0x3c] sm:$0xf]
    %s3206 = scalar_lea.vmem %s5, 5
    %v3207 = vld [vmem:[%s3206] sm:$0x1]
    %v3209 = vperm.slane %v3207, 0
    %v3227 = vunpack.c.l.b16 %v3190
    %v3228 = vunpack.c.l.b16 %v3191
    %v3229 = vunpack.c.l.b16 %v3192
    %v3230 = vunpack.c.l.b16 %v3193
    %v3231 = vunpack.c.l.b16 %v3194
    %v3232 = vunpack.c.l.b16 %v3195
    %v3233 = vunpack.c.l.b16 %v3196
    %v3234 = vunpack.c.l.b16 %v3197
    %v3235 = vunpack.c.l.b16 %v3198
    %v3236 = vunpack.c.l.b16 %v3199
    %v3237 = vunpack.c.l.b16 %v3200
    %v3238 = vunpack.c.l.b16 %v3201
    %v3239 = vunpack.c.l.b16 %v3202
    %v3240 = vunpack.c.l.b16 %v3203
    %v3241 = vunpack.c.l.b16 %v3204
    %v3242 = vunpack.c.l.b16 %v3205
    %v3243 = vpack.c.b16 %v3228, %v3227
    %v3244 = vpack.c.b16 %v3230, %v3229
    %v3245 = vpack.c.b16 %v3232, %v3231
    %v3246 = vpack.c.b16 %v3234, %v3233
    %v3247 = vpack.c.b16 %v3236, %v3235
    %v3248 = vpack.c.b16 %v3238, %v3237
    %v3249 = vpack.c.b16 %v3240, %v3239
    %v3250 = vpack.c.b16 %v3242, %v3241
    %3259 = vmatpush.bf16.msra.mxu0 %v3250
    %3260 = vmatpush.bf16.msra.mxu0 %v3249
    %3261 = vmatpush.bf16.msra.mxu0 %v3248
    %3262 = vmatpush.bf16.msra.mxu0 %v3247
    %3263 = vmatpush.bf16.msra.mxu0 %v3246
    %3264 = vmatpush.bf16.msra.mxu0 %v3245
    %3265 = vmatpush.bf16.msra.mxu0 %v3244
    %3266 = vmatpush.bf16.msra.mxu0 %v3243
    %3267 = vmatmul.bf16.gmra.mxu0 %v2759
    %v3268 = vpop.f32.mrf.mxu0
    %v3269 = vadd.f32 %v3209, %v3268
    %v3270 = vpop.f32.mrf.mxu0
    %v3271 = vadd.f32 %v3209, %v3270
    %3272 = vmatmul.bf16.gmra.mxu0 %v2760
    %v3273 = vpop.f32.mrf.mxu0
    %v3274 = vadd.f32 %v3209, %v3273
    %v3275 = vpop.f32.mrf.mxu0
    %v3276 = vadd.f32 %v3209, %v3275
    %3277 = vmatmul.bf16.gmra.mxu0 %v2761
    %v3278 = vpop.f32.mrf.mxu0
    %v3279 = vadd.f32 %v3209, %v3278
    %v3280 = vpop.f32.mrf.mxu0
    %v3281 = vadd.f32 %v3209, %v3280
    %3282 = vmatmul.bf16.gmra.mxu0 %v2762
    %v3283 = vpop.f32.mrf.mxu0
    %v3284 = vadd.f32 %v3209, %v3283
    %v3285 = vpop.f32.mrf.mxu0
    %v3286 = vadd.f32 %v3209, %v3285
    %3287 = vmatmul.bf16.gmra.mxu0 %v2763
    %v3288 = vpop.f32.mrf.mxu0
    %v3289 = vadd.f32 %v3209, %v3288
    %v3290 = vpop.f32.mrf.mxu0
    %v3291 = vadd.f32 %v3209, %v3290
    %3292 = vmatmul.bf16.gmra.mxu0 %v2764
    %v3293 = vpop.f32.mrf.mxu0
    %v3294 = vadd.f32 %v3209, %v3293
    %v3295 = vpop.f32.mrf.mxu0
    %v3296 = vadd.f32 %v3209, %v3295
    %3297 = vmatmul.bf16.gmra.mxu0 %v2765
    %v3298 = vpop.f32.mrf.mxu0
    %v3299 = vadd.f32 %v3209, %v3298
    %v3300 = vpop.f32.mrf.mxu0
    %v3301 = vadd.f32 %v3209, %v3300
    %3302 = vmatmul.bf16.gmra.mxu0 %v2766
    %v3303 = vpop.f32.mrf.mxu0
    %v3304 = vadd.f32 %v3209, %v3303
    %v3305 = vpop.f32.mrf.mxu0
    %v3306 = vadd.f32 %v3209, %v3305
    %3307 = vdwg.mxu0
    %s3308 = scalar_lea.vmem [#allocation7], 384
    %v3309 = vld [vmem:[%s3308] sm:$0xf]
    %v3310 = vld [vmem:[%s3308 + $0x4] sm:$0xf]
    %v3311 = vld [vmem:[%s3308 + $0x8] sm:$0xf]
    %v3312 = vld [vmem:[%s3308 + $0xc] sm:$0xf]
    %v3313 = vld [vmem:[%s3308 + $0x10] sm:$0xf]
    %v3314 = vld [vmem:[%s3308 + $0x14] sm:$0xf]
    %v3315 = vld [vmem:[%s3308 + $0x18] sm:$0xf]
    %v3316 = vld [vmem:[%s3308 + $0x1c] sm:$0xf]
    %v3317 = vld [vmem:[%s3308 + $0x20] sm:$0xf]
    %v3318 = vld [vmem:[%s3308 + $0x24] sm:$0xf]
    %v3319 = vld [vmem:[%s3308 + $0x28] sm:$0xf]
    %v3320 = vld [vmem:[%s3308 + $0x2c] sm:$0xf]
    %v3321 = vld [vmem:[%s3308 + $0x30] sm:$0xf]
    %v3322 = vld [vmem:[%s3308 + $0x34] sm:$0xf]
    %v3323 = vld [vmem:[%s3308 + $0x38] sm:$0xf]
    %v3324 = vld [vmem:[%s3308 + $0x3c] sm:$0xf]
    %v3341 = vunpack.c.l.b16 %v3309
    %v3342 = vunpack.c.l.b16 %v3310
    %v3343 = vunpack.c.l.b16 %v3311
    %v3344 = vunpack.c.l.b16 %v3312
    %v3345 = vunpack.c.l.b16 %v3313
    %v3346 = vunpack.c.l.b16 %v3314
    %v3347 = vunpack.c.l.b16 %v3315
    %v3348 = vunpack.c.l.b16 %v3316
    %v3349 = vunpack.c.l.b16 %v3317
    %v3350 = vunpack.c.l.b16 %v3318
    %v3351 = vunpack.c.l.b16 %v3319
    %v3352 = vunpack.c.l.b16 %v3320
    %v3353 = vunpack.c.l.b16 %v3321
    %v3354 = vunpack.c.l.b16 %v3322
    %v3355 = vunpack.c.l.b16 %v3323
    %v3356 = vunpack.c.l.b16 %v3324
    %v3357 = vpack.c.b16 %v3342, %v3341
    %v3358 = vpack.c.b16 %v3344, %v3343
    %v3359 = vpack.c.b16 %v3346, %v3345
    %v3360 = vpack.c.b16 %v3348, %v3347
    %v3361 = vpack.c.b16 %v3350, %v3349
    %v3362 = vpack.c.b16 %v3352, %v3351
    %v3363 = vpack.c.b16 %v3354, %v3353
    %v3364 = vpack.c.b16 %v3356, %v3355
    %3373 = vmatpush.bf16.msra.mxu0 %v3364
    %3374 = vmatpush.bf16.msra.mxu0 %v3363
    %3375 = vmatpush.bf16.msra.mxu0 %v3362
    %3376 = vmatpush.bf16.msra.mxu0 %v3361
    %3377 = vmatpush.bf16.msra.mxu0 %v3360
    %3378 = vmatpush.bf16.msra.mxu0 %v3359
    %3379 = vmatpush.bf16.msra.mxu0 %v3358
    %3380 = vmatpush.bf16.msra.mxu0 %v3357
    %3381 = vmatmul.bf16.gmra.mxu0 %v2632
    %v3382 = vpop.f32.mrf.mxu0
    %v3383 = vadd.f32 0.0, %v3382
    %v3384 = vpop.f32.mrf.mxu0
    %v3385 = vadd.f32 0.0, %v3384
    %3386 = vmatmul.bf16.gmra.mxu0 %v2633
    %v3387 = vpop.f32.mrf.mxu0
    %v3388 = vadd.f32 0.0, %v3387
    %v3389 = vpop.f32.mrf.mxu0
    %v3390 = vadd.f32 0.0, %v3389
    %3391 = vmatmul.bf16.gmra.mxu0 %v2634
    %v3392 = vpop.f32.mrf.mxu0
    %v3393 = vadd.f32 0.0, %v3392
    %v3394 = vpop.f32.mrf.mxu0
    %v3395 = vadd.f32 0.0, %v3394
    %3396 = vmatmul.bf16.gmra.mxu0 %v2635
    %v3397 = vpop.f32.mrf.mxu0
    %v3398 = vadd.f32 0.0, %v3397
    %v3399 = vpop.f32.mrf.mxu0
    %v3400 = vadd.f32 0.0, %v3399
    %3401 = vmatmul.bf16.gmra.mxu0 %v2636
    %v3402 = vpop.f32.mrf.mxu0
    %v3403 = vadd.f32 0.0, %v3402
    %v3404 = vpop.f32.mrf.mxu0
    %v3405 = vadd.f32 0.0, %v3404
    %3406 = vmatmul.bf16.gmra.mxu0 %v2637
    %v3407 = vpop.f32.mrf.mxu0
    %v3408 = vadd.f32 0.0, %v3407
    %v3409 = vpop.f32.mrf.mxu0
    %v3410 = vadd.f32 0.0, %v3409
    %3411 = vmatmul.bf16.gmra.mxu0 %v2638
    %v3412 = vpop.f32.mrf.mxu0
    %v3413 = vadd.f32 0.0, %v3412
    %v3414 = vpop.f32.mrf.mxu0
    %v3415 = vadd.f32 0.0, %v3414
    %3416 = vmatmul.bf16.gmra.mxu0 %v2639
    %v3417 = vpop.f32.mrf.mxu0
    %v3418 = vadd.f32 0.0, %v3417
    %v3419 = vpop.f32.mrf.mxu0
    %v3420 = vadd.f32 0.0, %v3419
    %3421 = vdwg.mxu0
    %v3422 = vpack.c.bf16 %v3385, %v3383
    %v3423 = vpack.c.bf16 %v3390, %v3388
    %v3424 = vpack.c.bf16 %v3395, %v3393
    %v3425 = vpack.c.bf16 %v3400, %v3398
    %v3426 = vpack.c.bf16 %v3405, %v3403
    %v3427 = vpack.c.bf16 %v3410, %v3408
    %v3428 = vpack.c.bf16 %v3415, %v3413
    %v3429 = vpack.c.bf16 %v3420, %v3418
    %3430 = vmatpush.bf16.msra.mxu0 %v3429
    %3431 = vmatpush.bf16.msra.mxu0 %v3428
    %3432 = vmatpush.bf16.msra.mxu0 %v3427
    %3433 = vmatpush.bf16.msra.mxu0 %v3426
    %3434 = vmatpush.bf16.msra.mxu0 %v3425
    %3435 = vmatpush.bf16.msra.mxu0 %v3424
    %3436 = vmatpush.bf16.msra.mxu0 %v3423
    %3437 = vmatpush.bf16.msra.mxu0 %v3422
    %3438 = vmatmul.bf16.gmra.mxu0 %v1496
    %v3439 = vpop.f32.mrf.mxu0
    %v3440 = vadd.f32 0.0, %v3439
    %v3441 = vpop.f32.mrf.mxu0
    %v3442 = vadd.f32 0.0, %v3441
    %3443 = vmatmul.bf16.gmra.mxu0 %v1497
    %v3444 = vpop.f32.mrf.mxu0
    %v3445 = vadd.f32 0.0, %v3444
    %v3446 = vpop.f32.mrf.mxu0
    %v3447 = vadd.f32 0.0, %v3446
    %3448 = vmatmul.bf16.gmra.mxu0 %v1498
    %v3449 = vpop.f32.mrf.mxu0
    %v3450 = vadd.f32 0.0, %v3449
    %v3451 = vpop.f32.mrf.mxu0
    %v3452 = vadd.f32 0.0, %v3451
    %3453 = vmatmul.bf16.gmra.mxu0 %v1499
    %v3454 = vpop.f32.mrf.mxu0
    %v3455 = vadd.f32 0.0, %v3454
    %v3456 = vpop.f32.mrf.mxu0
    %v3457 = vadd.f32 0.0, %v3456
    %3458 = vmatmul.bf16.gmra.mxu0 %v1500
    %v3459 = vpop.f32.mrf.mxu0
    %v3460 = vadd.f32 0.0, %v3459
    %v3461 = vpop.f32.mrf.mxu0
    %v3462 = vadd.f32 0.0, %v3461
    %3463 = vmatmul.bf16.gmra.mxu0 %v1501
    %v3464 = vpop.f32.mrf.mxu0
    %v3465 = vadd.f32 0.0, %v3464
    %v3466 = vpop.f32.mrf.mxu0
    %v3467 = vadd.f32 0.0, %v3466
    %3468 = vmatmul.bf16.gmra.mxu0 %v1502
    %v3469 = vpop.f32.mrf.mxu0
    %v3470 = vadd.f32 0.0, %v3469
    %v3471 = vpop.f32.mrf.mxu0
    %v3472 = vadd.f32 0.0, %v3471
    %3473 = vmatmul.bf16.gmra.mxu0 %v1503
    %v3474 = vpop.f32.mrf.mxu0
    %v3475 = vadd.f32 0.0, %v3474
    %v3476 = vpop.f32.mrf.mxu0
    %v3477 = vadd.f32 0.0, %v3476
    %3478 = vdwg.mxu0
    %v3479 = vmul.f32 %v3440, %v1564
    %v3480 = vmul.f32 %v3442, %v1569
    %v3481 = vmul.f32 %v3445, %v1574
    %v3482 = vmul.f32 %v3447, %v1579
    %v3483 = vmul.f32 %v3450, %v1584
    %v3484 = vmul.f32 %v3452, %v1589
    %v3485 = vmul.f32 %v3455, %v1594
    %v3486 = vmul.f32 %v3457, %v1599
    %v3487 = vmul.f32 %v3460, %v1604
    %v3488 = vmul.f32 %v3462, %v1609
    %v3489 = vmul.f32 %v3465, %v1614
    %v3490 = vmul.f32 %v3467, %v1619
    %v3491 = vmul.f32 %v3470, %v1624
    %v3492 = vmul.f32 %v3472, %v1629
    %v3493 = vmul.f32 %v3475, %v1634
    %v3494 = vmul.f32 %v3477, %v1639
    %v3495 = vadd.f32 %v3269, %v3479
    %v3496 = vadd.f32 %v3271, %v3480
    %v3497 = vadd.f32 %v3274, %v3481
    %v3498 = vadd.f32 %v3276, %v3482
    %v3499 = vadd.f32 %v3279, %v3483
    %v3500 = vadd.f32 %v3281, %v3484
    %v3501 = vadd.f32 %v3284, %v3485
    %v3502 = vadd.f32 %v3286, %v3486
    %v3503 = vadd.f32 %v3289, %v3487
    %v3504 = vadd.f32 %v3291, %v3488
    %v3505 = vadd.f32 %v3294, %v3489
    %v3506 = vadd.f32 %v3296, %v3490
    %v3507 = vadd.f32 %v3299, %v3491
    %v3508 = vadd.f32 %v3301, %v3492
    %v3509 = vadd.f32 %v3304, %v3493
    %v3510 = vadd.f32 %v3306, %v3494
    %v3511 = vmul.f32 %v3495, %v268
    %v3512 = vmul.f32 %v3496, %v269
    %v3513 = vmul.f32 %v3497, %v270
    %v3514 = vmul.f32 %v3498, %v271
    %v3515 = vmul.f32 %v3499, %v272
    %v3516 = vmul.f32 %v3500, %v273
    %v3517 = vmul.f32 %v3501, %v274
    %v3518 = vmul.f32 %v3502, %v275
    %v3519 = vmul.f32 %v3503, %v276
    %v3520 = vmul.f32 %v3504, %v277
    %v3521 = vmul.f32 %v3505, %v278
    %v3522 = vmul.f32 %v3506, %v279
    %v3523 = vmul.f32 %v3507, %v280
    %v3524 = vmul.f32 %v3508, %v281
    %v3525 = vmul.f32 %v3509, %v282
    %v3526 = vmul.f32 %v3510, %v283
    %3527 = vst [vmem:[#allocation8] sm:$0xff] %v3173
    %3528 = vst [vmem:[#allocation8 + $0x8] sm:$0xff] %v3174
    %3529 = vst [vmem:[#allocation8 + $0x10] sm:$0xff] %v3175
    %3530 = vst [vmem:[#allocation8 + $0x18] sm:$0xff] %v3176
    %3531 = vst [vmem:[#allocation8 + $0x20] sm:$0xff] %v3177
    %3532 = vst [vmem:[#allocation8 + $0x28] sm:$0xff] %v3178
    %3533 = vst [vmem:[#allocation8 + $0x30] sm:$0xff] %v3179
    %3534 = vst [vmem:[#allocation8 + $0x38] sm:$0xff] %v3180
    %3535 = vst [vmem:[#allocation8 + $0x40] sm:$0xff] %v3181
    %3536 = vst [vmem:[#allocation8 + $0x48] sm:$0xff] %v3182
    %3537 = vst [vmem:[#allocation8 + $0x50] sm:$0xff] %v3183
    %3538 = vst [vmem:[#allocation8 + $0x58] sm:$0xff] %v3184
    %3539 = vst [vmem:[#allocation8 + $0x60] sm:$0xff] %v3185
    %3540 = vst [vmem:[#allocation8 + $0x68] sm:$0xff] %v3186
    %3541 = vst [vmem:[#allocation8 + $0x70] sm:$0xff] %v3187
    %3542 = vst [vmem:[#allocation8 + $0x78] sm:$0xff] %v3188
    %s3543 = scalar_lea.vmem [#allocation8], 128
    %3544 = vst [vmem:[%s3543] sm:$0xff] %v3511
    %3545 = vst [vmem:[%s3543 + $0x8] sm:$0xff] %v3512
    %3546 = vst [vmem:[%s3543 + $0x10] sm:$0xff] %v3513
    %3547 = vst [vmem:[%s3543 + $0x18] sm:$0xff] %v3514
    %3548 = vst [vmem:[%s3543 + $0x20] sm:$0xff] %v3515
    %3549 = vst [vmem:[%s3543 + $0x28] sm:$0xff] %v3516
    %3550 = vst [vmem:[%s3543 + $0x30] sm:$0xff] %v3517
    %3551 = vst [vmem:[%s3543 + $0x38] sm:$0xff] %v3518
    %3552 = vst [vmem:[%s3543 + $0x40] sm:$0xff] %v3519
    %3553 = vst [vmem:[%s3543 + $0x48] sm:$0xff] %v3520
    %3554 = vst [vmem:[%s3543 + $0x50] sm:$0xff] %v3521
    %3555 = vst [vmem:[%s3543 + $0x58] sm:$0xff] %v3522
    %3556 = vst [vmem:[%s3543 + $0x60] sm:$0xff] %v3523
    %3557 = vst [vmem:[%s3543 + $0x68] sm:$0xff] %v3524
    %3558 = vst [vmem:[%s3543 + $0x70] sm:$0xff] %v3525
    %3559 = vst [vmem:[%s3543 + $0x78] sm:$0xff] %v3526
    // Predicated region
    $region38: #{tpu_custom_call.1} parent=1 // pred_check
      _
    $region39: #{tpu_custom_call.1} parent=1 // pred_check_branch
      %3561 = sbr.rel (0) target = $region41
    $region40: #{tpu_custom_call.1} parent=1 // pred_region
      %3563 = vsyncadd [#allocation4], 0
      %s3564 = sshll.u32 [#allocation8], 4
      %s3565 = int_to_ptr.vmem [resolvable:$true] %s3564
      %s3566 = sshll.u32 %s6, 4
      %s3567 = int_to_ptr.hbm [resolvable:$true] %s3566
      %3572 = dma.vmem_to_hbm [thread:$0]  %s3565, 4096, %s3567, [#allocation4], 128, 128, 8
    $region41: #{tpu_custom_call.1} parent=1 // pred_fallthru
      _
    // Predicated region
    $region42: #{tpu_custom_call.1} parent=1 // pred_check
      _
    $region43: #{tpu_custom_call.1} parent=1 // pred_check_branch
      %3574 = sbr.rel (0) target = $region45
    $region44: #{tpu_custom_call.1} parent=1 // pred_region
      %3576 = dma.done [#allocation4], 4096
    $region45: #{tpu_custom_call.1} parent=1 // pred_fallthru
      _
    %3577 = vsyncpa [#allocation3], 1
    %3578 = vsyncpa [#allocation6], 1
    %3579 = vsyncpa [#allocation4], 1

</llo_original>
